<compile_context>
chip_gen: v7x
topology: tpu7x:2x2x1
jax: 0.10.0
libtpu: 0.0.40
codegen_flags: <defaults>
</compile_context>

<pallas_src>
import functools

import jax
import jax.numpy as jnp
from jax.experimental import pallas as pl
from jax.experimental.pallas import tpu as pltpu


# Opt-in perf knob: bf16 matmul operands (f32 accumulation kept). Default f32
# so the strict correctness check below passes.
_MATMUL_DTYPE = jnp.float32


# ----------------------------------------------------------------------------
# Pass 1 kernel: conv (single fused matmul) + bias + ReLU + per-tile BN partials
# ----------------------------------------------------------------------------
def _conv_relu_stats_kernel(x_ref, w_ref, b_ref, y_ref, stats_ref,
                            *, k, s, tile_oh, ow, ic):
    # x_ref:     (1, Hq, Wq_pad, s*s*IC)  one padded, phase-packed image
    # w_ref:     (K, OC_pad)              K = (ceil(k/s)*s)^2 * IC
    # b_ref:     (1, OC_pad)
    # y_ref:     (1, TILE_M, OC_pad)      un-normalized ReLU(conv + bias)
    # stats_ref: (1, 1, 2, OC_pad)        per-tile [colsum(y); colsum(y*y)]
    nd = -(-k // s)                        # dilated taps per spatial dim
    phase_c = s * s * ic
    tile_m = tile_oh * ow
    oh0 = pl.multiple_of(pl.program_id(1) * tile_oh, tile_oh)

    # Tile-local im2col: ceil(k/s)^2 full-lane slabs concatenated along lanes.
    slabs = []
    for dh in range(nd):
        for dw in range(nd):
            slab = x_ref[0, pl.ds(oh0 + dh, tile_oh), dw:dw + ow, :]
            slabs.append(slab.reshape(tile_m, phase_c))
    lhs = slabs[0] if len(slabs) == 1 else jnp.concatenate(slabs, axis=-1)

    # One MXU matmul with the full contraction width.
    acc = jnp.dot(lhs, w_ref[...], preferred_element_type=jnp.float32)
    y = jnp.maximum(acc + b_ref[...], 0.0)         # bias + ReLU in f32 (VPU)
    y_ref[0] = y

    # Direct row writes (no concat relayout).
    stats_ref[0, 0, 0:1, :] = jnp.sum(y, axis=0, keepdims=True)
    stats_ref[0, 0, 1:2, :] = jnp.sum(y * y, axis=0, keepdims=True)


# ----------------------------------------------------------------------------
# Pass 2 kernel: apply pre-folded BatchNorm scale/shift (single FMA per tile)
# ----------------------------------------------------------------------------
def _bn_apply_kernel(y_ref, scale_ref, shift_ref, o_ref):
    o_ref[0] = y_ref[0] * scale_ref[...] + shift_ref[...]


# ----------------------------------------------------------------------------
# Glue: padding / phase packing / tiling / layer wrapper
# ----------------------------------------------------------------------------
def _space_to_depth_packed(x_nhwc, s, p):
    """Zero-pad spatially by p, pack the s*s stride phases into the lane dim."""
    N, H, W, C = x_nhwc.shape
    Hp, Wp = H + 2 * p, W + 2 * p
    Hq = -(-Hp // s)
    Wq = -(-Wp // s)
    Wq_pad = -(-Wq // 8) * 8                      # sublane-align per-phase width
    xp = jnp.pad(x_nhwc, ((0, 0), (p, p + Hq * s - Hp),
                          (p, p + Wq_pad * s - Wp), (0, 0)))
    xp = xp.reshape(N, Hq, s, Wq_pad, s, C)
    xp = jnp.transpose(xp, (0, 1, 3, 2, 4, 5)).reshape(N, Hq, Wq_pad, s * s * C)
    return xp, Hq, Wq_pad


def _pack_weights(w_oihw, k, s, ic, oc, oc_pad):
    """(OC, IC, k, k) -> (K, OC_pad) matching the kernel's lane ordering
    (dh, dw, ph, pw, c); taps beyond k (dilated padding) get zero weights."""
    nd = -(-k // s)
    kp = nd * s
    w_hwio = jnp.transpose(w_oihw, (2, 3, 1, 0))              # (k, k, IC, OC)
    w_full = jnp.zeros((kp, kp, ic, oc), jnp.float32).at[:k, :k].set(w_hwio)
    w_full = w_full.reshape(nd, s, nd, s, ic, oc).transpose(0, 2, 1, 3, 4, 5)
    w_mat = w_full.reshape(nd * nd * s * s * ic, oc)
    return jnp.pad(w_mat, ((0, 0), (0, oc_pad - oc)))


def _choose_tile_oh(oh, ow, target_rows=512):
    """Largest divisor d of OH with TILE_M = d*OW a multiple of 8 and at most
    ~target_rows.  Falls back to a whole-image tile when no aligned divisor
    exists (fine at small shapes).
    TODO(synk): for large odd-OW images, split M differently instead."""
    cand = [d for d in range(1, oh + 1) if oh % d == 0 and (d * ow) % 8 == 0]
    if not cand:
        return oh
    within = [d for d in cand if d * ow <= target_rows]
    return max(within) if within else min(cand)


def _vmem_limit_bytes():
    """Generation-dependent VMEM cap: ~half of physical, capped at 96 MiB."""
    try:
        cap = getattr(pltpu.get_tpu_info(), "vmem_capacity_bytes", None)
        if cap:
            return int(min(cap // 2, 96 * 1024 * 1024))
    except Exception:
        pass
    return 32 * 1024 * 1024


def conv_relu_bn_layer(x_nhwc, w_oihw, bias, gamma, beta, k, s, p, eps=1e-5):
    N, H, W, IC = x_nhwc.shape
    OC = w_oihw.shape[0]
    OH = (H + 2 * p - k) // s + 1
    OW = (W + 2 * p - k) // s + 1
    OC_pad = -(-OC // 128) * 128               # lane-dense VMEM output channels
    M = N * OH * OW

    x_s2d, Hq, Wq_pad = _space_to_depth_packed(x_nhwc, s, p)
    x_s2d = x_s2d.astype(_MATMUL_DTYPE)
    phase_c = s * s * IC
    nd = -(-k // s)
    K_dim = nd * nd * phase_c

    w_mat = _pack_weights(w_oihw, k, s, IC, OC, OC_pad).astype(_MATMUL_DTYPE)
    b_pad = jnp.pad(bias, (0, OC_pad - OC)).reshape(1, OC_pad)
    g_pad = jnp.pad(gamma, (0, OC_pad - OC)).reshape(1, OC_pad)
    be_pad = jnp.pad(beta, (0, OC_pad - OC)).reshape(1, OC_pad)

    tile_oh = _choose_tile_oh(OH, OW)
    n_t = OH // tile_oh
    tile_m = tile_oh * OW

    cparams = pltpu.CompilerParams(
        dimension_semantics=("parallel", "parallel"),   # 2 TCs on v7x
        vmem_limit_bytes=_vmem_limit_bytes(),
    )

    # ---- Pass 1: conv + bias + ReLU + per-tile BN partial sums --------------
    y, stats = pl.pallas_call(
        functools.partial(_conv_relu_stats_kernel,
                          k=k, s=s, tile_oh=tile_oh, ow=OW, ic=IC),
        out_shape=(
            jax.ShapeDtypeStruct((N, OH * OW, OC_pad), jnp.float32),
            jax.ShapeDtypeStruct((N, n_t, 2, OC_pad), jnp.float32),
        ),
        grid=(N, n_t),
        in_specs=[
            pl.BlockSpec((1, Hq, Wq_pad, phase_c), lambda n, t: (n, 0, 0, 0)),
            pl.BlockSpec((K_dim, OC_pad), lambda n, t: (0, 0)),
            pl.BlockSpec((1, OC_pad), lambda n, t: (0, 0)),
        ],
        out_specs=(
            pl.BlockSpec((1, tile_m, OC_pad), lambda n, t: (n, t, 0)),
            pl.BlockSpec((1, 1, 2, OC_pad), lambda n, t: (n, t, 0, 0)),
        ),
        compiler_params=cparams,
    )(x_s2d, w_mat, b_pad)

    # ---- BN fold (tiny (2, OC_pad) math, done once in plain JAX) ------------
    # NOTE: single-pass E[y^2]-E[y]^2 variance; adequate at test tolerance.
    tot = jnp.sum(stats, axis=(0, 1))                       # (2, OC_pad)
    mean = tot[0:1, :] * (1.0 / M)
    var = jnp.maximum(tot[1:2, :] * (1.0 / M) - mean * mean, 0.0)
    scale = g_pad * jax.lax.rsqrt(var + eps)
    shift = be_pad - mean * scale

    # ---- Pass 2: y*scale + shift, output aliased onto y in place ------------
    out = pl.pallas_call(
        _bn_apply_kernel,
        out_shape=jax.ShapeDtypeStruct((N, OH * OW, OC_pad), jnp.float32),
        grid=(N, n_t),
        in_specs=[
            pl.BlockSpec((1, tile_m, OC_pad), lambda n, t: (n, t, 0)),
            pl.BlockSpec((1, OC_pad), lambda n, t: (0, 0)),
            pl.BlockSpec((1, OC_pad), lambda n, t: (0, 0)),
        ],
        out_specs=pl.BlockSpec((1, tile_m, OC_pad), lambda n, t: (n, t, 0)),
        input_output_aliases={0: 0},
        compiler_params=cparams,
    )(y, scale, shift)

    return out.reshape(N, OH, OW, OC_pad)[..., :OC]


def init_params(filters, key):
    """Deterministic synthetic parameters for each (ic, oc, k, s, p) layer."""
    params = []
    for (ic, oc, k, _s, _p) in filters:
        key, kw, kb = jax.random.split(key, 3)
        w = 0.1 * jax.random.normal(kw, (oc, ic, k, k), jnp.float32)   # OIHW
        b = 0.1 * jax.random.normal(kb, (oc,), jnp.float32)
        gamma = jnp.ones((oc,), jnp.float32)   # nn.BatchNorm2d default weight
        beta = jnp.zeros((oc,), jnp.float32)   # nn.BatchNorm2d default bias
        params.append((w, b, gamma, beta))
    return params


@functools.partial(jax.jit, static_argnums=(2,))
def feature_extractor(x_nchw, params, filters):
    """Forward pass of FeatureExtractor.  x_nchw: (N, C, H, W) -> (N, C', H', W')."""
    x = jnp.transpose(x_nchw, (0, 2, 3, 1))   # NCHW -> NHWC
    for (w, b, gamma, beta), (_ic, _oc, k, s, p) in zip(params, filters):
        x = conv_relu_bn_layer(x, w, b, gamma, beta, k, s, p)
    return jnp.transpose(x, (0, 3, 1, 2))     # NHWC -> NCHW


# ----------------------------------------------------------------------------
# Pure-JAX reference (same semantics as the PyTorch module, training-mode BN)
# ----------------------------------------------------------------------------
def reference(x_nchw, params, filters):
    x = x_nchw
    for (w, b, gamma, beta), (_ic, _oc, _k, s, p) in zip(params, filters):
        y = jax.lax.conv_general_dilated(
            x, w, window_strides=(s, s), padding=[(p, p), (p, p)],
            dimension_numbers=("NCHW", "OIHW", "NCHW"),
        ) + b[None, :, None, None]
        y = jnp.maximum(y, 0.0)
        mean = jnp.mean(y, axis=(0, 2, 3), keepdims=True)
        var = jnp.mean((y - mean) ** 2, axis=(0, 2, 3), keepdims=True)
        y = (y - mean) * jax.lax.rsqrt(var + 1e-5)
        y = y * gamma[None, :, None, None] + beta[None, :, None, None]
        x = y
    return x


if __name__ == "__main__":
    # filters: list of (in_channels, out_channels, kernel_size, stride, padding)
    filters = ((4, 8, 3, 1, 1), (8, 16, 3, 2, 1))

    key = jax.random.PRNGKey(0)
    key, kx = jax.random.split(key)
    x = jax.random.normal(kx, (2, 4, 16, 16), jnp.float32)   # NCHW input

    params = init_params(filters, key)

    out = feature_extractor(x, params, filters)
    out = jax.block_until_ready(out)

    ref = reference(x, params, filters)
    assert out.shape == ref.shape == (2, 16, 8, 8), out.shape
    assert jnp.allclose(out, ref, atol=2e-4, rtol=2e-4), float(
        jnp.max(jnp.abs(out - ref))
    )

    print("KERNEL_OK")
</pallas_src>

<mosaic_0001>
module attributes {stable_mosaic.version = 11 : i64} {
  func.func @_conv_relu_stats_kernel(%arg0: i32, %arg1: i32, %arg2: memref<1x18x24x4xf32, #tpu.memory_space<vmem>>, %arg3: memref<36x128xf32, #tpu.memory_space<vmem>>, %arg4: memref<1x128xf32, #tpu.memory_space<vmem>>, %arg5: memref<1x256x128xf32, #tpu.memory_space<vmem>>, %arg6: memref<1x1x2x128xf32, #tpu.memory_space<vmem>>) attributes {dimension_semantics = [#tpu.dimension_semantics<parallel>, #tpu.dimension_semantics<parallel>], iteration_bounds = array<i64: 2, 1>, scalar_prefetch = 0 : i64, scratch_operands = 0 : i64, tpu.core_type = #tpu.core_type<tc>, window_params = [{transform_indices = @transform_0, window_bounds = array<i64: 1, 18, 24, 4>}, {pipeline_mode = #tpu.pipeline_mode<synchronous>, transform_indices = @transform_1, window_bounds = array<i64: 36, 128>}, {pipeline_mode = #tpu.pipeline_mode<synchronous>, transform_indices = @transform_2, window_bounds = array<i64: 1, 128>}, {transform_indices = @transform_3, window_bounds = array<i64: 1, 256, 128>}, {transform_indices = @transform_4, window_bounds = array<i64: 1, 1, 2, 128>}]} {
    %c16_i32 = arith.constant 16 : i32
    %0 = arith.muli %arg1, %c16_i32 : i32
    %1 = tpu.assume_multiple %0, 16 : i32
    %c0_i32 = arith.constant 0 : i32
    %2 = arith.addi %1, %c0_i32 : i32
    %c0 = arith.constant 0 : index
    %3 = arith.index_cast %2 : i32 to index
    %c0_0 = arith.constant 0 : index
    %c0_1 = arith.constant 0 : index
    %4 = vector.load %arg2[%c0, %3, %c0_0, %c0_1] : memref<1x18x24x4xf32, #tpu.memory_space<vmem>>, vector<1x16x16x4xf32>
    %5 = vector.shape_cast %4 : vector<1x16x16x4xf32> to vector<16x16x4xf32>
    %6 = vector.shape_cast %5 : vector<16x16x4xf32> to vector<256x4xf32>
    %c0_i32_2 = arith.constant 0 : i32
    %7 = arith.addi %1, %c0_i32_2 : i32
    %c0_3 = arith.constant 0 : index
    %8 = arith.index_cast %7 : i32 to index
    %c1 = arith.constant 1 : index
    %c0_4 = arith.constant 0 : index
    %9 = vector.load %arg2[%c0_3, %8, %c1, %c0_4] : memref<1x18x24x4xf32, #tpu.memory_space<vmem>>, vector<1x16x16x4xf32>
    %10 = vector.shape_cast %9 : vector<1x16x16x4xf32> to vector<16x16x4xf32>
    %11 = vector.shape_cast %10 : vector<16x16x4xf32> to vector<256x4xf32>
    %c0_i32_5 = arith.constant 0 : i32
    %12 = arith.addi %1, %c0_i32_5 : i32
    %c0_6 = arith.constant 0 : index
    %13 = arith.index_cast %12 : i32 to index
    %c2 = arith.constant 2 : index
    %c0_7 = arith.constant 0 : index
    %14 = vector.load %arg2[%c0_6, %13, %c2, %c0_7] : memref<1x18x24x4xf32, #tpu.memory_space<vmem>>, vector<1x16x16x4xf32>
    %15 = vector.shape_cast %14 : vector<1x16x16x4xf32> to vector<16x16x4xf32>
    %16 = vector.shape_cast %15 : vector<16x16x4xf32> to vector<256x4xf32>
    %c1_i32 = arith.constant 1 : i32
    %17 = arith.addi %1, %c1_i32 : i32
    %c0_8 = arith.constant 0 : index
    %18 = arith.index_cast %17 : i32 to index
    %c0_9 = arith.constant 0 : index
    %c0_10 = arith.constant 0 : index
    %19 = vector.load %arg2[%c0_8, %18, %c0_9, %c0_10] : memref<1x18x24x4xf32, #tpu.memory_space<vmem>>, vector<1x16x16x4xf32>
    %20 = vector.shape_cast %19 : vector<1x16x16x4xf32> to vector<16x16x4xf32>
    %21 = vector.shape_cast %20 : vector<16x16x4xf32> to vector<256x4xf32>
    %c1_i32_11 = arith.constant 1 : i32
    %22 = arith.addi %1, %c1_i32_11 : i32
    %c0_12 = arith.constant 0 : index
    %23 = arith.index_cast %22 : i32 to index
    %c1_13 = arith.constant 1 : index
    %c0_14 = arith.constant 0 : index
    %24 = vector.load %arg2[%c0_12, %23, %c1_13, %c0_14] : memref<1x18x24x4xf32, #tpu.memory_space<vmem>>, vector<1x16x16x4xf32>
    %25 = vector.shape_cast %24 : vector<1x16x16x4xf32> to vector<16x16x4xf32>
    %26 = vector.shape_cast %25 : vector<16x16x4xf32> to vector<256x4xf32>
    %c1_i32_15 = arith.constant 1 : i32
    %27 = arith.addi %1, %c1_i32_15 : i32
    %c0_16 = arith.constant 0 : index
    %28 = arith.index_cast %27 : i32 to index
    %c2_17 = arith.constant 2 : index
    %c0_18 = arith.constant 0 : index
    %29 = vector.load %arg2[%c0_16, %28, %c2_17, %c0_18] : memref<1x18x24x4xf32, #tpu.memory_space<vmem>>, vector<1x16x16x4xf32>
    %30 = vector.shape_cast %29 : vector<1x16x16x4xf32> to vector<16x16x4xf32>
    %31 = vector.shape_cast %30 : vector<16x16x4xf32> to vector<256x4xf32>
    %c2_i32 = arith.constant 2 : i32
    %32 = arith.addi %1, %c2_i32 : i32
    %c0_19 = arith.constant 0 : index
    %33 = arith.index_cast %32 : i32 to index
    %c0_20 = arith.constant 0 : index
    %c0_21 = arith.constant 0 : index
    %34 = vector.load %arg2[%c0_19, %33, %c0_20, %c0_21] : memref<1x18x24x4xf32, #tpu.memory_space<vmem>>, vector<1x16x16x4xf32>
    %35 = vector.shape_cast %34 : vector<1x16x16x4xf32> to vector<16x16x4xf32>
    %36 = vector.shape_cast %35 : vector<16x16x4xf32> to vector<256x4xf32>
    %c2_i32_22 = arith.constant 2 : i32
    %37 = arith.addi %1, %c2_i32_22 : i32
    %c0_23 = arith.constant 0 : index
    %38 = arith.index_cast %37 : i32 to index
    %c1_24 = arith.constant 1 : index
    %c0_25 = arith.constant 0 : index
    %39 = vector.load %arg2[%c0_23, %38, %c1_24, %c0_25] : memref<1x18x24x4xf32, #tpu.memory_space<vmem>>, vector<1x16x16x4xf32>
    %40 = vector.shape_cast %39 : vector<1x16x16x4xf32> to vector<16x16x4xf32>
    %41 = vector.shape_cast %40 : vector<16x16x4xf32> to vector<256x4xf32>
    %c2_i32_26 = arith.constant 2 : i32
    %42 = arith.addi %1, %c2_i32_26 : i32
    %c0_27 = arith.constant 0 : index
    %43 = arith.index_cast %42 : i32 to index
    %c2_28 = arith.constant 2 : index
    %c0_29 = arith.constant 0 : index
    %44 = vector.load %arg2[%c0_27, %43, %c2_28, %c0_29] : memref<1x18x24x4xf32, #tpu.memory_space<vmem>>, vector<1x16x16x4xf32>
    %45 = vector.shape_cast %44 : vector<1x16x16x4xf32> to vector<16x16x4xf32>
    %46 = vector.shape_cast %45 : vector<16x16x4xf32> to vector<256x4xf32>
    %47 = tpu.concatenate %6, %11, %16, %21, %26, %31, %36, %41, %46 in 1 : vector<256x4xf32>, vector<256x4xf32>, vector<256x4xf32>, vector<256x4xf32>, vector<256x4xf32>, vector<256x4xf32>, vector<256x4xf32>, vector<256x4xf32>, vector<256x4xf32> -> vector<256x36xf32>
    %c0_30 = arith.constant 0 : index
    %c0_31 = arith.constant 0 : index
    %48 = vector.load %arg3[%c0_30, %c0_31] : memref<36x128xf32, #tpu.memory_space<vmem>>, vector<36x128xf32>
    %cst = arith.constant dense<0.000000e+00> : vector<256x128xf32>
    %49 = tpu.matmul %47, %48, %cst {dimension_numbers = #tpu.dot_dimension_numbers<[1], [0], [0], [1], [0, 0, 1, 1], [], []>} : vector<256x36xf32>, vector<36x128xf32>, vector<256x128xf32> -> vector<256x128xf32>
    %c0_32 = arith.constant 0 : index
    %c0_33 = arith.constant 0 : index
    %50 = vector.load %arg4[%c0_32, %c0_33] : memref<1x128xf32, #tpu.memory_space<vmem>>, vector<1x128xf32>
    %51 = vector.broadcast %50 : vector<1x128xf32> to vector<256x128xf32>
    %52 = arith.addf %49, %51 : vector<256x128xf32>
    %cst_34 = arith.constant 0.000000e+00 : f32
    %53 = vector.broadcast %cst_34 : f32 to vector<256x128xf32>
    %54 = arith.maximumf %52, %53 : vector<256x128xf32>
    %c0_35 = arith.constant 0 : index
    %c0_36 = arith.constant 0 : index
    %c0_37 = arith.constant 0 : index
    %55 = vector.load %arg5[%c0_35, %c0_36, %c0_37] : memref<1x256x128xf32, #tpu.memory_space<vmem>>, vector<1x256x128xf32>
    %56 = vector.shape_cast %55 : vector<1x256x128xf32> to vector<256x128xf32>
    %57 = vector.shape_cast %54 : vector<256x128xf32> to vector<1x256x128xf32>
    tpu.vector_store %arg5[%c0_35, %c0_36, %c0_37], %57 {strides = array<i32>} : memref<1x256x128xf32, #tpu.memory_space<vmem>>, vector<1x256x128xf32>,
    %cst_38 = arith.constant dense<0.000000e+00> : vector<128xf32>
    %58 = vector.multi_reduction <add>, %54, %cst_38 [0] : vector<256x128xf32> to vector<128xf32>
    %59 = vector.shape_cast %58 : vector<128xf32> to vector<1x128xf32>
    %c0_39 = arith.constant 0 : index
    %c0_40 = arith.constant 0 : index
    %c0_41 = arith.constant 0 : index
    %c0_42 = arith.constant 0 : index
    %60 = vector.load %arg6[%c0_39, %c0_40, %c0_41, %c0_42] : memref<1x1x2x128xf32, #tpu.memory_space<vmem>>, vector<1x1x1x128xf32>
    %61 = vector.shape_cast %60 : vector<1x1x1x128xf32> to vector<1x128xf32>
    %62 = vector.shape_cast %59 : vector<1x128xf32> to vector<1x1x1x128xf32>
    tpu.vector_store %arg6[%c0_39, %c0_40, %c0_41, %c0_42], %62 {strides = array<i32>} : memref<1x1x2x128xf32, #tpu.memory_space<vmem>>, vector<1x1x1x128xf32>,
    %63 = arith.mulf %54, %54 : vector<256x128xf32>
    %cst_43 = arith.constant dense<0.000000e+00> : vector<128xf32>
    %64 = vector.multi_reduction <add>, %63, %cst_43 [0] : vector<256x128xf32> to vector<128xf32>
    %65 = vector.shape_cast %64 : vector<128xf32> to vector<1x128xf32>
    %c0_44 = arith.constant 0 : index
    %c0_45 = arith.constant 0 : index
    %c1_46 = arith.constant 1 : index
    %c0_47 = arith.constant 0 : index
    %66 = vector.load %arg6[%c0_44, %c0_45, %c1_46, %c0_47] : memref<1x1x2x128xf32, #tpu.memory_space<vmem>>, vector<1x1x1x128xf32>
    %67 = vector.shape_cast %66 : vector<1x1x1x128xf32> to vector<1x128xf32>
    %68 = vector.shape_cast %65 : vector<1x128xf32> to vector<1x1x1x128xf32>
    tpu.vector_store %arg6[%c0_44, %c0_45, %c1_46, %c0_47], %68 {strides = array<i32>} : memref<1x1x2x128xf32, #tpu.memory_space<vmem>>, vector<1x1x1x128xf32>,
    return
  }
  func.func @transform_0(%arg0: i32, %arg1: i32) -> (i32, i32, i32, i32) {
    %c0_i32 = arith.constant 0 : i32
    %c0_i32_0 = arith.constant 0 : i32
    %c0_i32_1 = arith.constant 0 : i32
    %c0_i32_2 = arith.constant 0 : i32
    return %arg0, %c0_i32, %c0_i32_0, %c0_i32_1 : i32, i32, i32, i32
  }
  func.func @transform_1(%arg0: i32, %arg1: i32) -> (i32, i32) {
    %c0_i32 = arith.constant 0 : i32
    %c0_i32_0 = arith.constant 0 : i32
    %c0_i32_1 = arith.constant 0 : i32
    return %c0_i32, %c0_i32_0 : i32, i32
  }
  func.func @transform_2(%arg0: i32, %arg1: i32) -> (i32, i32) {
    %c0_i32 = arith.constant 0 : i32
    %c0_i32_0 = arith.constant 0 : i32
    %c0_i32_1 = arith.constant 0 : i32
    return %c0_i32, %c0_i32_0 : i32, i32
  }
  func.func @transform_3(%arg0: i32, %arg1: i32) -> (i32, i32, i32) {
    %c0_i32 = arith.constant 0 : i32
    %c0_i32_0 = arith.constant 0 : i32
    return %arg0, %arg1, %c0_i32 : i32, i32, i32
  }
  func.func @transform_4(%arg0: i32, %arg1: i32) -> (i32, i32, i32, i32) {
    %c0_i32 = arith.constant 0 : i32
    %c0_i32_0 = arith.constant 0 : i32
    %c0_i32_1 = arith.constant 0 : i32
    return %arg0, %arg1, %c0_i32, %c0_i32_0 : i32, i32, i32, i32
  }
}

module attributes {stable_mosaic.version = 11 : i64} {
  func.func @_bn_apply_kernel(%arg0: i32, %arg1: i32, %arg2: memref<1x256x128xf32, #tpu.memory_space<vmem>>, %arg3: memref<1x128xf32, #tpu.memory_space<vmem>>, %arg4: memref<1x128xf32, #tpu.memory_space<vmem>>, %arg5: memref<1x256x128xf32, #tpu.memory_space<vmem>>) attributes {dimension_semantics = [#tpu.dimension_semantics<parallel>, #tpu.dimension_semantics<parallel>], iteration_bounds = array<i64: 2, 1>, scalar_prefetch = 0 : i64, scratch_operands = 0 : i64, tpu.core_type = #tpu.core_type<tc>, window_params = [{transform_indices = @transform_0, window_bounds = array<i64: 1, 256, 128>}, {pipeline_mode = #tpu.pipeline_mode<synchronous>, transform_indices = @transform_1, window_bounds = array<i64: 1, 128>}, {pipeline_mode = #tpu.pipeline_mode<synchronous>, transform_indices = @transform_2, window_bounds = array<i64: 1, 128>}, {transform_indices = @transform_3, window_bounds = array<i64: 1, 256, 128>}]} {
    %c0 = arith.constant 0 : index
    %c0_0 = arith.constant 0 : index
    %c0_1 = arith.constant 0 : index
    %0 = vector.load %arg2[%c0, %c0_0, %c0_1] : memref<1x256x128xf32, #tpu.memory_space<vmem>>, vector<1x256x128xf32>
    %1 = vector.shape_cast %0 : vector<1x256x128xf32> to vector<256x128xf32>
    %c0_2 = arith.constant 0 : index
    %c0_3 = arith.constant 0 : index
    %2 = vector.load %arg3[%c0_2, %c0_3] : memref<1x128xf32, #tpu.memory_space<vmem>>, vector<1x128xf32>
    %3 = vector.broadcast %2 : vector<1x128xf32> to vector<256x128xf32>
    %4 = arith.mulf %1, %3 : vector<256x128xf32>
    %c0_4 = arith.constant 0 : index
    %c0_5 = arith.constant 0 : index
    %5 = vector.load %arg4[%c0_4, %c0_5] : memref<1x128xf32, #tpu.memory_space<vmem>>, vector<1x128xf32>
    %6 = vector.broadcast %5 : vector<1x128xf32> to vector<256x128xf32>
    %7 = arith.addf %4, %6 : vector<256x128xf32>
    %c0_6 = arith.constant 0 : index
    %c0_7 = arith.constant 0 : index
    %c0_8 = arith.constant 0 : index
    %8 = vector.load %arg5[%c0_6, %c0_7, %c0_8] : memref<1x256x128xf32, #tpu.memory_space<vmem>>, vector<1x256x128xf32>
    %9 = vector.shape_cast %8 : vector<1x256x128xf32> to vector<256x128xf32>
    %10 = vector.shape_cast %7 : vector<256x128xf32> to vector<1x256x128xf32>
    tpu.vector_store %arg5[%c0_6, %c0_7, %c0_8], %10 {strides = array<i32>} : memref<1x256x128xf32, #tpu.memory_space<vmem>>, vector<1x256x128xf32>,
    return
  }
  func.func @transform_0(%arg0: i32, %arg1: i32) -> (i32, i32, i32) {
    %c0_i32 = arith.constant 0 : i32
    %c0_i32_0 = arith.constant 0 : i32
    return %arg0, %arg1, %c0_i32 : i32, i32, i32
  }
  func.func @transform_1(%arg0: i32, %arg1: i32) -> (i32, i32) {
    %c0_i32 = arith.constant 0 : i32
    %c0_i32_0 = arith.constant 0 : i32
    %c0_i32_1 = arith.constant 0 : i32
    return %c0_i32, %c0_i32_0 : i32, i32
  }
  func.func @transform_2(%arg0: i32, %arg1: i32) -> (i32, i32) {
    %c0_i32 = arith.constant 0 : i32
    %c0_i32_0 = arith.constant 0 : i32
    %c0_i32_1 = arith.constant 0 : i32
    return %c0_i32, %c0_i32_0 : i32, i32
  }
  func.func @transform_3(%arg0: i32, %arg1: i32) -> (i32, i32, i32) {
    %c0_i32 = arith.constant 0 : i32
    %c0_i32_0 = arith.constant 0 : i32
    return %arg0, %arg1, %c0_i32 : i32, i32, i32
  }
}

module attributes {stable_mosaic.version = 11 : i64} {
  func.func @_conv_relu_stats_kernel(%arg0: i32, %arg1: i32, %arg2: memref<1x9x16x32xf32, #tpu.memory_space<vmem>>, %arg3: memref<128x128xf32, #tpu.memory_space<vmem>>, %arg4: memref<1x128xf32, #tpu.memory_space<vmem>>, %arg5: memref<1x64x128xf32, #tpu.memory_space<vmem>>, %arg6: memref<1x1x2x128xf32, #tpu.memory_space<vmem>>) attributes {dimension_semantics = [#tpu.dimension_semantics<parallel>, #tpu.dimension_semantics<parallel>], iteration_bounds = array<i64: 2, 1>, scalar_prefetch = 0 : i64, scratch_operands = 0 : i64, tpu.core_type = #tpu.core_type<tc>, window_params = [{transform_indices = @transform_0, window_bounds = array<i64: 1, 9, 16, 32>}, {pipeline_mode = #tpu.pipeline_mode<synchronous>, transform_indices = @transform_1, window_bounds = array<i64: 128, 128>}, {pipeline_mode = #tpu.pipeline_mode<synchronous>, transform_indices = @transform_2, window_bounds = array<i64: 1, 128>}, {transform_indices = @transform_3, window_bounds = array<i64: 1, 64, 128>}, {transform_indices = @transform_4, window_bounds = array<i64: 1, 1, 2, 128>}]} {
    %c8_i32 = arith.constant 8 : i32
    %0 = arith.muli %arg1, %c8_i32 : i32
    %1 = tpu.assume_multiple %0, 8 : i32
    %c0_i32 = arith.constant 0 : i32
    %2 = arith.addi %1, %c0_i32 : i32
    %c0 = arith.constant 0 : index
    %3 = arith.index_cast %2 : i32 to index
    %c0_0 = arith.constant 0 : index
    %c0_1 = arith.constant 0 : index
    %4 = vector.load %arg2[%c0, %3, %c0_0, %c0_1] : memref<1x9x16x32xf32, #tpu.memory_space<vmem>>, vector<1x8x8x32xf32>
    %5 = vector.shape_cast %4 : vector<1x8x8x32xf32> to vector<8x8x32xf32>
    %6 = vector.shape_cast %5 : vector<8x8x32xf32> to vector<64x32xf32>
    %c0_i32_2 = arith.constant 0 : i32
    %7 = arith.addi %1, %c0_i32_2 : i32
    %c0_3 = arith.constant 0 : index
    %8 = arith.index_cast %7 : i32 to index
    %c1 = arith.constant 1 : index
    %c0_4 = arith.constant 0 : index
    %9 = vector.load %arg2[%c0_3, %8, %c1, %c0_4] : memref<1x9x16x32xf32, #tpu.memory_space<vmem>>, vector<1x8x8x32xf32>
    %10 = vector.shape_cast %9 : vector<1x8x8x32xf32> to vector<8x8x32xf32>
    %11 = vector.shape_cast %10 : vector<8x8x32xf32> to vector<64x32xf32>
    %c1_i32 = arith.constant 1 : i32
    %12 = arith.addi %1, %c1_i32 : i32
    %c0_5 = arith.constant 0 : index
    %13 = arith.index_cast %12 : i32 to index
    %c0_6 = arith.constant 0 : index
    %c0_7 = arith.constant 0 : index
    %14 = vector.load %arg2[%c0_5, %13, %c0_6, %c0_7] : memref<1x9x16x32xf32, #tpu.memory_space<vmem>>, vector<1x8x8x32xf32>
    %15 = vector.shape_cast %14 : vector<1x8x8x32xf32> to vector<8x8x32xf32>
    %16 = vector.shape_cast %15 : vector<8x8x32xf32> to vector<64x32xf32>
    %c1_i32_8 = arith.constant 1 : i32
    %17 = arith.addi %1, %c1_i32_8 : i32
    %c0_9 = arith.constant 0 : index
    %18 = arith.index_cast %17 : i32 to index
    %c1_10 = arith.constant 1 : index
    %c0_11 = arith.constant 0 : index
    %19 = vector.load %arg2[%c0_9, %18, %c1_10, %c0_11] : memref<1x9x16x32xf32, #tpu.memory_space<vmem>>, vector<1x8x8x32xf32>
    %20 = vector.shape_cast %19 : vector<1x8x8x32xf32> to vector<8x8x32xf32>
    %21 = vector.shape_cast %20 : vector<8x8x32xf32> to vector<64x32xf32>
    %22 = tpu.concatenate %6, %11, %16, %21 in 1 : vector<64x32xf32>, vector<64x32xf32>, vector<64x32xf32>, vector<64x32xf32> -> vector<64x128xf32>
    %c0_12 = arith.constant 0 : index
    %c0_13 = arith.constant 0 : index
    %23 = vector.load %arg3[%c0_12, %c0_13] : memref<128x128xf32, #tpu.memory_space<vmem>>, vector<128x128xf32>
    %cst = arith.constant dense<0.000000e+00> : vector<64x128xf32>
    %24 = tpu.matmul %22, %23, %cst {dimension_numbers = #tpu.dot_dimension_numbers<[1], [0], [0], [1], [0, 0, 1, 1], [], []>} : vector<64x128xf32>, vector<128x128xf32>, vector<64x128xf32> -> vector<64x128xf32>
    %c0_14 = arith.constant 0 : index
    %c0_15 = arith.constant 0 : index
    %25 = vector.load %arg4[%c0_14, %c0_15] : memref<1x128xf32, #tpu.memory_space<vmem>>, vector<1x128xf32>
    %26 = vector.broadcast %25 : vector<1x128xf32> to vector<64x128xf32>
    %27 = arith.addf %24, %26 : vector<64x128xf32>
    %cst_16 = arith.constant 0.000000e+00 : f32
    %28 = vector.broadcast %cst_16 : f32 to vector<64x128xf32>
    %29 = arith.maximumf %27, %28 : vector<64x128xf32>
    %c0_17 = arith.constant 0 : index
    %c0_18 = arith.constant 0 : index
    %c0_19 = arith.constant 0 : index
    %30 = vector.load %arg5[%c0_17, %c0_18, %c0_19] : memref<1x64x128xf32, #tpu.memory_space<vmem>>, vector<1x64x128xf32>
    %31 = vector.shape_cast %30 : vector<1x64x128xf32> to vector<64x128xf32>
    %32 = vector.shape_cast %29 : vector<64x128xf32> to vector<1x64x128xf32>
    tpu.vector_store %arg5[%c0_17, %c0_18, %c0_19], %32 {strides = array<i32>} : memref<1x64x128xf32, #tpu.memory_space<vmem>>, vector<1x64x128xf32>,
    %cst_20 = arith.constant dense<0.000000e+00> : vector<128xf32>
    %33 = vector.multi_reduction <add>, %29, %cst_20 [0] : vector<64x128xf32> to vector<128xf32>
    %34 = vector.shape_cast %33 : vector<128xf32> to vector<1x128xf32>
    %c0_21 = arith.constant 0 : index
    %c0_22 = arith.constant 0 : index
    %c0_23 = arith.constant 0 : index
    %c0_24 = arith.constant 0 : index
    %35 = vector.load %arg6[%c0_21, %c0_22, %c0_23, %c0_24] : memref<1x1x2x128xf32, #tpu.memory_space<vmem>>, vector<1x1x1x128xf32>
    %36 = vector.shape_cast %35 : vector<1x1x1x128xf32> to vector<1x128xf32>
    %37 = vector.shape_cast %34 : vector<1x128xf32> to vector<1x1x1x128xf32>
    tpu.vector_store %arg6[%c0_21, %c0_22, %c0_23, %c0_24], %37 {strides = array<i32>} : memref<1x1x2x128xf32, #tpu.memory_space<vmem>>, vector<1x1x1x128xf32>,
    %38 = arith.mulf %29, %29 : vector<64x128xf32>
    %cst_25 = arith.constant dense<0.000000e+00> : vector<128xf32>
    %39 = vector.multi_reduction <add>, %38, %cst_25 [0] : vector<64x128xf32> to vector<128xf32>
    %40 = vector.shape_cast %39 : vector<128xf32> to vector<1x128xf32>
    %c0_26 = arith.constant 0 : index
    %c0_27 = arith.constant 0 : index
    %c1_28 = arith.constant 1 : index
    %c0_29 = arith.constant 0 : index
    %41 = vector.load %arg6[%c0_26, %c0_27, %c1_28, %c0_29] : memref<1x1x2x128xf32, #tpu.memory_space<vmem>>, vector<1x1x1x128xf32>
    %42 = vector.shape_cast %41 : vector<1x1x1x128xf32> to vector<1x128xf32>
    %43 = vector.shape_cast %40 : vector<1x128xf32> to vector<1x1x1x128xf32>
    tpu.vector_store %arg6[%c0_26, %c0_27, %c1_28, %c0_29], %43 {strides = array<i32>} : memref<1x1x2x128xf32, #tpu.memory_space<vmem>>, vector<1x1x1x128xf32>,
    return
  }
  func.func @transform_0(%arg0: i32, %arg1: i32) -> (i32, i32, i32, i32) {
    %c0_i32 = arith.constant 0 : i32
    %c0_i32_0 = arith.constant 0 : i32
    %c0_i32_1 = arith.constant 0 : i32
    %c0_i32_2 = arith.constant 0 : i32
    return %arg0, %c0_i32, %c0_i32_0, %c0_i32_1 : i32, i32, i32, i32
  }
  func.func @transform_1(%arg0: i32, %arg1: i32) -> (i32, i32) {
    %c0_i32 = arith.constant 0 : i32
    %c0_i32_0 = arith.constant 0 : i32
    %c0_i32_1 = arith.constant 0 : i32
    return %c0_i32, %c0_i32_0 : i32, i32
  }
  func.func @transform_2(%arg0: i32, %arg1: i32) -> (i32, i32) {
    %c0_i32 = arith.constant 0 : i32
    %c0_i32_0 = arith.constant 0 : i32
    %c0_i32_1 = arith.constant 0 : i32
    return %c0_i32, %c0_i32_0 : i32, i32
  }
  func.func @transform_3(%arg0: i32, %arg1: i32) -> (i32, i32, i32) {
    %c0_i32 = arith.constant 0 : i32
    %c0_i32_0 = arith.constant 0 : i32
    return %arg0, %arg1, %c0_i32 : i32, i32, i32
  }
  func.func @transform_4(%arg0: i32, %arg1: i32) -> (i32, i32, i32, i32) {
    %c0_i32 = arith.constant 0 : i32
    %c0_i32_0 = arith.constant 0 : i32
    %c0_i32_1 = arith.constant 0 : i32
    return %arg0, %arg1, %c0_i32, %c0_i32_0 : i32, i32, i32, i32
  }
}

module attributes {stable_mosaic.version = 11 : i64} {
  func.func @_bn_apply_kernel(%arg0: i32, %arg1: i32, %arg2: memref<1x64x128xf32, #tpu.memory_space<vmem>>, %arg3: memref<1x128xf32, #tpu.memory_space<vmem>>, %arg4: memref<1x128xf32, #tpu.memory_space<vmem>>, %arg5: memref<1x64x128xf32, #tpu.memory_space<vmem>>) attributes {dimension_semantics = [#tpu.dimension_semantics<parallel>, #tpu.dimension_semantics<parallel>], iteration_bounds = array<i64: 2, 1>, scalar_prefetch = 0 : i64, scratch_operands = 0 : i64, tpu.core_type = #tpu.core_type<tc>, window_params = [{transform_indices = @transform_0, window_bounds = array<i64: 1, 64, 128>}, {pipeline_mode = #tpu.pipeline_mode<synchronous>, transform_indices = @transform_1, window_bounds = array<i64: 1, 128>}, {pipeline_mode = #tpu.pipeline_mode<synchronous>, transform_indices = @transform_2, window_bounds = array<i64: 1, 128>}, {transform_indices = @transform_3, window_bounds = array<i64: 1, 64, 128>}]} {
    %c0 = arith.constant 0 : index
    %c0_0 = arith.constant 0 : index
    %c0_1 = arith.constant 0 : index
    %0 = vector.load %arg2[%c0, %c0_0, %c0_1] : memref<1x64x128xf32, #tpu.memory_space<vmem>>, vector<1x64x128xf32>
    %1 = vector.shape_cast %0 : vector<1x64x128xf32> to vector<64x128xf32>
    %c0_2 = arith.constant 0 : index
    %c0_3 = arith.constant 0 : index
    %2 = vector.load %arg3[%c0_2, %c0_3] : memref<1x128xf32, #tpu.memory_space<vmem>>, vector<1x128xf32>
    %3 = vector.broadcast %2 : vector<1x128xf32> to vector<64x128xf32>
    %4 = arith.mulf %1, %3 : vector<64x128xf32>
    %c0_4 = arith.constant 0 : index
    %c0_5 = arith.constant 0 : index
    %5 = vector.load %arg4[%c0_4, %c0_5] : memref<1x128xf32, #tpu.memory_space<vmem>>, vector<1x128xf32>
    %6 = vector.broadcast %5 : vector<1x128xf32> to vector<64x128xf32>
    %7 = arith.addf %4, %6 : vector<64x128xf32>
    %c0_6 = arith.constant 0 : index
    %c0_7 = arith.constant 0 : index
    %c0_8 = arith.constant 0 : index
    %8 = vector.load %arg5[%c0_6, %c0_7, %c0_8] : memref<1x64x128xf32, #tpu.memory_space<vmem>>, vector<1x64x128xf32>
    %9 = vector.shape_cast %8 : vector<1x64x128xf32> to vector<64x128xf32>
    %10 = vector.shape_cast %7 : vector<64x128xf32> to vector<1x64x128xf32>
    tpu.vector_store %arg5[%c0_6, %c0_7, %c0_8], %10 {strides = array<i32>} : memref<1x64x128xf32, #tpu.memory_space<vmem>>, vector<1x64x128xf32>,
    return
  }
  func.func @transform_0(%arg0: i32, %arg1: i32) -> (i32, i32, i32) {
    %c0_i32 = arith.constant 0 : i32
    %c0_i32_0 = arith.constant 0 : i32
    return %arg0, %arg1, %c0_i32 : i32, i32, i32
  }
  func.func @transform_1(%arg0: i32, %arg1: i32) -> (i32, i32) {
    %c0_i32 = arith.constant 0 : i32
    %c0_i32_0 = arith.constant 0 : i32
    %c0_i32_1 = arith.constant 0 : i32
    return %c0_i32, %c0_i32_0 : i32, i32
  }
  func.func @transform_2(%arg0: i32, %arg1: i32) -> (i32, i32) {
    %c0_i32 = arith.constant 0 : i32
    %c0_i32_0 = arith.constant 0 : i32
    %c0_i32_1 = arith.constant 0 : i32
    return %c0_i32, %c0_i32_0 : i32, i32
  }
  func.func @transform_3(%arg0: i32, %arg1: i32) -> (i32, i32, i32) {
    %c0_i32 = arith.constant 0 : i32
    %c0_i32_0 = arith.constant 0 : i32
    return %arg0, %arg1, %c0_i32 : i32, i32, i32
  }
}

</mosaic_0001>

<llo_original>
// kernel: feature_extractor.5
$region0: #{feature_extractor.5}
  #allocation0 [shape = 'u32[]', space=smem, size = 0x4, offset = 0x4, fixed_abs, tag = 'smem constant byte address 0x4 - core index']
  #allocation1 [shape = 'u32[144,128]{1,0:T(1,128)}', space=vmem, size = 0x12000, scoped, tag = 'internal scratch']
  %s0 = inlined_call_operand.vmem [shape: f32[2,256,128], index: 0, kind: input, shape index: {}, may-alias: {0,3}]
  %s1 = inlined_call_operand.vmem [shape: f32[1,128], index: 1, kind: input, shape index: {}]
  %s2 = inlined_call_operand.vmem [shape: f32[1,128], index: 2, kind: input, shape index: {}]
  %s3 = inlined_call_operand.vmem [shape: f32[2,256,128], index: 3, kind: output, shape index: {}, may-alias: {0,3}]
  %s4 = sld [smem:[#allocation0]]
  $region45: #{feature_extractor.5} parent=0
    _
  %s6 = ssub.s32 1, %s4
  %s7 = scalar_select 0, %s6, %s4
  loop: start=0, step=1, limit=4
  $region2: #{feature_extractor.5} parent=0 // loop_pre_header
    _
  $region3: #{feature_extractor.5} parent=0 // loop_header
    %s9 = sphi 0, %s13
    %p10 = scmp.ge.s32.totalorder %s9, 4
    %s16 = sphi 0, %s28
    %s17 = sphi 0, %s24
    %s18 = sphi 0, %s16
    %s19 = sphi 0, %s17
    %s20 = sphi 0, %s18
    %s21 = sphi 0, %s19
    %s33 = sphi 0, %s35
    %s36 = sphi 0, %s33
    %s37 = sphi 0, %s36
    %s53 = sphi 0, %s37
    %s57 = sphi 0, %s57
    %s59 = sphi 0, %s57
    %s60 = sphi 0, %s59
    %s74 = sphi 0, %s60
    %s78 = sphi 0, %s78
    %s80 = sphi 0, %s78
    %s81 = sphi 0, %s80
    %s95 = sphi 0, %s81
    %s103 = sphi 0, %s105
    %s106 = sphi 0, %s103
    %s107 = sphi 0, %s106
    %s123 = sphi 0, %s107
  $region4: #{feature_extractor.5} parent=0 // loop_header_branch
    %12 = sbr.rel (%p10) target = $region8
  $region5: #{feature_extractor.5} parent=0 // loop_body
    %s14 = ssub.s32 %s9, 1
    %s15 = ssub.s32 %s9, 2
    %s22 = sadd.s32 1, %s17
    %p23 = scmp.ge.s32.totalorder %s22, 1
    %s24 = scalar_select %p23, 0, %s22
    %s25 = sadd.s32 1, %s16
    %s26 = scalar_select %p23, %s25, %s16
    %p27 = scmp.ge.s32.totalorder %s26, 2
    %s28 = scalar_select %p27, 0, %s26
    %s29 = ssub.s32 %s16, %s28
    %s30 = ssub.s32 %s17, %s24
    %s31 = sor.u32 %s29, %s30
    %p32 = scmp.eq.s32.totalorder %s31, 0
    %s34 = sadd.s32 %s33, 1
    %s35 = scalar_select %p32, %s33, %s34
    %p38 = pneg %p32
    %p39 = scmp.eq.s32.totalorder %s9, 1
    %p40 = por %p38, %p39
    %p41 = scmp.ne.s32.totalorder %s33, %s36
    %p42 = scmp.eq.s32.totalorder %s9, 0
    %p43 = por %p41, %p42
    %p44 = scmp.ne.s32.totalorder %s33, %s36
    %p45 = scmp.eq.s32.totalorder %s14, 1
    %p46 = por %p44, %p45
    %p47 = scmp.ne.s32.totalorder %s36, %s37
    %p48 = scmp.eq.s32.totalorder %s14, 0
    %p49 = por %p47, %p48
    %p50 = scmp.ne.s32.totalorder %s36, %s37
    %p51 = scmp.eq.s32.totalorder %s15, 1
    %p52 = por %p50, %p51
    %p54 = scmp.ne.s32.totalorder %s37, %s53
    %p55 = scmp.eq.s32.totalorder %s15, 0
    %p56 = por %p54, %p55
    %s58 = sadd.s32 %s57, 1
    %p61 = scmp.eq.s32.totalorder %s9, 1
    %p62 = scmp.ne.s32.totalorder %s57, %s59
    %p63 = scmp.eq.s32.totalorder %s9, 0
    %p64 = por %p62, %p63
    %p65 = scmp.ne.s32.totalorder %s57, %s59
    %p66 = scmp.eq.s32.totalorder %s14, 1
    %p67 = por %p65, %p66
    %p68 = scmp.ne.s32.totalorder %s59, %s60
    %p69 = scmp.eq.s32.totalorder %s14, 0
    %p70 = por %p68, %p69
    %p71 = scmp.ne.s32.totalorder %s59, %s60
    %p72 = scmp.eq.s32.totalorder %s15, 1
    %p73 = por %p71, %p72
    %p75 = scmp.ne.s32.totalorder %s60, %s74
    %p76 = scmp.eq.s32.totalorder %s15, 0
    %p77 = por %p75, %p76
    %s79 = sadd.s32 %s78, 1
    %p82 = scmp.eq.s32.totalorder %s9, 1
    %p83 = scmp.ne.s32.totalorder %s78, %s80
    %p84 = scmp.eq.s32.totalorder %s9, 0
    %p85 = por %p83, %p84
    %p86 = scmp.ne.s32.totalorder %s78, %s80
    %p87 = scmp.eq.s32.totalorder %s14, 1
    %p88 = por %p86, %p87
    %p89 = scmp.ne.s32.totalorder %s80, %s81
    %p90 = scmp.eq.s32.totalorder %s14, 0
    %p91 = por %p89, %p90
    %p92 = scmp.ne.s32.totalorder %s80, %s81
    %p93 = scmp.eq.s32.totalorder %s15, 1
    %p94 = por %p92, %p93
    %p96 = scmp.ne.s32.totalorder %s81, %s95
    %p97 = scmp.eq.s32.totalorder %s15, 0
    %p98 = por %p96, %p97
    %s99 = ssub.s32 %s16, %s28
    %s100 = ssub.s32 %s17, %s24
    %s101 = sor.u32 %s99, %s100
    %p102 = scmp.eq.s32.totalorder %s101, 0
    %s104 = sadd.s32 %s103, 1
    %s105 = scalar_select %p102, %s103, %s104
    %p108 = pneg %p102
    %p109 = scmp.eq.s32.totalorder %s9, 1
    %p110 = por %p108, %p109
    %p111 = scmp.ne.s32.totalorder %s103, %s106
    %p112 = scmp.eq.s32.totalorder %s9, 0
    %p113 = por %p111, %p112
    %p114 = scmp.ne.s32.totalorder %s103, %s106
    %p115 = scmp.eq.s32.totalorder %s14, 1
    %p116 = por %p114, %p115
    %p117 = scmp.ne.s32.totalorder %s106, %s107
    %p118 = scmp.eq.s32.totalorder %s14, 0
    %p119 = por %p117, %p118
    %p120 = scmp.ne.s32.totalorder %s106, %s107
    %p121 = scmp.eq.s32.totalorder %s15, 1
    %p122 = por %p120, %p121
    %p124 = scmp.ne.s32.totalorder %s107, %s123
    %p125 = scmp.eq.s32.totalorder %s15, 0
    %p126 = por %p124, %p125
    %p127 = scmp.le.s32.totalorder 1, %s9
    %p128 = scmp.lt.s32.totalorder %s9, 3
    %p129 = pnand %p127, %p128
    %p130 = pneg %p129
    // Predicated region
    $region9: #{feature_extractor.5} parent=5 // pred_check
      _
    $region10: #{feature_extractor.5} parent=5 // pred_check_branch
      %132 = sbr.rel (%p129) target = $region12
    $region11: #{feature_extractor.5} parent=5 // pred_region
      %s133 = ssub.s32 %s9, 1
      // Predicated region
      $region13: #{feature_extractor.5} parent=11 // pred_check
        %p134 = pneg %p70
      $region14: #{feature_extractor.5} parent=11 // pred_check_branch
        %136 = sbr.rel (%p134) target = $region16
      $region15: #{feature_extractor.5} parent=11 // pred_region
        _
      $region16: #{feature_extractor.5} parent=11 // pred_fallthru
        _
      // Predicated region
      $region17: #{feature_extractor.5} parent=11 // pred_check
        %p137 = pneg %p91
      $region18: #{feature_extractor.5} parent=11 // pred_check_branch
        %139 = sbr.rel (%p137) target = $region20
      $region19: #{feature_extractor.5} parent=11 // pred_region
        _
      $region20: #{feature_extractor.5} parent=11 // pred_fallthru
        _
    $region12: #{feature_extractor.5} parent=5 // pred_fallthru
      _
    %p140 = scmp.lt.s32.totalorder %s9, 2
    // Predicated region
    $region21: #{feature_extractor.5} parent=5 // pred_check
      %p141 = pneg %p140
    $region22: #{feature_extractor.5} parent=5 // pred_check_branch
      %143 = sbr.rel (%p141) target = $region24
    $region23: #{feature_extractor.5} parent=5 // pred_region
      // Predicated region
      $region25: #{feature_extractor.5} parent=23 // pred_check
        %p144 = pneg %p43
      $region26: #{feature_extractor.5} parent=23 // pred_check_branch
        %146 = sbr.rel (%p144) target = $region28
      $region27: #{feature_extractor.5} parent=23 // pred_region
        %s147 = smul.u32 32, %s17
        %p148 = scmp.lt.s32.totalorder %s16, 1
        %s149 = scalar_select %p148, %s16, 1
        %p150 = scmp.lt.s32.totalorder %s147, 31
        %s151 = scalar_select %p150, %s147, 31
        %s152 = smul.addr %s149, 32
        %s153 = sadd.s32 %s151, %s152
        %s154 = smul.addr %s153, 8
        %s155 = scalar_lea.vmem %s0, %s154
        %s156 = smul.u32 32, %s17
      $region28: #{feature_extractor.5} parent=23 // pred_fallthru
        _
    $region24: #{feature_extractor.5} parent=5 // pred_fallthru
      _
    %p157 = scmp.le.s32.totalorder 1, %s9
    %p158 = scmp.lt.s32.totalorder %s9, 3
    %p159 = pnand %p157, %p158
    %p160 = pneg %p159
    // Predicated region
    $region29: #{feature_extractor.5} parent=5 // pred_check
      _
    $region30: #{feature_extractor.5} parent=5 // pred_check_branch
      %162 = sbr.rel (%p159) target = $region32
    $region31: #{feature_extractor.5} parent=5 // pred_region
      %s163 = ssub.s32 %s9, 1
      %s164 = smul.u32 32, %s19
      %p165 = scmp.lt.s32.totalorder %s18, 1
      %s166 = scalar_select %p165, %s18, 1
      %p167 = scmp.lt.s32.totalorder %s164, 31
      %s168 = scalar_select %p167, %s164, 31
      %s169 = smul.addr %s166, 32
      %s170 = sadd.s32 %s168, %s169
      %s171 = smul.addr %s170, 8
      %s172 = scalar_lea.vmem %s0, %s171
      %p173 = pneg %p49
      %p174 = pneg %p46
      %p175 = pneg %p70
      %p176 = pneg %p67
      %p177 = pneg %p91
      %p178 = pneg %p88
      %p179 = pneg %p119
      %p180 = pneg %p116
      %s181 = smul.u32 32, %s19
      %p182 = scmp.lt.s32.totalorder %s18, 1
      %s183 = scalar_select %p182, %s18, 1
      %p184 = scmp.lt.s32.totalorder %s181, 31
      %s185 = scalar_select %p184, %s181, 31
      %s186 = smul.addr %s183, 32
      %s187 = sadd.s32 %s185, %s186
      %s188 = smul.addr %s187, 8
      %s189 = scalar_lea.vmem %s3, %s188
      %s190 = smul.u32 32, %s19
      %p191 = scmp.lt.s32.totalorder %s18, 1
      %s192 = scalar_select %p191, %s18, 1
      %p193 = scmp.lt.s32.totalorder %s190, 31
      %s194 = scalar_select %p193, %s190, 31
      %s195 = smul.addr %s192, 32
      %s196 = sadd.s32 %s194, %s195
      %s197 = smul.addr %s196, 8
      %s198 = scalar_lea.vmem %s0, %s197
      %s199 = smul.u32 32, %s19
      %s200 = smul.u32 32, %s19
      %p201 = scmp.lt.s32.totalorder %s18, 1
      %s202 = scalar_select %p201, %s18, 1
      %p203 = scmp.lt.s32.totalorder %s200, 31
      %s204 = scalar_select %p203, %s200, 31
      %s205 = smul.addr %s202, 32
      %s206 = sadd.s32 %s204, %s205
      %s207 = smul.addr %s206, 8
      %s208 = scalar_lea.vmem %s3, %s207
      %s209 = smul.u32 32, %s19
      %v210 = vld [vmem:[%s198] sm:$0xff]
      %v211 = vld [vmem:[%s198 + $0x8] sm:$0xff]
      %v212 = vld [vmem:[%s198 + $0x10] sm:$0xff]
      %v213 = vld [vmem:[%s198 + $0x18] sm:$0xff]
      %v214 = vld [vmem:[%s198 + $0x20] sm:$0xff]
      %v215 = vld [vmem:[%s198 + $0x28] sm:$0xff]
      %v216 = vld [vmem:[%s198 + $0x30] sm:$0xff]
      %v217 = vld [vmem:[%s198 + $0x38] sm:$0xff]
      %v218 = vld [vmem:[%s198 + $0x40] sm:$0xff]
      %v219 = vld [vmem:[%s198 + $0x48] sm:$0xff]
      %v220 = vld [vmem:[%s198 + $0x50] sm:$0xff]
      %v221 = vld [vmem:[%s198 + $0x58] sm:$0xff]
      %v222 = vld [vmem:[%s198 + $0x60] sm:$0xff]
      %v223 = vld [vmem:[%s198 + $0x68] sm:$0xff]
      %v224 = vld [vmem:[%s198 + $0x70] sm:$0xff]
      %v225 = vld [vmem:[%s198 + $0x78] sm:$0xff]
      %v226 = vld [vmem:[%s198 + $0x80] sm:$0xff]
      %v227 = vld [vmem:[%s198 + $0x88] sm:$0xff]
      %v228 = vld [vmem:[%s198 + $0x90] sm:$0xff]
      %v229 = vld [vmem:[%s198 + $0x98] sm:$0xff]
      %v230 = vld [vmem:[%s198 + $0xa0] sm:$0xff]
      %v231 = vld [vmem:[%s198 + $0xa8] sm:$0xff]
      %v232 = vld [vmem:[%s198 + $0xb0] sm:$0xff]
      %v233 = vld [vmem:[%s198 + $0xb8] sm:$0xff]
      %v234 = vld [vmem:[%s198 + $0xc0] sm:$0xff]
      %v235 = vld [vmem:[%s198 + $0xc8] sm:$0xff]
      %v236 = vld [vmem:[%s198 + $0xd0] sm:$0xff]
      %v237 = vld [vmem:[%s198 + $0xd8] sm:$0xff]
      %v238 = vld [vmem:[%s198 + $0xe0] sm:$0xff]
      %v239 = vld [vmem:[%s198 + $0xe8] sm:$0xff]
      %v240 = vld [vmem:[%s198 + $0xf0] sm:$0xff]
      %v241 = vld [vmem:[%s198 + $0xf8] sm:$0xff]
      %v242 = vld [vmem:[%s1] sm:$0x1]
      %v244 = vlaneseq
      %v245 = vshrl.u32 %v244, 7
      %v246 = vsub.s32 0, %v245
      %v247 = vrot.slane %v242, %v246
      %v249 = vmul.f32 %v210, %v247
      %v250 = vmul.f32 %v211, %v247
      %v251 = vmul.f32 %v212, %v247
      %v252 = vmul.f32 %v213, %v247
      %v253 = vmul.f32 %v214, %v247
      %v254 = vmul.f32 %v215, %v247
      %v255 = vmul.f32 %v216, %v247
      %v256 = vmul.f32 %v217, %v247
      %v257 = vmul.f32 %v218, %v247
      %v258 = vmul.f32 %v219, %v247
      %v259 = vmul.f32 %v220, %v247
      %v260 = vmul.f32 %v221, %v247
      %v261 = vmul.f32 %v222, %v247
      %v262 = vmul.f32 %v223, %v247
      %v263 = vmul.f32 %v224, %v247
      %v264 = vmul.f32 %v225, %v247
      %v265 = vmul.f32 %v226, %v247
      %v266 = vmul.f32 %v227, %v247
      %v267 = vmul.f32 %v228, %v247
      %v268 = vmul.f32 %v229, %v247
      %v269 = vmul.f32 %v230, %v247
      %v270 = vmul.f32 %v231, %v247
      %v271 = vmul.f32 %v232, %v247
      %v272 = vmul.f32 %v233, %v247
      %v273 = vmul.f32 %v234, %v247
      %v274 = vmul.f32 %v235, %v247
      %v275 = vmul.f32 %v236, %v247
      %v276 = vmul.f32 %v237, %v247
      %v277 = vmul.f32 %v238, %v247
      %v278 = vmul.f32 %v239, %v247
      %v279 = vmul.f32 %v240, %v247
      %v280 = vmul.f32 %v241, %v247
      %v281 = vld [vmem:[%s2] sm:$0x1]
      %v283 = vlaneseq
      %v284 = vshrl.u32 %v283, 7
      %v285 = vsub.s32 0, %v284
      %v286 = vrot.slane %v281, %v285
      %v288 = vadd.f32 %v249, %v286
      %v289 = vadd.f32 %v250, %v286
      %v290 = vadd.f32 %v251, %v286
      %v291 = vadd.f32 %v252, %v286
      %v292 = vadd.f32 %v253, %v286
      %v293 = vadd.f32 %v254, %v286
      %v294 = vadd.f32 %v255, %v286
      %v295 = vadd.f32 %v256, %v286
      %v296 = vadd.f32 %v257, %v286
      %v297 = vadd.f32 %v258, %v286
      %v298 = vadd.f32 %v259, %v286
      %v299 = vadd.f32 %v260, %v286
      %v300 = vadd.f32 %v261, %v286
      %v301 = vadd.f32 %v262, %v286
      %v302 = vadd.f32 %v263, %v286
      %v303 = vadd.f32 %v264, %v286
      %v304 = vadd.f32 %v265, %v286
      %v305 = vadd.f32 %v266, %v286
      %v306 = vadd.f32 %v267, %v286
      %v307 = vadd.f32 %v268, %v286
      %v308 = vadd.f32 %v269, %v286
      %v309 = vadd.f32 %v270, %v286
      %v310 = vadd.f32 %v271, %v286
      %v311 = vadd.f32 %v272, %v286
      %v312 = vadd.f32 %v273, %v286
      %v313 = vadd.f32 %v274, %v286
      %v314 = vadd.f32 %v275, %v286
      %v315 = vadd.f32 %v276, %v286
      %v316 = vadd.f32 %v277, %v286
      %v317 = vadd.f32 %v278, %v286
      %v318 = vadd.f32 %v279, %v286
      %v319 = vadd.f32 %v280, %v286
      %320 = vst [vmem:[%s208] sm:$0xff] %v288
      %321 = vst [vmem:[%s208 + $0x8] sm:$0xff] %v289
      %322 = vst [vmem:[%s208 + $0x10] sm:$0xff] %v290
      %323 = vst [vmem:[%s208 + $0x18] sm:$0xff] %v291
      %324 = vst [vmem:[%s208 + $0x20] sm:$0xff] %v292
      %325 = vst [vmem:[%s208 + $0x28] sm:$0xff] %v293
      %326 = vst [vmem:[%s208 + $0x30] sm:$0xff] %v294
      %327 = vst [vmem:[%s208 + $0x38] sm:$0xff] %v295
      %328 = vst [vmem:[%s208 + $0x40] sm:$0xff] %v296
      %329 = vst [vmem:[%s208 + $0x48] sm:$0xff] %v297
      %330 = vst [vmem:[%s208 + $0x50] sm:$0xff] %v298
      %331 = vst [vmem:[%s208 + $0x58] sm:$0xff] %v299
      %332 = vst [vmem:[%s208 + $0x60] sm:$0xff] %v300
      %333 = vst [vmem:[%s208 + $0x68] sm:$0xff] %v301
      %334 = vst [vmem:[%s208 + $0x70] sm:$0xff] %v302
      %335 = vst [vmem:[%s208 + $0x78] sm:$0xff] %v303
      %336 = vst [vmem:[%s208 + $0x80] sm:$0xff] %v304
      %337 = vst [vmem:[%s208 + $0x88] sm:$0xff] %v305
      %338 = vst [vmem:[%s208 + $0x90] sm:$0xff] %v306
      %339 = vst [vmem:[%s208 + $0x98] sm:$0xff] %v307
      %340 = vst [vmem:[%s208 + $0xa0] sm:$0xff] %v308
      %341 = vst [vmem:[%s208 + $0xa8] sm:$0xff] %v309
      %342 = vst [vmem:[%s208 + $0xb0] sm:$0xff] %v310
      %343 = vst [vmem:[%s208 + $0xb8] sm:$0xff] %v311
      %344 = vst [vmem:[%s208 + $0xc0] sm:$0xff] %v312
      %345 = vst [vmem:[%s208 + $0xc8] sm:$0xff] %v313
      %346 = vst [vmem:[%s208 + $0xd0] sm:$0xff] %v314
      %347 = vst [vmem:[%s208 + $0xd8] sm:$0xff] %v315
      %348 = vst [vmem:[%s208 + $0xe0] sm:$0xff] %v316
      %349 = vst [vmem:[%s208 + $0xe8] sm:$0xff] %v317
      %350 = vst [vmem:[%s208 + $0xf0] sm:$0xff] %v318
      %351 = vst [vmem:[%s208 + $0xf8] sm:$0xff] %v319
      %s352 = smul.u32 32, %s19
      %p353 = scmp.lt.s32.totalorder %s18, 1
      %s354 = scalar_select %p353, %s18, 1
      %p355 = scmp.lt.s32.totalorder %s352, 31
      %s356 = scalar_select %p355, %s352, 31
      %s357 = smul.addr %s354, 32
      %s358 = sadd.s32 %s356, %s357
      %s359 = smul.addr %s358, 8
      %s360 = scalar_lea.vmem %s3, %s359
      // Predicated region
      $region33: #{feature_extractor.5} parent=31 // pred_check
        %p361 = pneg %p116
      $region34: #{feature_extractor.5} parent=31 // pred_check_branch
        %363 = sbr.rel (%p361) target = $region36
      $region35: #{feature_extractor.5} parent=31 // pred_region
        %s364 = smul.u32 32, %s19
      $region36: #{feature_extractor.5} parent=31 // pred_fallthru
        _
    $region32: #{feature_extractor.5} parent=5 // pred_fallthru
      _
    %p365 = scmp.le.s32.totalorder 2, %s9
    // Predicated region
    $region37: #{feature_extractor.5} parent=5 // pred_check
      %p366 = pneg %p365
    $region38: #{feature_extractor.5} parent=5 // pred_check_branch
      %368 = sbr.rel (%p366) target = $region40
    $region39: #{feature_extractor.5} parent=5 // pred_region
      %s369 = ssub.s32 %s9, 2
      // Predicated region
      $region41: #{feature_extractor.5} parent=39 // pred_check
        %p370 = pneg %p122
      $region42: #{feature_extractor.5} parent=39 // pred_check_branch
        %372 = sbr.rel (%p370) target = $region44
      $region43: #{feature_extractor.5} parent=39 // pred_region
        %s373 = smul.u32 32, %s21
        %p374 = scmp.lt.s32.totalorder %s20, 1
        %s375 = scalar_select %p374, %s20, 1
        %p376 = scmp.lt.s32.totalorder %s373, 31
        %s377 = scalar_select %p376, %s373, 31
        %s378 = smul.addr %s375, 32
        %s379 = sadd.s32 %s377, %s378
        %s380 = smul.addr %s379, 8
        %s381 = scalar_lea.vmem %s3, %s380
      $region44: #{feature_extractor.5} parent=39 // pred_fallthru
        _
    $region40: #{feature_extractor.5} parent=5 // pred_fallthru
      _
  $region6: #{feature_extractor.5} parent=0 // loop_footer
    %s13 = sadd.s32 1, %s9
  $region7: #{feature_extractor.5} parent=0 // loop_footer_branch
    %8 = sbr.rel target = $region3
  $region8: #{feature_extractor.5} parent=0 // loop_exit
    _

// kernel: feature_extractor.7
$region0: #{feature_extractor.7}
  #allocation0 [shape = 'u32[]', space=smem, size = 0x4, offset = 0x4, fixed_abs, tag = 'smem constant byte address 0x4 - core index']
  #allocation1 [shape = 'u32[144,128]{1,0:T(1,128)}', space=vmem, size = 0x12000, scoped, tag = 'internal scratch']
  %s0 = inlined_call_operand.vmem [shape: f32[2,64,128], index: 0, kind: input, shape index: {}, may-alias: {0,3}]
  %s1 = inlined_call_operand.vmem [shape: f32[1,128], index: 1, kind: input, shape index: {}]
  %s2 = inlined_call_operand.vmem [shape: f32[1,128], index: 2, kind: input, shape index: {}]
  %s3 = inlined_call_operand.vmem [shape: f32[2,64,128], index: 3, kind: output, shape index: {}, may-alias: {0,3}]
  %s4 = sld [smem:[#allocation0]]
  $region45: #{feature_extractor.7} parent=0
    _
  %s6 = ssub.s32 1, %s4
  %s7 = scalar_select 0, %s6, %s4
  loop: start=0, step=1, limit=4
  $region2: #{feature_extractor.7} parent=0 // loop_pre_header
    _
  $region3: #{feature_extractor.7} parent=0 // loop_header
    %s9 = sphi 0, %s13
    %p10 = scmp.ge.s32.totalorder %s9, 4
    %s16 = sphi 0, %s28
    %s17 = sphi 0, %s24
    %s18 = sphi 0, %s16
    %s19 = sphi 0, %s17
    %s20 = sphi 0, %s18
    %s21 = sphi 0, %s19
    %s33 = sphi 0, %s35
    %s36 = sphi 0, %s33
    %s37 = sphi 0, %s36
    %s53 = sphi 0, %s37
    %s57 = sphi 0, %s57
    %s59 = sphi 0, %s57
    %s60 = sphi 0, %s59
    %s74 = sphi 0, %s60
    %s78 = sphi 0, %s78
    %s80 = sphi 0, %s78
    %s81 = sphi 0, %s80
    %s95 = sphi 0, %s81
    %s103 = sphi 0, %s105
    %s106 = sphi 0, %s103
    %s107 = sphi 0, %s106
    %s123 = sphi 0, %s107
  $region4: #{feature_extractor.7} parent=0 // loop_header_branch
    %12 = sbr.rel (%p10) target = $region8
  $region5: #{feature_extractor.7} parent=0 // loop_body
    %s14 = ssub.s32 %s9, 1
    %s15 = ssub.s32 %s9, 2
    %s22 = sadd.s32 1, %s17
    %p23 = scmp.ge.s32.totalorder %s22, 1
    %s24 = scalar_select %p23, 0, %s22
    %s25 = sadd.s32 1, %s16
    %s26 = scalar_select %p23, %s25, %s16
    %p27 = scmp.ge.s32.totalorder %s26, 2
    %s28 = scalar_select %p27, 0, %s26
    %s29 = ssub.s32 %s16, %s28
    %s30 = ssub.s32 %s17, %s24
    %s31 = sor.u32 %s29, %s30
    %p32 = scmp.eq.s32.totalorder %s31, 0
    %s34 = sadd.s32 %s33, 1
    %s35 = scalar_select %p32, %s33, %s34
    %p38 = pneg %p32
    %p39 = scmp.eq.s32.totalorder %s9, 1
    %p40 = por %p38, %p39
    %p41 = scmp.ne.s32.totalorder %s33, %s36
    %p42 = scmp.eq.s32.totalorder %s9, 0
    %p43 = por %p41, %p42
    %p44 = scmp.ne.s32.totalorder %s33, %s36
    %p45 = scmp.eq.s32.totalorder %s14, 1
    %p46 = por %p44, %p45
    %p47 = scmp.ne.s32.totalorder %s36, %s37
    %p48 = scmp.eq.s32.totalorder %s14, 0
    %p49 = por %p47, %p48
    %p50 = scmp.ne.s32.totalorder %s36, %s37
    %p51 = scmp.eq.s32.totalorder %s15, 1
    %p52 = por %p50, %p51
    %p54 = scmp.ne.s32.totalorder %s37, %s53
    %p55 = scmp.eq.s32.totalorder %s15, 0
    %p56 = por %p54, %p55
    %s58 = sadd.s32 %s57, 1
    %p61 = scmp.eq.s32.totalorder %s9, 1
    %p62 = scmp.ne.s32.totalorder %s57, %s59
    %p63 = scmp.eq.s32.totalorder %s9, 0
    %p64 = por %p62, %p63
    %p65 = scmp.ne.s32.totalorder %s57, %s59
    %p66 = scmp.eq.s32.totalorder %s14, 1
    %p67 = por %p65, %p66
    %p68 = scmp.ne.s32.totalorder %s59, %s60
    %p69 = scmp.eq.s32.totalorder %s14, 0
    %p70 = por %p68, %p69
    %p71 = scmp.ne.s32.totalorder %s59, %s60
    %p72 = scmp.eq.s32.totalorder %s15, 1
    %p73 = por %p71, %p72
    %p75 = scmp.ne.s32.totalorder %s60, %s74
    %p76 = scmp.eq.s32.totalorder %s15, 0
    %p77 = por %p75, %p76
    %s79 = sadd.s32 %s78, 1
    %p82 = scmp.eq.s32.totalorder %s9, 1
    %p83 = scmp.ne.s32.totalorder %s78, %s80
    %p84 = scmp.eq.s32.totalorder %s9, 0
    %p85 = por %p83, %p84
    %p86 = scmp.ne.s32.totalorder %s78, %s80
    %p87 = scmp.eq.s32.totalorder %s14, 1
    %p88 = por %p86, %p87
    %p89 = scmp.ne.s32.totalorder %s80, %s81
    %p90 = scmp.eq.s32.totalorder %s14, 0
    %p91 = por %p89, %p90
    %p92 = scmp.ne.s32.totalorder %s80, %s81
    %p93 = scmp.eq.s32.totalorder %s15, 1
    %p94 = por %p92, %p93
    %p96 = scmp.ne.s32.totalorder %s81, %s95
    %p97 = scmp.eq.s32.totalorder %s15, 0
    %p98 = por %p96, %p97
    %s99 = ssub.s32 %s16, %s28
    %s100 = ssub.s32 %s17, %s24
    %s101 = sor.u32 %s99, %s100
    %p102 = scmp.eq.s32.totalorder %s101, 0
    %s104 = sadd.s32 %s103, 1
    %s105 = scalar_select %p102, %s103, %s104
    %p108 = pneg %p102
    %p109 = scmp.eq.s32.totalorder %s9, 1
    %p110 = por %p108, %p109
    %p111 = scmp.ne.s32.totalorder %s103, %s106
    %p112 = scmp.eq.s32.totalorder %s9, 0
    %p113 = por %p111, %p112
    %p114 = scmp.ne.s32.totalorder %s103, %s106
    %p115 = scmp.eq.s32.totalorder %s14, 1
    %p116 = por %p114, %p115
    %p117 = scmp.ne.s32.totalorder %s106, %s107
    %p118 = scmp.eq.s32.totalorder %s14, 0
    %p119 = por %p117, %p118
    %p120 = scmp.ne.s32.totalorder %s106, %s107
    %p121 = scmp.eq.s32.totalorder %s15, 1
    %p122 = por %p120, %p121
    %p124 = scmp.ne.s32.totalorder %s107, %s123
    %p125 = scmp.eq.s32.totalorder %s15, 0
    %p126 = por %p124, %p125
    %p127 = scmp.le.s32.totalorder 1, %s9
    %p128 = scmp.lt.s32.totalorder %s9, 3
    %p129 = pnand %p127, %p128
    %p130 = pneg %p129
    // Predicated region
    $region9: #{feature_extractor.7} parent=5 // pred_check
      _
    $region10: #{feature_extractor.7} parent=5 // pred_check_branch
      %132 = sbr.rel (%p129) target = $region12
    $region11: #{feature_extractor.7} parent=5 // pred_region
      %s133 = ssub.s32 %s9, 1
      // Predicated region
      $region13: #{feature_extractor.7} parent=11 // pred_check
        %p134 = pneg %p70
      $region14: #{feature_extractor.7} parent=11 // pred_check_branch
        %136 = sbr.rel (%p134) target = $region16
      $region15: #{feature_extractor.7} parent=11 // pred_region
        _
      $region16: #{feature_extractor.7} parent=11 // pred_fallthru
        _
      // Predicated region
      $region17: #{feature_extractor.7} parent=11 // pred_check
        %p137 = pneg %p91
      $region18: #{feature_extractor.7} parent=11 // pred_check_branch
        %139 = sbr.rel (%p137) target = $region20
      $region19: #{feature_extractor.7} parent=11 // pred_region
        _
      $region20: #{feature_extractor.7} parent=11 // pred_fallthru
        _
    $region12: #{feature_extractor.7} parent=5 // pred_fallthru
      _
    %p140 = scmp.lt.s32.totalorder %s9, 2
    // Predicated region
    $region21: #{feature_extractor.7} parent=5 // pred_check
      %p141 = pneg %p140
    $region22: #{feature_extractor.7} parent=5 // pred_check_branch
      %143 = sbr.rel (%p141) target = $region24
    $region23: #{feature_extractor.7} parent=5 // pred_region
      // Predicated region
      $region25: #{feature_extractor.7} parent=23 // pred_check
        %p144 = pneg %p43
      $region26: #{feature_extractor.7} parent=23 // pred_check_branch
        %146 = sbr.rel (%p144) target = $region28
      $region27: #{feature_extractor.7} parent=23 // pred_region
        %s147 = smul.u32 8, %s17
        %p148 = scmp.lt.s32.totalorder %s16, 1
        %s149 = scalar_select %p148, %s16, 1
        %p150 = scmp.lt.s32.totalorder %s147, 7
        %s151 = scalar_select %p150, %s147, 7
        %s152 = smul.addr %s149, 8
        %s153 = sadd.s32 %s151, %s152
        %s154 = smul.addr %s153, 8
        %s155 = scalar_lea.vmem %s0, %s154
        %s156 = smul.u32 8, %s17
      $region28: #{feature_extractor.7} parent=23 // pred_fallthru
        _
    $region24: #{feature_extractor.7} parent=5 // pred_fallthru
      _
    %p157 = scmp.le.s32.totalorder 1, %s9
    %p158 = scmp.lt.s32.totalorder %s9, 3
    %p159 = pnand %p157, %p158
    %p160 = pneg %p159
    // Predicated region
    $region29: #{feature_extractor.7} parent=5 // pred_check
      _
    $region30: #{feature_extractor.7} parent=5 // pred_check_branch
      %162 = sbr.rel (%p159) target = $region32
    $region31: #{feature_extractor.7} parent=5 // pred_region
      %s163 = ssub.s32 %s9, 1
      %s164 = smul.u32 8, %s19
      %p165 = scmp.lt.s32.totalorder %s18, 1
      %s166 = scalar_select %p165, %s18, 1
      %p167 = scmp.lt.s32.totalorder %s164, 7
      %s168 = scalar_select %p167, %s164, 7
      %s169 = smul.addr %s166, 8
      %s170 = sadd.s32 %s168, %s169
      %s171 = smul.addr %s170, 8
      %s172 = scalar_lea.vmem %s0, %s171
      %p173 = pneg %p49
      %p174 = pneg %p46
      %p175 = pneg %p70
      %p176 = pneg %p67
      %p177 = pneg %p91
      %p178 = pneg %p88
      %p179 = pneg %p119
      %p180 = pneg %p116
      %s181 = smul.u32 8, %s19
      %p182 = scmp.lt.s32.totalorder %s18, 1
      %s183 = scalar_select %p182, %s18, 1
      %p184 = scmp.lt.s32.totalorder %s181, 7
      %s185 = scalar_select %p184, %s181, 7
      %s186 = smul.addr %s183, 8
      %s187 = sadd.s32 %s185, %s186
      %s188 = smul.addr %s187, 8
      %s189 = scalar_lea.vmem %s3, %s188
      %s190 = smul.u32 8, %s19
      %p191 = scmp.lt.s32.totalorder %s18, 1
      %s192 = scalar_select %p191, %s18, 1
      %p193 = scmp.lt.s32.totalorder %s190, 7
      %s194 = scalar_select %p193, %s190, 7
      %s195 = smul.addr %s192, 8
      %s196 = sadd.s32 %s194, %s195
      %s197 = smul.addr %s196, 8
      %s198 = scalar_lea.vmem %s0, %s197
      %s199 = smul.u32 8, %s19
      %s200 = smul.u32 8, %s19
      %p201 = scmp.lt.s32.totalorder %s18, 1
      %s202 = scalar_select %p201, %s18, 1
      %p203 = scmp.lt.s32.totalorder %s200, 7
      %s204 = scalar_select %p203, %s200, 7
      %s205 = smul.addr %s202, 8
      %s206 = sadd.s32 %s204, %s205
      %s207 = smul.addr %s206, 8
      %s208 = scalar_lea.vmem %s3, %s207
      %s209 = smul.u32 8, %s19
      %v210 = vld [vmem:[%s198] sm:$0xff]
      %v211 = vld [vmem:[%s198 + $0x8] sm:$0xff]
      %v212 = vld [vmem:[%s198 + $0x10] sm:$0xff]
      %v213 = vld [vmem:[%s198 + $0x18] sm:$0xff]
      %v214 = vld [vmem:[%s198 + $0x20] sm:$0xff]
      %v215 = vld [vmem:[%s198 + $0x28] sm:$0xff]
      %v216 = vld [vmem:[%s198 + $0x30] sm:$0xff]
      %v217 = vld [vmem:[%s198 + $0x38] sm:$0xff]
      %v218 = vld [vmem:[%s1] sm:$0x1]
      %v220 = vlaneseq
      %v221 = vshrl.u32 %v220, 7
      %v222 = vsub.s32 0, %v221
      %v223 = vrot.slane %v218, %v222
      %v225 = vmul.f32 %v210, %v223
      %v226 = vmul.f32 %v211, %v223
      %v227 = vmul.f32 %v212, %v223
      %v228 = vmul.f32 %v213, %v223
      %v229 = vmul.f32 %v214, %v223
      %v230 = vmul.f32 %v215, %v223
      %v231 = vmul.f32 %v216, %v223
      %v232 = vmul.f32 %v217, %v223
      %v233 = vld [vmem:[%s2] sm:$0x1]
      %v235 = vlaneseq
      %v236 = vshrl.u32 %v235, 7
      %v237 = vsub.s32 0, %v236
      %v238 = vrot.slane %v233, %v237
      %v240 = vadd.f32 %v225, %v238
      %v241 = vadd.f32 %v226, %v238
      %v242 = vadd.f32 %v227, %v238
      %v243 = vadd.f32 %v228, %v238
      %v244 = vadd.f32 %v229, %v238
      %v245 = vadd.f32 %v230, %v238
      %v246 = vadd.f32 %v231, %v238
      %v247 = vadd.f32 %v232, %v238
      %248 = vst [vmem:[%s208] sm:$0xff] %v240
      %249 = vst [vmem:[%s208 + $0x8] sm:$0xff] %v241
      %250 = vst [vmem:[%s208 + $0x10] sm:$0xff] %v242
      %251 = vst [vmem:[%s208 + $0x18] sm:$0xff] %v243
      %252 = vst [vmem:[%s208 + $0x20] sm:$0xff] %v244
      %253 = vst [vmem:[%s208 + $0x28] sm:$0xff] %v245
      %254 = vst [vmem:[%s208 + $0x30] sm:$0xff] %v246
      %255 = vst [vmem:[%s208 + $0x38] sm:$0xff] %v247
      %s256 = smul.u32 8, %s19
      %p257 = scmp.lt.s32.totalorder %s18, 1
      %s258 = scalar_select %p257, %s18, 1
      %p259 = scmp.lt.s32.totalorder %s256, 7
      %s260 = scalar_select %p259, %s256, 7
      %s261 = smul.addr %s258, 8
      %s262 = sadd.s32 %s260, %s261
      %s263 = smul.addr %s262, 8
      %s264 = scalar_lea.vmem %s3, %s263
      // Predicated region
      $region33: #{feature_extractor.7} parent=31 // pred_check
        %p265 = pneg %p116
      $region34: #{feature_extractor.7} parent=31 // pred_check_branch
        %267 = sbr.rel (%p265) target = $region36
      $region35: #{feature_extractor.7} parent=31 // pred_region
        %s268 = smul.u32 8, %s19
      $region36: #{feature_extractor.7} parent=31 // pred_fallthru
        _
    $region32: #{feature_extractor.7} parent=5 // pred_fallthru
      _
    %p269 = scmp.le.s32.totalorder 2, %s9
    // Predicated region
    $region37: #{feature_extractor.7} parent=5 // pred_check
      %p270 = pneg %p269
    $region38: #{feature_extractor.7} parent=5 // pred_check_branch
      %272 = sbr.rel (%p270) target = $region40
    $region39: #{feature_extractor.7} parent=5 // pred_region
      %s273 = ssub.s32 %s9, 2
      // Predicated region
      $region41: #{feature_extractor.7} parent=39 // pred_check
        %p274 = pneg %p122
      $region42: #{feature_extractor.7} parent=39 // pred_check_branch
        %276 = sbr.rel (%p274) target = $region44
      $region43: #{feature_extractor.7} parent=39 // pred_region
        %s277 = smul.u32 8, %s21
        %p278 = scmp.lt.s32.totalorder %s20, 1
        %s279 = scalar_select %p278, %s20, 1
        %p280 = scmp.lt.s32.totalorder %s277, 7
        %s281 = scalar_select %p280, %s277, 7
        %s282 = smul.addr %s279, 8
        %s283 = sadd.s32 %s281, %s282
        %s284 = smul.addr %s283, 8
        %s285 = scalar_lea.vmem %s3, %s284
      $region44: #{feature_extractor.7} parent=39 // pred_fallthru
        _
    $region40: #{feature_extractor.7} parent=5 // pred_fallthru
      _
  $region6: #{feature_extractor.7} parent=0 // loop_footer
    %s13 = sadd.s32 1, %s9
  $region7: #{feature_extractor.7} parent=0 // loop_footer_branch
    %8 = sbr.rel target = $region3
  $region8: #{feature_extractor.7} parent=0 // loop_exit
    _

// kernel: feature_extractor.4
$region0: #{feature_extractor.4}
  #allocation0 [shape = 'u32[]', space=smem, size = 0x4, offset = 0x4, fixed_abs, tag = 'smem constant byte address 0x4 - core index']
  #allocation1 [shape = 'u32[144,128]{1,0:T(1,128)}', space=vmem, size = 0x12000, scoped, tag = 'internal scratch']
  %s0 = inlined_call_operand.vmem [shape: f32[2,18,24,4], index: 0, kind: input, shape index: {}]
  %s1 = inlined_call_operand.vmem [shape: f32[36,128], index: 1, kind: input, shape index: {}]
  %s2 = inlined_call_operand.vmem [shape: f32[1,128], index: 2, kind: input, shape index: {}]
  %s3 = inlined_call_operand.vmem [shape: f32[2,256,128], index: 3, kind: output, shape index: {0}]
  %s4 = inlined_call_operand.vmem [shape: f32[2,1,2,128], index: 4, kind: output, shape index: {1}]
  %5 = xla_tuple %s3, %s4
  %s6 = sld [smem:[#allocation0]]
  $region53: #{feature_extractor.4} parent=0
    _
  %s8 = ssub.s32 1, %s6
  %s9 = scalar_select 0, %s8, %s6
  loop: start=0, step=1, limit=4
  $region2: #{feature_extractor.4} parent=0 // loop_pre_header
    _
  $region3: #{feature_extractor.4} parent=0 // loop_header
    %s11 = sphi 0, %s15
    %p12 = scmp.ge.s32.totalorder %s11, 4
    %s18 = sphi 0, %s30
    %s19 = sphi 0, %s26
    %s20 = sphi 0, %s18
    %s21 = sphi 0, %s19
    %s22 = sphi 0, %s20
    %s23 = sphi 0, %s21
    %s33 = sphi 0, %s35
    %s36 = sphi 0, %s33
    %s37 = sphi 0, %s36
    %s53 = sphi 0, %s37
    %s57 = sphi 0, %s57
    %s59 = sphi 0, %s57
    %s60 = sphi 0, %s59
    %s74 = sphi 0, %s60
    %s78 = sphi 0, %s78
    %s80 = sphi 0, %s78
    %s81 = sphi 0, %s80
    %s95 = sphi 0, %s81
    %s103 = sphi 0, %s105
    %s106 = sphi 0, %s103
    %s107 = sphi 0, %s106
    %s123 = sphi 0, %s107
    %s131 = sphi 0, %s133
    %s134 = sphi 0, %s131
    %s135 = sphi 0, %s134
    %s151 = sphi 0, %s135
  $region4: #{feature_extractor.4} parent=0 // loop_header_branch
    %14 = sbr.rel (%p12) target = $region8
  $region5: #{feature_extractor.4} parent=0 // loop_body
    %s16 = ssub.s32 %s11, 1
    %s17 = ssub.s32 %s11, 2
    %s24 = sadd.s32 1, %s19
    %p25 = scmp.ge.s32.totalorder %s24, 1
    %s26 = scalar_select %p25, 0, %s24
    %s27 = sadd.s32 1, %s18
    %s28 = scalar_select %p25, %s27, %s18
    %p29 = scmp.ge.s32.totalorder %s28, 2
    %s30 = scalar_select %p29, 0, %s28
    %s31 = ssub.s32 %s18, %s30
    %p32 = scmp.eq.s32.totalorder %s31, 0
    %s34 = sadd.s32 %s33, 1
    %s35 = scalar_select %p32, %s33, %s34
    %p38 = pneg %p32
    %p39 = scmp.eq.s32.totalorder %s11, 1
    %p40 = por %p38, %p39
    %p41 = scmp.ne.s32.totalorder %s33, %s36
    %p42 = scmp.eq.s32.totalorder %s11, 0
    %p43 = por %p41, %p42
    %p44 = scmp.ne.s32.totalorder %s33, %s36
    %p45 = scmp.eq.s32.totalorder %s16, 1
    %p46 = por %p44, %p45
    %p47 = scmp.ne.s32.totalorder %s36, %s37
    %p48 = scmp.eq.s32.totalorder %s16, 0
    %p49 = por %p47, %p48
    %p50 = scmp.ne.s32.totalorder %s36, %s37
    %p51 = scmp.eq.s32.totalorder %s17, 1
    %p52 = por %p50, %p51
    %p54 = scmp.ne.s32.totalorder %s37, %s53
    %p55 = scmp.eq.s32.totalorder %s17, 0
    %p56 = por %p54, %p55
    %s58 = sadd.s32 %s57, 1
    %p61 = scmp.eq.s32.totalorder %s11, 1
    %p62 = scmp.ne.s32.totalorder %s57, %s59
    %p63 = scmp.eq.s32.totalorder %s11, 0
    %p64 = por %p62, %p63
    %p65 = scmp.ne.s32.totalorder %s57, %s59
    %p66 = scmp.eq.s32.totalorder %s16, 1
    %p67 = por %p65, %p66
    %p68 = scmp.ne.s32.totalorder %s59, %s60
    %p69 = scmp.eq.s32.totalorder %s16, 0
    %p70 = por %p68, %p69
    %p71 = scmp.ne.s32.totalorder %s59, %s60
    %p72 = scmp.eq.s32.totalorder %s17, 1
    %p73 = por %p71, %p72
    %p75 = scmp.ne.s32.totalorder %s60, %s74
    %p76 = scmp.eq.s32.totalorder %s17, 0
    %p77 = por %p75, %p76
    %s79 = sadd.s32 %s78, 1
    %p82 = scmp.eq.s32.totalorder %s11, 1
    %p83 = scmp.ne.s32.totalorder %s78, %s80
    %p84 = scmp.eq.s32.totalorder %s11, 0
    %p85 = por %p83, %p84
    %p86 = scmp.ne.s32.totalorder %s78, %s80
    %p87 = scmp.eq.s32.totalorder %s16, 1
    %p88 = por %p86, %p87
    %p89 = scmp.ne.s32.totalorder %s80, %s81
    %p90 = scmp.eq.s32.totalorder %s16, 0
    %p91 = por %p89, %p90
    %p92 = scmp.ne.s32.totalorder %s80, %s81
    %p93 = scmp.eq.s32.totalorder %s17, 1
    %p94 = por %p92, %p93
    %p96 = scmp.ne.s32.totalorder %s81, %s95
    %p97 = scmp.eq.s32.totalorder %s17, 0
    %p98 = por %p96, %p97
    %s99 = ssub.s32 %s18, %s30
    %s100 = ssub.s32 %s19, %s26
    %s101 = sor.u32 %s99, %s100
    %p102 = scmp.eq.s32.totalorder %s101, 0
    %s104 = sadd.s32 %s103, 1
    %s105 = scalar_select %p102, %s103, %s104
    %p108 = pneg %p102
    %p109 = scmp.eq.s32.totalorder %s11, 1
    %p110 = por %p108, %p109
    %p111 = scmp.ne.s32.totalorder %s103, %s106
    %p112 = scmp.eq.s32.totalorder %s11, 0
    %p113 = por %p111, %p112
    %p114 = scmp.ne.s32.totalorder %s103, %s106
    %p115 = scmp.eq.s32.totalorder %s16, 1
    %p116 = por %p114, %p115
    %p117 = scmp.ne.s32.totalorder %s106, %s107
    %p118 = scmp.eq.s32.totalorder %s16, 0
    %p119 = por %p117, %p118
    %p120 = scmp.ne.s32.totalorder %s106, %s107
    %p121 = scmp.eq.s32.totalorder %s17, 1
    %p122 = por %p120, %p121
    %p124 = scmp.ne.s32.totalorder %s107, %s123
    %p125 = scmp.eq.s32.totalorder %s17, 0
    %p126 = por %p124, %p125
    %s127 = ssub.s32 %s18, %s30
    %s128 = ssub.s32 %s19, %s26
    %s129 = sor.u32 %s127, %s128
    %p130 = scmp.eq.s32.totalorder %s129, 0
    %s132 = sadd.s32 %s131, 1
    %s133 = scalar_select %p130, %s131, %s132
    %p136 = pneg %p130
    %p137 = scmp.eq.s32.totalorder %s11, 1
    %p138 = por %p136, %p137
    %p139 = scmp.ne.s32.totalorder %s131, %s134
    %p140 = scmp.eq.s32.totalorder %s11, 0
    %p141 = por %p139, %p140
    %p142 = scmp.ne.s32.totalorder %s131, %s134
    %p143 = scmp.eq.s32.totalorder %s16, 1
    %p144 = por %p142, %p143
    %p145 = scmp.ne.s32.totalorder %s134, %s135
    %p146 = scmp.eq.s32.totalorder %s16, 0
    %p147 = por %p145, %p146
    %p148 = scmp.ne.s32.totalorder %s134, %s135
    %p149 = scmp.eq.s32.totalorder %s17, 1
    %p150 = por %p148, %p149
    %p152 = scmp.ne.s32.totalorder %s135, %s151
    %p153 = scmp.eq.s32.totalorder %s17, 0
    %p154 = por %p152, %p153
    %p155 = scmp.le.s32.totalorder 1, %s11
    %p156 = scmp.lt.s32.totalorder %s11, 3
    %p157 = pnand %p155, %p156
    %p158 = pneg %p157
    // Predicated region
    $region9: #{feature_extractor.4} parent=5 // pred_check
      _
    $region10: #{feature_extractor.4} parent=5 // pred_check_branch
      %160 = sbr.rel (%p157) target = $region12
    $region11: #{feature_extractor.4} parent=5 // pred_region
      %s161 = ssub.s32 %s11, 1
      // Predicated region
      $region13: #{feature_extractor.4} parent=11 // pred_check
        %p162 = pneg %p70
      $region14: #{feature_extractor.4} parent=11 // pred_check_branch
        %164 = sbr.rel (%p162) target = $region16
      $region15: #{feature_extractor.4} parent=11 // pred_region
        _
      $region16: #{feature_extractor.4} parent=11 // pred_fallthru
        _
      // Predicated region
      $region17: #{feature_extractor.4} parent=11 // pred_check
        %p165 = pneg %p91
      $region18: #{feature_extractor.4} parent=11 // pred_check_branch
        %167 = sbr.rel (%p165) target = $region20
      $region19: #{feature_extractor.4} parent=11 // pred_region
        _
      $region20: #{feature_extractor.4} parent=11 // pred_fallthru
        _
    $region12: #{feature_extractor.4} parent=5 // pred_fallthru
      _
    %p168 = scmp.lt.s32.totalorder %s11, 2
    // Predicated region
    $region21: #{feature_extractor.4} parent=5 // pred_check
      %p169 = pneg %p168
    $region22: #{feature_extractor.4} parent=5 // pred_check_branch
      %171 = sbr.rel (%p169) target = $region24
    $region23: #{feature_extractor.4} parent=5 // pred_region
      // Predicated region
      $region25: #{feature_extractor.4} parent=23 // pred_check
        %p172 = pneg %p43
      $region26: #{feature_extractor.4} parent=23 // pred_check_branch
        %174 = sbr.rel (%p172) target = $region28
      $region27: #{feature_extractor.4} parent=23 // pred_region
        %p175 = scmp.lt.s32.totalorder %s18, 1
        %s176 = scalar_select %p175, %s18, 1
        %s177 = smul.addr %s176, 54
        %s178 = smul.addr %s177, 8
        %s179 = scalar_lea.vmem %s0, %s178
      $region28: #{feature_extractor.4} parent=23 // pred_fallthru
        _
    $region24: #{feature_extractor.4} parent=5 // pred_fallthru
      _
    %p180 = scmp.le.s32.totalorder 1, %s11
    %p181 = scmp.lt.s32.totalorder %s11, 3
    %p182 = pnand %p180, %p181
    %p183 = pneg %p182
    // Predicated region
    $region29: #{feature_extractor.4} parent=5 // pred_check
      _
    $region30: #{feature_extractor.4} parent=5 // pred_check_branch
      %185 = sbr.rel (%p182) target = $region32
    $region31: #{feature_extractor.4} parent=5 // pred_region
      %s186 = ssub.s32 %s11, 1
      %p187 = scmp.lt.s32.totalorder %s20, 1
      %s188 = scalar_select %p187, %s20, 1
      %s189 = smul.addr %s188, 54
      %s190 = smul.addr %s189, 8
      %s191 = scalar_lea.vmem %s0, %s190
      %p192 = pneg %p49
      %p193 = pneg %p46
      %p194 = pneg %p70
      %p195 = pneg %p67
      %p196 = pneg %p91
      %p197 = pneg %p88
      %p198 = pneg %p119
      %p199 = pneg %p116
      %s200 = smul.u32 32, %s21
      %p201 = scmp.lt.s32.totalorder %s20, 1
      %s202 = scalar_select %p201, %s20, 1
      %p203 = scmp.lt.s32.totalorder %s200, 31
      %s204 = scalar_select %p203, %s200, 31
      %s205 = smul.addr %s202, 32
      %s206 = sadd.s32 %s204, %s205
      %s207 = smul.addr %s206, 8
      %s208 = scalar_lea.vmem %s3, %s207
      %p209 = pneg %p147
      %p210 = pneg %p144
      %p211 = scmp.lt.s32.totalorder %s20, 1
      %s212 = scalar_select %p211, %s20, 1
      %p213 = scmp.lt.s32.totalorder %s21, 0
      %s214 = scalar_select %p213, %s21, 0
      %s215 = sadd.s32 %s214, %s212
      %s216 = smul.addr %s215, 2
      %s217 = scalar_lea.vmem %s4, %s216
      %p218 = scmp.lt.s32.totalorder %s20, 1
      %s219 = scalar_select %p218, %s20, 1
      %s220 = smul.addr %s219, 54
      %s221 = smul.addr %s220, 8
      %s222 = scalar_lea.vmem %s0, %s221
      %s223 = smul.u32 32, %s21
      %p224 = scmp.lt.s32.totalorder %s20, 1
      %s225 = scalar_select %p224, %s20, 1
      %p226 = scmp.lt.s32.totalorder %s223, 31
      %s227 = scalar_select %p226, %s223, 31
      %s228 = smul.addr %s225, 32
      %s229 = sadd.s32 %s227, %s228
      %s230 = smul.addr %s229, 8
      %s231 = scalar_lea.vmem %s3, %s230
      %s232 = smul.u32 32, %s21
      %p233 = scmp.lt.s32.totalorder %s20, 1
      %s234 = scalar_select %p233, %s20, 1
      %p235 = scmp.lt.s32.totalorder %s21, 0
      %s236 = scalar_select %p235, %s21, 0
      %s237 = sadd.s32 %s236, %s234
      %s238 = smul.addr %s237, 2
      %s239 = scalar_lea.vmem %s4, %s238
      %s240 = smul.u32 %s21, 16
      %s241 = smul.u32 %s240, 24
      %s242 = scalar_lea.vmem %s222, %s241
      %v243 = vld [vmem:[%s242] sm:$0xff]
      %v244 = vld [vmem:[%s242 + $0x8] sm:$0xff]
      %v245 = vld [vmem:[%s242 + $0x18] sm:$0xff]
      %v246 = vld [vmem:[%s242 + $0x20] sm:$0xff]
      %v247 = vld [vmem:[%s242 + $0x30] sm:$0xff]
      %v248 = vld [vmem:[%s242 + $0x38] sm:$0xff]
      %v249 = vld [vmem:[%s242 + $0x48] sm:$0xff]
      %v250 = vld [vmem:[%s242 + $0x50] sm:$0xff]
      %v251 = vld [vmem:[%s242 + $0x60] sm:$0xff]
      %v252 = vld [vmem:[%s242 + $0x68] sm:$0xff]
      %v253 = vld [vmem:[%s242 + $0x78] sm:$0xff]
      %v254 = vld [vmem:[%s242 + $0x80] sm:$0xff]
      %v255 = vld [vmem:[%s242 + $0x90] sm:$0xff]
      %v256 = vld [vmem:[%s242 + $0x98] sm:$0xff]
      %v257 = vld [vmem:[%s242 + $0xa8] sm:$0xff]
      %v258 = vld [vmem:[%s242 + $0xb0] sm:$0xff]
      %v259 = vld [vmem:[%s242 + $0xc0] sm:$0xff]
      %v260 = vld [vmem:[%s242 + $0xc8] sm:$0xff]
      %v261 = vld [vmem:[%s242 + $0xd8] sm:$0xff]
      %v262 = vld [vmem:[%s242 + $0xe0] sm:$0xff]
      %v263 = vld [vmem:[%s242 + $0xf0] sm:$0xff]
      %v264 = vld [vmem:[%s242 + $0xf8] sm:$0xff]
      %v265 = vld [vmem:[%s242 + $0x108] sm:$0xff]
      %v266 = vld [vmem:[%s242 + $0x110] sm:$0xff]
      %v267 = vld [vmem:[%s242 + $0x120] sm:$0xff]
      %v268 = vld [vmem:[%s242 + $0x128] sm:$0xff]
      %v269 = vld [vmem:[%s242 + $0x138] sm:$0xff]
      %v270 = vld [vmem:[%s242 + $0x140] sm:$0xff]
      %v271 = vld [vmem:[%s242 + $0x150] sm:$0xff]
      %v272 = vld [vmem:[%s242 + $0x158] sm:$0xff]
      %v273 = vld [vmem:[%s242 + $0x168] sm:$0xff]
      %v274 = vld [vmem:[%s242 + $0x170] sm:$0xff]
      %v275 = vld [vmem:[%s242 + $0x1] sm:$0xff]
      %v276 = vld [vmem:[%s242 + $0x9] sm:$0xff]
      %v277 = vld [vmem:[%s242 + $0x19] sm:$0xff]
      %v278 = vld [vmem:[%s242 + $0x21] sm:$0xff]
      %v279 = vld [vmem:[%s242 + $0x31] sm:$0xff]
      %v280 = vld [vmem:[%s242 + $0x39] sm:$0xff]
      %v281 = vld [vmem:[%s242 + $0x49] sm:$0xff]
      %v282 = vld [vmem:[%s242 + $0x51] sm:$0xff]
      %v283 = vld [vmem:[%s242 + $0x61] sm:$0xff]
      %v284 = vld [vmem:[%s242 + $0x69] sm:$0xff]
      %v285 = vld [vmem:[%s242 + $0x79] sm:$0xff]
      %v286 = vld [vmem:[%s242 + $0x81] sm:$0xff]
      %v287 = vld [vmem:[%s242 + $0x91] sm:$0xff]
      %v288 = vld [vmem:[%s242 + $0x99] sm:$0xff]
      %v289 = vld [vmem:[%s242 + $0xa9] sm:$0xff]
      %v290 = vld [vmem:[%s242 + $0xb1] sm:$0xff]
      %v291 = vld [vmem:[%s242 + $0xc1] sm:$0xff]
      %v292 = vld [vmem:[%s242 + $0xc9] sm:$0xff]
      %v293 = vld [vmem:[%s242 + $0xd9] sm:$0xff]
      %v294 = vld [vmem:[%s242 + $0xe1] sm:$0xff]
      %v295 = vld [vmem:[%s242 + $0xf1] sm:$0xff]
      %v296 = vld [vmem:[%s242 + $0xf9] sm:$0xff]
      %v297 = vld [vmem:[%s242 + $0x109] sm:$0xff]
      %v298 = vld [vmem:[%s242 + $0x111] sm:$0xff]
      %v299 = vld [vmem:[%s242 + $0x121] sm:$0xff]
      %v300 = vld [vmem:[%s242 + $0x129] sm:$0xff]
      %v301 = vld [vmem:[%s242 + $0x139] sm:$0xff]
      %v302 = vld [vmem:[%s242 + $0x141] sm:$0xff]
      %v303 = vld [vmem:[%s242 + $0x151] sm:$0xff]
      %v304 = vld [vmem:[%s242 + $0x159] sm:$0xff]
      %v305 = vld [vmem:[%s242 + $0x169] sm:$0xff]
      %v306 = vld [vmem:[%s242 + $0x171] sm:$0xff]
      %v307 = vld [vmem:[%s242 + $0x2] sm:$0xff]
      %v308 = vld [vmem:[%s242 + $0xa] sm:$0xff]
      %v309 = vld [vmem:[%s242 + $0x1a] sm:$0xff]
      %v310 = vld [vmem:[%s242 + $0x22] sm:$0xff]
      %v311 = vld [vmem:[%s242 + $0x32] sm:$0xff]
      %v312 = vld [vmem:[%s242 + $0x3a] sm:$0xff]
      %v313 = vld [vmem:[%s242 + $0x4a] sm:$0xff]
      %v314 = vld [vmem:[%s242 + $0x52] sm:$0xff]
      %v315 = vld [vmem:[%s242 + $0x62] sm:$0xff]
      %v316 = vld [vmem:[%s242 + $0x6a] sm:$0xff]
      %v317 = vld [vmem:[%s242 + $0x7a] sm:$0xff]
      %v318 = vld [vmem:[%s242 + $0x82] sm:$0xff]
      %v319 = vld [vmem:[%s242 + $0x92] sm:$0xff]
      %v320 = vld [vmem:[%s242 + $0x9a] sm:$0xff]
      %v321 = vld [vmem:[%s242 + $0xaa] sm:$0xff]
      %v322 = vld [vmem:[%s242 + $0xb2] sm:$0xff]
      %v323 = vld [vmem:[%s242 + $0xc2] sm:$0xff]
      %v324 = vld [vmem:[%s242 + $0xca] sm:$0xff]
      %v325 = vld [vmem:[%s242 + $0xda] sm:$0xff]
      %v326 = vld [vmem:[%s242 + $0xe2] sm:$0xff]
      %v327 = vld [vmem:[%s242 + $0xf2] sm:$0xff]
      %v328 = vld [vmem:[%s242 + $0xfa] sm:$0xff]
      %v329 = vld [vmem:[%s242 + $0x10a] sm:$0xff]
      %v330 = vld [vmem:[%s242 + $0x112] sm:$0xff]
      %v331 = vld [vmem:[%s242 + $0x122] sm:$0xff]
      %v332 = vld [vmem:[%s242 + $0x12a] sm:$0xff]
      %v333 = vld [vmem:[%s242 + $0x13a] sm:$0xff]
      %v334 = vld [vmem:[%s242 + $0x142] sm:$0xff]
      %v335 = vld [vmem:[%s242 + $0x152] sm:$0xff]
      %v336 = vld [vmem:[%s242 + $0x15a] sm:$0xff]
      %v337 = vld [vmem:[%s242 + $0x16a] sm:$0xff]
      %v338 = vld [vmem:[%s242 + $0x172] sm:$0xff]
      %s339 = sadd.s32 %s240, 1
      %s340 = smul.u32 %s339, 24
      %s341 = scalar_lea.vmem %s222, %s340
      %v342 = vld [vmem:[%s341] sm:$0xff]
      %v343 = vld [vmem:[%s341 + $0x8] sm:$0xff]
      %v344 = vld [vmem:[%s341 + $0x18] sm:$0xff]
      %v345 = vld [vmem:[%s341 + $0x20] sm:$0xff]
      %v346 = vld [vmem:[%s341 + $0x30] sm:$0xff]
      %v347 = vld [vmem:[%s341 + $0x38] sm:$0xff]
      %v348 = vld [vmem:[%s341 + $0x48] sm:$0xff]
      %v349 = vld [vmem:[%s341 + $0x50] sm:$0xff]
      %v350 = vld [vmem:[%s341 + $0x60] sm:$0xff]
      %v351 = vld [vmem:[%s341 + $0x68] sm:$0xff]
      %v352 = vld [vmem:[%s341 + $0x78] sm:$0xff]
      %v353 = vld [vmem:[%s341 + $0x80] sm:$0xff]
      %v354 = vld [vmem:[%s341 + $0x90] sm:$0xff]
      %v355 = vld [vmem:[%s341 + $0x98] sm:$0xff]
      %v356 = vld [vmem:[%s341 + $0xa8] sm:$0xff]
      %v357 = vld [vmem:[%s341 + $0xb0] sm:$0xff]
      %v358 = vld [vmem:[%s341 + $0xc0] sm:$0xff]
      %v359 = vld [vmem:[%s341 + $0xc8] sm:$0xff]
      %v360 = vld [vmem:[%s341 + $0xd8] sm:$0xff]
      %v361 = vld [vmem:[%s341 + $0xe0] sm:$0xff]
      %v362 = vld [vmem:[%s341 + $0xf0] sm:$0xff]
      %v363 = vld [vmem:[%s341 + $0xf8] sm:$0xff]
      %v364 = vld [vmem:[%s341 + $0x108] sm:$0xff]
      %v365 = vld [vmem:[%s341 + $0x110] sm:$0xff]
      %v366 = vld [vmem:[%s341 + $0x120] sm:$0xff]
      %v367 = vld [vmem:[%s341 + $0x128] sm:$0xff]
      %v368 = vld [vmem:[%s341 + $0x138] sm:$0xff]
      %v369 = vld [vmem:[%s341 + $0x140] sm:$0xff]
      %v370 = vld [vmem:[%s341 + $0x150] sm:$0xff]
      %v371 = vld [vmem:[%s341 + $0x158] sm:$0xff]
      %v372 = vld [vmem:[%s341 + $0x168] sm:$0xff]
      %v373 = vld [vmem:[%s341 + $0x170] sm:$0xff]
      %v374 = vld [vmem:[%s341 + $0x1] sm:$0xff]
      %v375 = vld [vmem:[%s341 + $0x9] sm:$0xff]
      %v376 = vld [vmem:[%s341 + $0x19] sm:$0xff]
      %v377 = vld [vmem:[%s341 + $0x21] sm:$0xff]
      %v378 = vld [vmem:[%s341 + $0x31] sm:$0xff]
      %v379 = vld [vmem:[%s341 + $0x39] sm:$0xff]
      %v380 = vld [vmem:[%s341 + $0x49] sm:$0xff]
      %v381 = vld [vmem:[%s341 + $0x51] sm:$0xff]
      %v382 = vld [vmem:[%s341 + $0x61] sm:$0xff]
      %v383 = vld [vmem:[%s341 + $0x69] sm:$0xff]
      %v384 = vld [vmem:[%s341 + $0x79] sm:$0xff]
      %v385 = vld [vmem:[%s341 + $0x81] sm:$0xff]
      %v386 = vld [vmem:[%s341 + $0x91] sm:$0xff]
      %v387 = vld [vmem:[%s341 + $0x99] sm:$0xff]
      %v388 = vld [vmem:[%s341 + $0xa9] sm:$0xff]
      %v389 = vld [vmem:[%s341 + $0xb1] sm:$0xff]
      %v390 = vld [vmem:[%s341 + $0xc1] sm:$0xff]
      %v391 = vld [vmem:[%s341 + $0xc9] sm:$0xff]
      %v392 = vld [vmem:[%s341 + $0xd9] sm:$0xff]
      %v393 = vld [vmem:[%s341 + $0xe1] sm:$0xff]
      %v394 = vld [vmem:[%s341 + $0xf1] sm:$0xff]
      %v395 = vld [vmem:[%s341 + $0xf9] sm:$0xff]
      %v396 = vld [vmem:[%s341 + $0x109] sm:$0xff]
      %v397 = vld [vmem:[%s341 + $0x111] sm:$0xff]
      %v398 = vld [vmem:[%s341 + $0x121] sm:$0xff]
      %v399 = vld [vmem:[%s341 + $0x129] sm:$0xff]
      %v400 = vld [vmem:[%s341 + $0x139] sm:$0xff]
      %v401 = vld [vmem:[%s341 + $0x141] sm:$0xff]
      %v402 = vld [vmem:[%s341 + $0x151] sm:$0xff]
      %v403 = vld [vmem:[%s341 + $0x159] sm:$0xff]
      %v404 = vld [vmem:[%s341 + $0x169] sm:$0xff]
      %v405 = vld [vmem:[%s341 + $0x171] sm:$0xff]
      %v406 = vld [vmem:[%s341 + $0x2] sm:$0xff]
      %v407 = vld [vmem:[%s341 + $0xa] sm:$0xff]
      %v408 = vld [vmem:[%s341 + $0x1a] sm:$0xff]
      %v409 = vld [vmem:[%s341 + $0x22] sm:$0xff]
      %v410 = vld [vmem:[%s341 + $0x32] sm:$0xff]
      %v411 = vld [vmem:[%s341 + $0x3a] sm:$0xff]
      %v412 = vld [vmem:[%s341 + $0x4a] sm:$0xff]
      %v413 = vld [vmem:[%s341 + $0x52] sm:$0xff]
      %v414 = vld [vmem:[%s341 + $0x62] sm:$0xff]
      %v415 = vld [vmem:[%s341 + $0x6a] sm:$0xff]
      %v416 = vld [vmem:[%s341 + $0x7a] sm:$0xff]
      %v417 = vld [vmem:[%s341 + $0x82] sm:$0xff]
      %v418 = vld [vmem:[%s341 + $0x92] sm:$0xff]
      %v419 = vld [vmem:[%s341 + $0x9a] sm:$0xff]
      %v420 = vld [vmem:[%s341 + $0xaa] sm:$0xff]
      %v421 = vld [vmem:[%s341 + $0xb2] sm:$0xff]
      %v422 = vld [vmem:[%s341 + $0xc2] sm:$0xff]
      %v423 = vld [vmem:[%s341 + $0xca] sm:$0xff]
      %v424 = vld [vmem:[%s341 + $0xda] sm:$0xff]
      %v425 = vld [vmem:[%s341 + $0xe2] sm:$0xff]
      %v426 = vld [vmem:[%s341 + $0xf2] sm:$0xff]
      %v427 = vld [vmem:[%s341 + $0xfa] sm:$0xff]
      %v428 = vld [vmem:[%s341 + $0x10a] sm:$0xff]
      %v429 = vld [vmem:[%s341 + $0x112] sm:$0xff]
      %v430 = vld [vmem:[%s341 + $0x122] sm:$0xff]
      %v431 = vld [vmem:[%s341 + $0x12a] sm:$0xff]
      %v432 = vld [vmem:[%s341 + $0x13a] sm:$0xff]
      %v433 = vld [vmem:[%s341 + $0x142] sm:$0xff]
      %v434 = vld [vmem:[%s341 + $0x152] sm:$0xff]
      %v435 = vld [vmem:[%s341 + $0x15a] sm:$0xff]
      %v436 = vld [vmem:[%s341 + $0x16a] sm:$0xff]
      %v437 = vld [vmem:[%s341 + $0x172] sm:$0xff]
      %s438 = sadd.s32 %s240, 2
      %s439 = smul.u32 %s438, 24
      %s440 = scalar_lea.vmem %s222, %s439
      %v441 = vld [vmem:[%s440] sm:$0xff]
      %v442 = vld [vmem:[%s440 + $0x8] sm:$0xff]
      %v443 = vld [vmem:[%s440 + $0x18] sm:$0xff]
      %v444 = vld [vmem:[%s440 + $0x20] sm:$0xff]
      %v445 = vld [vmem:[%s440 + $0x30] sm:$0xff]
      %v446 = vld [vmem:[%s440 + $0x38] sm:$0xff]
      %v447 = vld [vmem:[%s440 + $0x48] sm:$0xff]
      %v448 = vld [vmem:[%s440 + $0x50] sm:$0xff]
      %v449 = vld [vmem:[%s440 + $0x60] sm:$0xff]
      %v450 = vld [vmem:[%s440 + $0x68] sm:$0xff]
      %v451 = vld [vmem:[%s440 + $0x78] sm:$0xff]
      %v452 = vld [vmem:[%s440 + $0x80] sm:$0xff]
      %v453 = vld [vmem:[%s440 + $0x90] sm:$0xff]
      %v454 = vld [vmem:[%s440 + $0x98] sm:$0xff]
      %v455 = vld [vmem:[%s440 + $0xa8] sm:$0xff]
      %v456 = vld [vmem:[%s440 + $0xb0] sm:$0xff]
      %v457 = vld [vmem:[%s440 + $0xc0] sm:$0xff]
      %v458 = vld [vmem:[%s440 + $0xc8] sm:$0xff]
      %v459 = vld [vmem:[%s440 + $0xd8] sm:$0xff]
      %v460 = vld [vmem:[%s440 + $0xe0] sm:$0xff]
      %v461 = vld [vmem:[%s440 + $0xf0] sm:$0xff]
      %v462 = vld [vmem:[%s440 + $0xf8] sm:$0xff]
      %v463 = vld [vmem:[%s440 + $0x108] sm:$0xff]
      %v464 = vld [vmem:[%s440 + $0x110] sm:$0xff]
      %v465 = vld [vmem:[%s440 + $0x120] sm:$0xff]
      %v466 = vld [vmem:[%s440 + $0x128] sm:$0xff]
      %v467 = vld [vmem:[%s440 + $0x138] sm:$0xff]
      %v468 = vld [vmem:[%s440 + $0x140] sm:$0xff]
      %v469 = vld [vmem:[%s440 + $0x150] sm:$0xff]
      %v470 = vld [vmem:[%s440 + $0x158] sm:$0xff]
      %v471 = vld [vmem:[%s440 + $0x168] sm:$0xff]
      %v472 = vld [vmem:[%s440 + $0x170] sm:$0xff]
      %v473 = vld [vmem:[%s440 + $0x1] sm:$0xff]
      %v474 = vld [vmem:[%s440 + $0x9] sm:$0xff]
      %v475 = vld [vmem:[%s440 + $0x19] sm:$0xff]
      %v476 = vld [vmem:[%s440 + $0x21] sm:$0xff]
      %v477 = vld [vmem:[%s440 + $0x31] sm:$0xff]
      %v478 = vld [vmem:[%s440 + $0x39] sm:$0xff]
      %v479 = vld [vmem:[%s440 + $0x49] sm:$0xff]
      %v480 = vld [vmem:[%s440 + $0x51] sm:$0xff]
      %v481 = vld [vmem:[%s440 + $0x61] sm:$0xff]
      %v482 = vld [vmem:[%s440 + $0x69] sm:$0xff]
      %v483 = vld [vmem:[%s440 + $0x79] sm:$0xff]
      %v484 = vld [vmem:[%s440 + $0x81] sm:$0xff]
      %v485 = vld [vmem:[%s440 + $0x91] sm:$0xff]
      %v486 = vld [vmem:[%s440 + $0x99] sm:$0xff]
      %v487 = vld [vmem:[%s440 + $0xa9] sm:$0xff]
      %v488 = vld [vmem:[%s440 + $0xb1] sm:$0xff]
      %v489 = vld [vmem:[%s440 + $0xc1] sm:$0xff]
      %v490 = vld [vmem:[%s440 + $0xc9] sm:$0xff]
      %v491 = vld [vmem:[%s440 + $0xd9] sm:$0xff]
      %v492 = vld [vmem:[%s440 + $0xe1] sm:$0xff]
      %v493 = vld [vmem:[%s440 + $0xf1] sm:$0xff]
      %v494 = vld [vmem:[%s440 + $0xf9] sm:$0xff]
      %v495 = vld [vmem:[%s440 + $0x109] sm:$0xff]
      %v496 = vld [vmem:[%s440 + $0x111] sm:$0xff]
      %v497 = vld [vmem:[%s440 + $0x121] sm:$0xff]
      %v498 = vld [vmem:[%s440 + $0x129] sm:$0xff]
      %v499 = vld [vmem:[%s440 + $0x139] sm:$0xff]
      %v500 = vld [vmem:[%s440 + $0x141] sm:$0xff]
      %v501 = vld [vmem:[%s440 + $0x151] sm:$0xff]
      %v502 = vld [vmem:[%s440 + $0x159] sm:$0xff]
      %v503 = vld [vmem:[%s440 + $0x169] sm:$0xff]
      %v504 = vld [vmem:[%s440 + $0x171] sm:$0xff]
      %v505 = vld [vmem:[%s440 + $0x2] sm:$0xff]
      %v506 = vld [vmem:[%s440 + $0xa] sm:$0xff]
      %v507 = vld [vmem:[%s440 + $0x1a] sm:$0xff]
      %v508 = vld [vmem:[%s440 + $0x22] sm:$0xff]
      %v509 = vld [vmem:[%s440 + $0x32] sm:$0xff]
      %v510 = vld [vmem:[%s440 + $0x3a] sm:$0xff]
      %v511 = vld [vmem:[%s440 + $0x4a] sm:$0xff]
      %v512 = vld [vmem:[%s440 + $0x52] sm:$0xff]
      %v513 = vld [vmem:[%s440 + $0x62] sm:$0xff]
      %v514 = vld [vmem:[%s440 + $0x6a] sm:$0xff]
      %v515 = vld [vmem:[%s440 + $0x7a] sm:$0xff]
      %v516 = vld [vmem:[%s440 + $0x82] sm:$0xff]
      %v517 = vld [vmem:[%s440 + $0x92] sm:$0xff]
      %v518 = vld [vmem:[%s440 + $0x9a] sm:$0xff]
      %v519 = vld [vmem:[%s440 + $0xaa] sm:$0xff]
      %v520 = vld [vmem:[%s440 + $0xb2] sm:$0xff]
      %v521 = vld [vmem:[%s440 + $0xc2] sm:$0xff]
      %v522 = vld [vmem:[%s440 + $0xca] sm:$0xff]
      %v523 = vld [vmem:[%s440 + $0xda] sm:$0xff]
      %v524 = vld [vmem:[%s440 + $0xe2] sm:$0xff]
      %v525 = vld [vmem:[%s440 + $0xf2] sm:$0xff]
      %v526 = vld [vmem:[%s440 + $0xfa] sm:$0xff]
      %v527 = vld [vmem:[%s440 + $0x10a] sm:$0xff]
      %v528 = vld [vmem:[%s440 + $0x112] sm:$0xff]
      %v529 = vld [vmem:[%s440 + $0x122] sm:$0xff]
      %v530 = vld [vmem:[%s440 + $0x12a] sm:$0xff]
      %v531 = vld [vmem:[%s440 + $0x13a] sm:$0xff]
      %v532 = vld [vmem:[%s440 + $0x142] sm:$0xff]
      %v533 = vld [vmem:[%s440 + $0x152] sm:$0xff]
      %v534 = vld [vmem:[%s440 + $0x15a] sm:$0xff]
      %v535 = vld [vmem:[%s440 + $0x16a] sm:$0xff]
      %v536 = vld [vmem:[%s440 + $0x172] sm:$0xff]
      %569 = vrot.lane.b32.xlu0 %v275, 4
      %v570 = vpop.permute.xlu0 %569
      %571 = vrot.lane.b32.xlu0 %v276, 4
      %v572 = vpop.permute.xlu0 %571
      %573 = vrot.lane.b32.xlu0 %v277, 4
      %v574 = vpop.permute.xlu0 %573
      %575 = vrot.lane.b32.xlu0 %v278, 4
      %v576 = vpop.permute.xlu0 %575
      %577 = vrot.lane.b32.xlu0 %v279, 4
      %v578 = vpop.permute.xlu0 %577
      %579 = vrot.lane.b32.xlu0 %v280, 4
      %v580 = vpop.permute.xlu0 %579
      %581 = vrot.lane.b32.xlu0 %v281, 4
      %v582 = vpop.permute.xlu0 %581
      %583 = vrot.lane.b32.xlu0 %v282, 4
      %v584 = vpop.permute.xlu0 %583
      %585 = vrot.lane.b32.xlu0 %v283, 4
      %v586 = vpop.permute.xlu0 %585
      %587 = vrot.lane.b32.xlu0 %v284, 4
      %v588 = vpop.permute.xlu0 %587
      %589 = vrot.lane.b32.xlu0 %v285, 4
      %v590 = vpop.permute.xlu0 %589
      %591 = vrot.lane.b32.xlu0 %v286, 4
      %v592 = vpop.permute.xlu0 %591
      %593 = vrot.lane.b32.xlu0 %v287, 4
      %v594 = vpop.permute.xlu0 %593
      %595 = vrot.lane.b32.xlu0 %v288, 4
      %v596 = vpop.permute.xlu0 %595
      %597 = vrot.lane.b32.xlu0 %v289, 4
      %v598 = vpop.permute.xlu0 %597
      %599 = vrot.lane.b32.xlu0 %v290, 4
      %v600 = vpop.permute.xlu0 %599
      %601 = vrot.lane.b32.xlu0 %v291, 4
      %v602 = vpop.permute.xlu0 %601
      %603 = vrot.lane.b32.xlu0 %v292, 4
      %v604 = vpop.permute.xlu0 %603
      %605 = vrot.lane.b32.xlu0 %v293, 4
      %v606 = vpop.permute.xlu0 %605
      %607 = vrot.lane.b32.xlu0 %v294, 4
      %v608 = vpop.permute.xlu0 %607
      %609 = vrot.lane.b32.xlu0 %v295, 4
      %v610 = vpop.permute.xlu0 %609
      %611 = vrot.lane.b32.xlu0 %v296, 4
      %v612 = vpop.permute.xlu0 %611
      %613 = vrot.lane.b32.xlu0 %v297, 4
      %v614 = vpop.permute.xlu0 %613
      %615 = vrot.lane.b32.xlu0 %v298, 4
      %v616 = vpop.permute.xlu0 %615
      %617 = vrot.lane.b32.xlu0 %v299, 4
      %v618 = vpop.permute.xlu0 %617
      %619 = vrot.lane.b32.xlu0 %v300, 4
      %v620 = vpop.permute.xlu0 %619
      %621 = vrot.lane.b32.xlu0 %v301, 4
      %v622 = vpop.permute.xlu0 %621
      %623 = vrot.lane.b32.xlu0 %v302, 4
      %v624 = vpop.permute.xlu0 %623
      %625 = vrot.lane.b32.xlu0 %v303, 4
      %v626 = vpop.permute.xlu0 %625
      %627 = vrot.lane.b32.xlu0 %v304, 4
      %v628 = vpop.permute.xlu0 %627
      %629 = vrot.lane.b32.xlu0 %v305, 4
      %v630 = vpop.permute.xlu0 %629
      %631 = vrot.lane.b32.xlu0 %v306, 4
      %v632 = vpop.permute.xlu0 %631
      %697 = vrot.lane.b32.xlu0 %v307, 8
      %v698 = vpop.permute.xlu0 %697
      %699 = vrot.lane.b32.xlu0 %v308, 8
      %v700 = vpop.permute.xlu0 %699
      %701 = vrot.lane.b32.xlu0 %v309, 8
      %v702 = vpop.permute.xlu0 %701
      %703 = vrot.lane.b32.xlu0 %v310, 8
      %v704 = vpop.permute.xlu0 %703
      %705 = vrot.lane.b32.xlu0 %v311, 8
      %v706 = vpop.permute.xlu0 %705
      %707 = vrot.lane.b32.xlu0 %v312, 8
      %v708 = vpop.permute.xlu0 %707
      %709 = vrot.lane.b32.xlu0 %v313, 8
      %v710 = vpop.permute.xlu0 %709
      %711 = vrot.lane.b32.xlu0 %v314, 8
      %v712 = vpop.permute.xlu0 %711
      %713 = vrot.lane.b32.xlu0 %v315, 8
      %v714 = vpop.permute.xlu0 %713
      %715 = vrot.lane.b32.xlu0 %v316, 8
      %v716 = vpop.permute.xlu0 %715
      %717 = vrot.lane.b32.xlu0 %v317, 8
      %v718 = vpop.permute.xlu0 %717
      %719 = vrot.lane.b32.xlu0 %v318, 8
      %v720 = vpop.permute.xlu0 %719
      %721 = vrot.lane.b32.xlu0 %v319, 8
      %v722 = vpop.permute.xlu0 %721
      %723 = vrot.lane.b32.xlu0 %v320, 8
      %v724 = vpop.permute.xlu0 %723
      %725 = vrot.lane.b32.xlu0 %v321, 8
      %v726 = vpop.permute.xlu0 %725
      %727 = vrot.lane.b32.xlu0 %v322, 8
      %v728 = vpop.permute.xlu0 %727
      %729 = vrot.lane.b32.xlu0 %v323, 8
      %v730 = vpop.permute.xlu0 %729
      %731 = vrot.lane.b32.xlu0 %v324, 8
      %v732 = vpop.permute.xlu0 %731
      %733 = vrot.lane.b32.xlu0 %v325, 8
      %v734 = vpop.permute.xlu0 %733
      %735 = vrot.lane.b32.xlu0 %v326, 8
      %v736 = vpop.permute.xlu0 %735
      %737 = vrot.lane.b32.xlu0 %v327, 8
      %v738 = vpop.permute.xlu0 %737
      %739 = vrot.lane.b32.xlu0 %v328, 8
      %v740 = vpop.permute.xlu0 %739
      %741 = vrot.lane.b32.xlu0 %v329, 8
      %v742 = vpop.permute.xlu0 %741
      %743 = vrot.lane.b32.xlu0 %v330, 8
      %v744 = vpop.permute.xlu0 %743
      %745 = vrot.lane.b32.xlu0 %v331, 8
      %v746 = vpop.permute.xlu0 %745
      %747 = vrot.lane.b32.xlu0 %v332, 8
      %v748 = vpop.permute.xlu0 %747
      %749 = vrot.lane.b32.xlu0 %v333, 8
      %v750 = vpop.permute.xlu0 %749
      %751 = vrot.lane.b32.xlu0 %v334, 8
      %v752 = vpop.permute.xlu0 %751
      %753 = vrot.lane.b32.xlu0 %v335, 8
      %v754 = vpop.permute.xlu0 %753
      %755 = vrot.lane.b32.xlu0 %v336, 8
      %v756 = vpop.permute.xlu0 %755
      %757 = vrot.lane.b32.xlu0 %v337, 8
      %v758 = vpop.permute.xlu0 %757
      %759 = vrot.lane.b32.xlu0 %v338, 8
      %v760 = vpop.permute.xlu0 %759
      %825 = vrot.lane.b32.xlu0 %v342, 12
      %v826 = vpop.permute.xlu0 %825
      %827 = vrot.lane.b32.xlu0 %v343, 12
      %v828 = vpop.permute.xlu0 %827
      %829 = vrot.lane.b32.xlu0 %v344, 12
      %v830 = vpop.permute.xlu0 %829
      %831 = vrot.lane.b32.xlu0 %v345, 12
      %v832 = vpop.permute.xlu0 %831
      %833 = vrot.lane.b32.xlu0 %v346, 12
      %v834 = vpop.permute.xlu0 %833
      %835 = vrot.lane.b32.xlu0 %v347, 12
      %v836 = vpop.permute.xlu0 %835
      %837 = vrot.lane.b32.xlu0 %v348, 12
      %v838 = vpop.permute.xlu0 %837
      %839 = vrot.lane.b32.xlu0 %v349, 12
      %v840 = vpop.permute.xlu0 %839
      %841 = vrot.lane.b32.xlu0 %v350, 12
      %v842 = vpop.permute.xlu0 %841
      %843 = vrot.lane.b32.xlu0 %v351, 12
      %v844 = vpop.permute.xlu0 %843
      %845 = vrot.lane.b32.xlu0 %v352, 12
      %v846 = vpop.permute.xlu0 %845
      %847 = vrot.lane.b32.xlu0 %v353, 12
      %v848 = vpop.permute.xlu0 %847
      %849 = vrot.lane.b32.xlu0 %v354, 12
      %v850 = vpop.permute.xlu0 %849
      %851 = vrot.lane.b32.xlu0 %v355, 12
      %v852 = vpop.permute.xlu0 %851
      %853 = vrot.lane.b32.xlu0 %v356, 12
      %v854 = vpop.permute.xlu0 %853
      %855 = vrot.lane.b32.xlu0 %v357, 12
      %v856 = vpop.permute.xlu0 %855
      %857 = vrot.lane.b32.xlu0 %v358, 12
      %v858 = vpop.permute.xlu0 %857
      %859 = vrot.lane.b32.xlu0 %v359, 12
      %v860 = vpop.permute.xlu0 %859
      %861 = vrot.lane.b32.xlu0 %v360, 12
      %v862 = vpop.permute.xlu0 %861
      %863 = vrot.lane.b32.xlu0 %v361, 12
      %v864 = vpop.permute.xlu0 %863
      %865 = vrot.lane.b32.xlu0 %v362, 12
      %v866 = vpop.permute.xlu0 %865
      %867 = vrot.lane.b32.xlu0 %v363, 12
      %v868 = vpop.permute.xlu0 %867
      %869 = vrot.lane.b32.xlu0 %v364, 12
      %v870 = vpop.permute.xlu0 %869
      %871 = vrot.lane.b32.xlu0 %v365, 12
      %v872 = vpop.permute.xlu0 %871
      %873 = vrot.lane.b32.xlu0 %v366, 12
      %v874 = vpop.permute.xlu0 %873
      %875 = vrot.lane.b32.xlu0 %v367, 12
      %v876 = vpop.permute.xlu0 %875
      %877 = vrot.lane.b32.xlu0 %v368, 12
      %v878 = vpop.permute.xlu0 %877
      %879 = vrot.lane.b32.xlu0 %v369, 12
      %v880 = vpop.permute.xlu0 %879
      %881 = vrot.lane.b32.xlu0 %v370, 12
      %v882 = vpop.permute.xlu0 %881
      %883 = vrot.lane.b32.xlu0 %v371, 12
      %v884 = vpop.permute.xlu0 %883
      %885 = vrot.lane.b32.xlu0 %v372, 12
      %v886 = vpop.permute.xlu0 %885
      %887 = vrot.lane.b32.xlu0 %v373, 12
      %v888 = vpop.permute.xlu0 %887
      %953 = vrot.lane.b32.xlu0 %v374, 16
      %v954 = vpop.permute.xlu0 %953
      %955 = vrot.lane.b32.xlu0 %v375, 16
      %v956 = vpop.permute.xlu0 %955
      %957 = vrot.lane.b32.xlu0 %v376, 16
      %v958 = vpop.permute.xlu0 %957
      %959 = vrot.lane.b32.xlu0 %v377, 16
      %v960 = vpop.permute.xlu0 %959
      %961 = vrot.lane.b32.xlu0 %v378, 16
      %v962 = vpop.permute.xlu0 %961
      %963 = vrot.lane.b32.xlu0 %v379, 16
      %v964 = vpop.permute.xlu0 %963
      %965 = vrot.lane.b32.xlu0 %v380, 16
      %v966 = vpop.permute.xlu0 %965
      %967 = vrot.lane.b32.xlu0 %v381, 16
      %v968 = vpop.permute.xlu0 %967
      %969 = vrot.lane.b32.xlu0 %v382, 16
      %v970 = vpop.permute.xlu0 %969
      %971 = vrot.lane.b32.xlu0 %v383, 16
      %v972 = vpop.permute.xlu0 %971
      %973 = vrot.lane.b32.xlu0 %v384, 16
      %v974 = vpop.permute.xlu0 %973
      %975 = vrot.lane.b32.xlu0 %v385, 16
      %v976 = vpop.permute.xlu0 %975
      %977 = vrot.lane.b32.xlu0 %v386, 16
      %v978 = vpop.permute.xlu0 %977
      %979 = vrot.lane.b32.xlu0 %v387, 16
      %v980 = vpop.permute.xlu0 %979
      %981 = vrot.lane.b32.xlu0 %v388, 16
      %v982 = vpop.permute.xlu0 %981
      %983 = vrot.lane.b32.xlu0 %v389, 16
      %v984 = vpop.permute.xlu0 %983
      %985 = vrot.lane.b32.xlu0 %v390, 16
      %v986 = vpop.permute.xlu0 %985
      %987 = vrot.lane.b32.xlu0 %v391, 16
      %v988 = vpop.permute.xlu0 %987
      %989 = vrot.lane.b32.xlu0 %v392, 16
      %v990 = vpop.permute.xlu0 %989
      %991 = vrot.lane.b32.xlu0 %v393, 16
      %v992 = vpop.permute.xlu0 %991
      %993 = vrot.lane.b32.xlu0 %v394, 16
      %v994 = vpop.permute.xlu0 %993
      %995 = vrot.lane.b32.xlu0 %v395, 16
      %v996 = vpop.permute.xlu0 %995
      %997 = vrot.lane.b32.xlu0 %v396, 16
      %v998 = vpop.permute.xlu0 %997
      %999 = vrot.lane.b32.xlu0 %v397, 16
      %v1000 = vpop.permute.xlu0 %999
      %1001 = vrot.lane.b32.xlu0 %v398, 16
      %v1002 = vpop.permute.xlu0 %1001
      %1003 = vrot.lane.b32.xlu0 %v399, 16
      %v1004 = vpop.permute.xlu0 %1003
      %1005 = vrot.lane.b32.xlu0 %v400, 16
      %v1006 = vpop.permute.xlu0 %1005
      %1007 = vrot.lane.b32.xlu0 %v401, 16
      %v1008 = vpop.permute.xlu0 %1007
      %1009 = vrot.lane.b32.xlu0 %v402, 16
      %v1010 = vpop.permute.xlu0 %1009
      %1011 = vrot.lane.b32.xlu0 %v403, 16
      %v1012 = vpop.permute.xlu0 %1011
      %1013 = vrot.lane.b32.xlu0 %v404, 16
      %v1014 = vpop.permute.xlu0 %1013
      %1015 = vrot.lane.b32.xlu0 %v405, 16
      %v1016 = vpop.permute.xlu0 %1015
      %1081 = vrot.lane.b32.xlu0 %v406, 20
      %v1082 = vpop.permute.xlu0 %1081
      %1083 = vrot.lane.b32.xlu0 %v407, 20
      %v1084 = vpop.permute.xlu0 %1083
      %1085 = vrot.lane.b32.xlu0 %v408, 20
      %v1086 = vpop.permute.xlu0 %1085
      %1087 = vrot.lane.b32.xlu0 %v409, 20
      %v1088 = vpop.permute.xlu0 %1087
      %1089 = vrot.lane.b32.xlu0 %v410, 20
      %v1090 = vpop.permute.xlu0 %1089
      %1091 = vrot.lane.b32.xlu0 %v411, 20
      %v1092 = vpop.permute.xlu0 %1091
      %1093 = vrot.lane.b32.xlu0 %v412, 20
      %v1094 = vpop.permute.xlu0 %1093
      %1095 = vrot.lane.b32.xlu0 %v413, 20
      %v1096 = vpop.permute.xlu0 %1095
      %1097 = vrot.lane.b32.xlu0 %v414, 20
      %v1098 = vpop.permute.xlu0 %1097
      %1099 = vrot.lane.b32.xlu0 %v415, 20
      %v1100 = vpop.permute.xlu0 %1099
      %1101 = vrot.lane.b32.xlu0 %v416, 20
      %v1102 = vpop.permute.xlu0 %1101
      %1103 = vrot.lane.b32.xlu0 %v417, 20
      %v1104 = vpop.permute.xlu0 %1103
      %1105 = vrot.lane.b32.xlu0 %v418, 20
      %v1106 = vpop.permute.xlu0 %1105
      %1107 = vrot.lane.b32.xlu0 %v419, 20
      %v1108 = vpop.permute.xlu0 %1107
      %1109 = vrot.lane.b32.xlu0 %v420, 20
      %v1110 = vpop.permute.xlu0 %1109
      %1111 = vrot.lane.b32.xlu0 %v421, 20
      %v1112 = vpop.permute.xlu0 %1111
      %1113 = vrot.lane.b32.xlu0 %v422, 20
      %v1114 = vpop.permute.xlu0 %1113
      %1115 = vrot.lane.b32.xlu0 %v423, 20
      %v1116 = vpop.permute.xlu0 %1115
      %1117 = vrot.lane.b32.xlu0 %v424, 20
      %v1118 = vpop.permute.xlu0 %1117
      %1119 = vrot.lane.b32.xlu0 %v425, 20
      %v1120 = vpop.permute.xlu0 %1119
      %1121 = vrot.lane.b32.xlu0 %v426, 20
      %v1122 = vpop.permute.xlu0 %1121
      %1123 = vrot.lane.b32.xlu0 %v427, 20
      %v1124 = vpop.permute.xlu0 %1123
      %1125 = vrot.lane.b32.xlu0 %v428, 20
      %v1126 = vpop.permute.xlu0 %1125
      %1127 = vrot.lane.b32.xlu0 %v429, 20
      %v1128 = vpop.permute.xlu0 %1127
      %1129 = vrot.lane.b32.xlu0 %v430, 20
      %v1130 = vpop.permute.xlu0 %1129
      %1131 = vrot.lane.b32.xlu0 %v431, 20
      %v1132 = vpop.permute.xlu0 %1131
      %1133 = vrot.lane.b32.xlu0 %v432, 20
      %v1134 = vpop.permute.xlu0 %1133
      %1135 = vrot.lane.b32.xlu0 %v433, 20
      %v1136 = vpop.permute.xlu0 %1135
      %1137 = vrot.lane.b32.xlu0 %v434, 20
      %v1138 = vpop.permute.xlu0 %1137
      %1139 = vrot.lane.b32.xlu0 %v435, 20
      %v1140 = vpop.permute.xlu0 %1139
      %1141 = vrot.lane.b32.xlu0 %v436, 20
      %v1142 = vpop.permute.xlu0 %1141
      %1143 = vrot.lane.b32.xlu0 %v437, 20
      %v1144 = vpop.permute.xlu0 %1143
      %1209 = vrot.lane.b32.xlu0 %v441, 24
      %v1210 = vpop.permute.xlu0 %1209
      %1211 = vrot.lane.b32.xlu0 %v442, 24
      %v1212 = vpop.permute.xlu0 %1211
      %1213 = vrot.lane.b32.xlu0 %v443, 24
      %v1214 = vpop.permute.xlu0 %1213
      %1215 = vrot.lane.b32.xlu0 %v444, 24
      %v1216 = vpop.permute.xlu0 %1215
      %1217 = vrot.lane.b32.xlu0 %v445, 24
      %v1218 = vpop.permute.xlu0 %1217
      %1219 = vrot.lane.b32.xlu0 %v446, 24
      %v1220 = vpop.permute.xlu0 %1219
      %1221 = vrot.lane.b32.xlu0 %v447, 24
      %v1222 = vpop.permute.xlu0 %1221
      %1223 = vrot.lane.b32.xlu0 %v448, 24
      %v1224 = vpop.permute.xlu0 %1223
      %1225 = vrot.lane.b32.xlu0 %v449, 24
      %v1226 = vpop.permute.xlu0 %1225
      %1227 = vrot.lane.b32.xlu0 %v450, 24
      %v1228 = vpop.permute.xlu0 %1227
      %1229 = vrot.lane.b32.xlu0 %v451, 24
      %v1230 = vpop.permute.xlu0 %1229
      %1231 = vrot.lane.b32.xlu0 %v452, 24
      %v1232 = vpop.permute.xlu0 %1231
      %1233 = vrot.lane.b32.xlu0 %v453, 24
      %v1234 = vpop.permute.xlu0 %1233
      %1235 = vrot.lane.b32.xlu0 %v454, 24
      %v1236 = vpop.permute.xlu0 %1235
      %1237 = vrot.lane.b32.xlu0 %v455, 24
      %v1238 = vpop.permute.xlu0 %1237
      %1239 = vrot.lane.b32.xlu0 %v456, 24
      %v1240 = vpop.permute.xlu0 %1239
      %1241 = vrot.lane.b32.xlu0 %v457, 24
      %v1242 = vpop.permute.xlu0 %1241
      %1243 = vrot.lane.b32.xlu0 %v458, 24
      %v1244 = vpop.permute.xlu0 %1243
      %1245 = vrot.lane.b32.xlu0 %v459, 24
      %v1246 = vpop.permute.xlu0 %1245
      %1247 = vrot.lane.b32.xlu0 %v460, 24
      %v1248 = vpop.permute.xlu0 %1247
      %1249 = vrot.lane.b32.xlu0 %v461, 24
      %v1250 = vpop.permute.xlu0 %1249
      %1251 = vrot.lane.b32.xlu0 %v462, 24
      %v1252 = vpop.permute.xlu0 %1251
      %1253 = vrot.lane.b32.xlu0 %v463, 24
      %v1254 = vpop.permute.xlu0 %1253
      %1255 = vrot.lane.b32.xlu0 %v464, 24
      %v1256 = vpop.permute.xlu0 %1255
      %1257 = vrot.lane.b32.xlu0 %v465, 24
      %v1258 = vpop.permute.xlu0 %1257
      %1259 = vrot.lane.b32.xlu0 %v466, 24
      %v1260 = vpop.permute.xlu0 %1259
      %1261 = vrot.lane.b32.xlu0 %v467, 24
      %v1262 = vpop.permute.xlu0 %1261
      %1263 = vrot.lane.b32.xlu0 %v468, 24
      %v1264 = vpop.permute.xlu0 %1263
      %1265 = vrot.lane.b32.xlu0 %v469, 24
      %v1266 = vpop.permute.xlu0 %1265
      %1267 = vrot.lane.b32.xlu0 %v470, 24
      %v1268 = vpop.permute.xlu0 %1267
      %1269 = vrot.lane.b32.xlu0 %v471, 24
      %v1270 = vpop.permute.xlu0 %1269
      %1271 = vrot.lane.b32.xlu0 %v472, 24
      %v1272 = vpop.permute.xlu0 %1271
      %1337 = vrot.lane.b32.xlu0 %v473, 28
      %v1338 = vpop.permute.xlu0 %1337
      %1339 = vrot.lane.b32.xlu0 %v474, 28
      %v1340 = vpop.permute.xlu0 %1339
      %1341 = vrot.lane.b32.xlu0 %v475, 28
      %v1342 = vpop.permute.xlu0 %1341
      %1343 = vrot.lane.b32.xlu0 %v476, 28
      %v1344 = vpop.permute.xlu0 %1343
      %1345 = vrot.lane.b32.xlu0 %v477, 28
      %v1346 = vpop.permute.xlu0 %1345
      %1347 = vrot.lane.b32.xlu0 %v478, 28
      %v1348 = vpop.permute.xlu0 %1347
      %1349 = vrot.lane.b32.xlu0 %v479, 28
      %v1350 = vpop.permute.xlu0 %1349
      %1351 = vrot.lane.b32.xlu0 %v480, 28
      %v1352 = vpop.permute.xlu0 %1351
      %1353 = vrot.lane.b32.xlu0 %v481, 28
      %v1354 = vpop.permute.xlu0 %1353
      %1355 = vrot.lane.b32.xlu0 %v482, 28
      %v1356 = vpop.permute.xlu0 %1355
      %1357 = vrot.lane.b32.xlu0 %v483, 28
      %v1358 = vpop.permute.xlu0 %1357
      %1359 = vrot.lane.b32.xlu0 %v484, 28
      %v1360 = vpop.permute.xlu0 %1359
      %1361 = vrot.lane.b32.xlu0 %v485, 28
      %v1362 = vpop.permute.xlu0 %1361
      %1363 = vrot.lane.b32.xlu0 %v486, 28
      %v1364 = vpop.permute.xlu0 %1363
      %1365 = vrot.lane.b32.xlu0 %v487, 28
      %v1366 = vpop.permute.xlu0 %1365
      %1367 = vrot.lane.b32.xlu0 %v488, 28
      %v1368 = vpop.permute.xlu0 %1367
      %1369 = vrot.lane.b32.xlu0 %v489, 28
      %v1370 = vpop.permute.xlu0 %1369
      %1371 = vrot.lane.b32.xlu0 %v490, 28
      %v1372 = vpop.permute.xlu0 %1371
      %1373 = vrot.lane.b32.xlu0 %v491, 28
      %v1374 = vpop.permute.xlu0 %1373
      %1375 = vrot.lane.b32.xlu0 %v492, 28
      %v1376 = vpop.permute.xlu0 %1375
      %1377 = vrot.lane.b32.xlu0 %v493, 28
      %v1378 = vpop.permute.xlu0 %1377
      %1379 = vrot.lane.b32.xlu0 %v494, 28
      %v1380 = vpop.permute.xlu0 %1379
      %1381 = vrot.lane.b32.xlu0 %v495, 28
      %v1382 = vpop.permute.xlu0 %1381
      %1383 = vrot.lane.b32.xlu0 %v496, 28
      %v1384 = vpop.permute.xlu0 %1383
      %1385 = vrot.lane.b32.xlu0 %v497, 28
      %v1386 = vpop.permute.xlu0 %1385
      %1387 = vrot.lane.b32.xlu0 %v498, 28
      %v1388 = vpop.permute.xlu0 %1387
      %1389 = vrot.lane.b32.xlu0 %v499, 28
      %v1390 = vpop.permute.xlu0 %1389
      %1391 = vrot.lane.b32.xlu0 %v500, 28
      %v1392 = vpop.permute.xlu0 %1391
      %1393 = vrot.lane.b32.xlu0 %v501, 28
      %v1394 = vpop.permute.xlu0 %1393
      %1395 = vrot.lane.b32.xlu0 %v502, 28
      %v1396 = vpop.permute.xlu0 %1395
      %1397 = vrot.lane.b32.xlu0 %v503, 28
      %v1398 = vpop.permute.xlu0 %1397
      %1399 = vrot.lane.b32.xlu0 %v504, 28
      %v1400 = vpop.permute.xlu0 %1399
      %1465 = vrot.lane.b32.xlu0 %v505, 32
      %v1466 = vpop.permute.xlu0 %1465
      %1467 = vrot.lane.b32.xlu0 %v506, 32
      %v1468 = vpop.permute.xlu0 %1467
      %1469 = vrot.lane.b32.xlu0 %v507, 32
      %v1470 = vpop.permute.xlu0 %1469
      %1471 = vrot.lane.b32.xlu0 %v508, 32
      %v1472 = vpop.permute.xlu0 %1471
      %1473 = vrot.lane.b32.xlu0 %v509, 32
      %v1474 = vpop.permute.xlu0 %1473
      %1475 = vrot.lane.b32.xlu0 %v510, 32
      %v1476 = vpop.permute.xlu0 %1475
      %1477 = vrot.lane.b32.xlu0 %v511, 32
      %v1478 = vpop.permute.xlu0 %1477
      %1479 = vrot.lane.b32.xlu0 %v512, 32
      %v1480 = vpop.permute.xlu0 %1479
      %1481 = vrot.lane.b32.xlu0 %v513, 32
      %v1482 = vpop.permute.xlu0 %1481
      %1483 = vrot.lane.b32.xlu0 %v514, 32
      %v1484 = vpop.permute.xlu0 %1483
      %1485 = vrot.lane.b32.xlu0 %v515, 32
      %v1486 = vpop.permute.xlu0 %1485
      %1487 = vrot.lane.b32.xlu0 %v516, 32
      %v1488 = vpop.permute.xlu0 %1487
      %1489 = vrot.lane.b32.xlu0 %v517, 32
      %v1490 = vpop.permute.xlu0 %1489
      %1491 = vrot.lane.b32.xlu0 %v518, 32
      %v1492 = vpop.permute.xlu0 %1491
      %1493 = vrot.lane.b32.xlu0 %v519, 32
      %v1494 = vpop.permute.xlu0 %1493
      %1495 = vrot.lane.b32.xlu0 %v520, 32
      %v1496 = vpop.permute.xlu0 %1495
      %1497 = vrot.lane.b32.xlu0 %v521, 32
      %v1498 = vpop.permute.xlu0 %1497
      %1499 = vrot.lane.b32.xlu0 %v522, 32
      %v1500 = vpop.permute.xlu0 %1499
      %1501 = vrot.lane.b32.xlu0 %v523, 32
      %v1502 = vpop.permute.xlu0 %1501
      %1503 = vrot.lane.b32.xlu0 %v524, 32
      %v1504 = vpop.permute.xlu0 %1503
      %1505 = vrot.lane.b32.xlu0 %v525, 32
      %v1506 = vpop.permute.xlu0 %1505
      %1507 = vrot.lane.b32.xlu0 %v526, 32
      %v1508 = vpop.permute.xlu0 %1507
      %1509 = vrot.lane.b32.xlu0 %v527, 32
      %v1510 = vpop.permute.xlu0 %1509
      %1511 = vrot.lane.b32.xlu0 %v528, 32
      %v1512 = vpop.permute.xlu0 %1511
      %1513 = vrot.lane.b32.xlu0 %v529, 32
      %v1514 = vpop.permute.xlu0 %1513
      %1515 = vrot.lane.b32.xlu0 %v530, 32
      %v1516 = vpop.permute.xlu0 %1515
      %1517 = vrot.lane.b32.xlu0 %v531, 32
      %v1518 = vpop.permute.xlu0 %1517
      %1519 = vrot.lane.b32.xlu0 %v532, 32
      %v1520 = vpop.permute.xlu0 %1519
      %1521 = vrot.lane.b32.xlu0 %v533, 32
      %v1522 = vpop.permute.xlu0 %1521
      %1523 = vrot.lane.b32.xlu0 %v534, 32
      %v1524 = vpop.permute.xlu0 %1523
      %1525 = vrot.lane.b32.xlu0 %v535, 32
      %v1526 = vpop.permute.xlu0 %1525
      %1527 = vrot.lane.b32.xlu0 %v536, 32
      %v1528 = vpop.permute.xlu0 %1527
      %vm1561 = vcmask 31744
      %v1562 = vsel %vm1561, %v243, %v570
      %v1563 = vsel %vm1561, %v244, %v572
      %v1564 = vsel %vm1561, %v245, %v574
      %v1565 = vsel %vm1561, %v246, %v576
      %v1566 = vsel %vm1561, %v247, %v578
      %v1567 = vsel %vm1561, %v248, %v580
      %v1568 = vsel %vm1561, %v249, %v582
      %v1569 = vsel %vm1561, %v250, %v584
      %v1570 = vsel %vm1561, %v251, %v586
      %v1571 = vsel %vm1561, %v252, %v588
      %v1572 = vsel %vm1561, %v253, %v590
      %v1573 = vsel %vm1561, %v254, %v592
      %v1574 = vsel %vm1561, %v255, %v594
      %v1575 = vsel %vm1561, %v256, %v596
      %v1576 = vsel %vm1561, %v257, %v598
      %v1577 = vsel %vm1561, %v258, %v600
      %v1578 = vsel %vm1561, %v259, %v602
      %v1579 = vsel %vm1561, %v260, %v604
      %v1580 = vsel %vm1561, %v261, %v606
      %v1581 = vsel %vm1561, %v262, %v608
      %v1582 = vsel %vm1561, %v263, %v610
      %v1583 = vsel %vm1561, %v264, %v612
      %v1584 = vsel %vm1561, %v265, %v614
      %v1585 = vsel %vm1561, %v266, %v616
      %v1586 = vsel %vm1561, %v267, %v618
      %v1587 = vsel %vm1561, %v268, %v620
      %v1588 = vsel %vm1561, %v269, %v622
      %v1589 = vsel %vm1561, %v270, %v624
      %v1590 = vsel %vm1561, %v271, %v626
      %v1591 = vsel %vm1561, %v272, %v628
      %v1592 = vsel %vm1561, %v273, %v630
      %v1593 = vsel %vm1561, %v274, %v632
      %vm1594 = vcmask 64512
      %v1595 = vsel %vm1594, %v1562, %v698
      %v1596 = vsel %vm1594, %v1563, %v700
      %v1597 = vsel %vm1594, %v1564, %v702
      %v1598 = vsel %vm1594, %v1565, %v704
      %v1599 = vsel %vm1594, %v1566, %v706
      %v1600 = vsel %vm1594, %v1567, %v708
      %v1601 = vsel %vm1594, %v1568, %v710
      %v1602 = vsel %vm1594, %v1569, %v712
      %v1603 = vsel %vm1594, %v1570, %v714
      %v1604 = vsel %vm1594, %v1571, %v716
      %v1605 = vsel %vm1594, %v1572, %v718
      %v1606 = vsel %vm1594, %v1573, %v720
      %v1607 = vsel %vm1594, %v1574, %v722
      %v1608 = vsel %vm1594, %v1575, %v724
      %v1609 = vsel %vm1594, %v1576, %v726
      %v1610 = vsel %vm1594, %v1577, %v728
      %v1611 = vsel %vm1594, %v1578, %v730
      %v1612 = vsel %vm1594, %v1579, %v732
      %v1613 = vsel %vm1594, %v1580, %v734
      %v1614 = vsel %vm1594, %v1581, %v736
      %v1615 = vsel %vm1594, %v1582, %v738
      %v1616 = vsel %vm1594, %v1583, %v740
      %v1617 = vsel %vm1594, %v1584, %v742
      %v1618 = vsel %vm1594, %v1585, %v744
      %v1619 = vsel %vm1594, %v1586, %v746
      %v1620 = vsel %vm1594, %v1587, %v748
      %v1621 = vsel %vm1594, %v1588, %v750
      %v1622 = vsel %vm1594, %v1589, %v752
      %v1623 = vsel %vm1594, %v1590, %v754
      %v1624 = vsel %vm1594, %v1591, %v756
      %v1625 = vsel %vm1594, %v1592, %v758
      %v1626 = vsel %vm1594, %v1593, %v760
      %vm1627 = vcmask 97280
      %v1628 = vsel %vm1627, %v1595, %v826
      %v1629 = vsel %vm1627, %v1596, %v828
      %v1630 = vsel %vm1627, %v1597, %v830
      %v1631 = vsel %vm1627, %v1598, %v832
      %v1632 = vsel %vm1627, %v1599, %v834
      %v1633 = vsel %vm1627, %v1600, %v836
      %v1634 = vsel %vm1627, %v1601, %v838
      %v1635 = vsel %vm1627, %v1602, %v840
      %v1636 = vsel %vm1627, %v1603, %v842
      %v1637 = vsel %vm1627, %v1604, %v844
      %v1638 = vsel %vm1627, %v1605, %v846
      %v1639 = vsel %vm1627, %v1606, %v848
      %v1640 = vsel %vm1627, %v1607, %v850
      %v1641 = vsel %vm1627, %v1608, %v852
      %v1642 = vsel %vm1627, %v1609, %v854
      %v1643 = vsel %vm1627, %v1610, %v856
      %v1644 = vsel %vm1627, %v1611, %v858
      %v1645 = vsel %vm1627, %v1612, %v860
      %v1646 = vsel %vm1627, %v1613, %v862
      %v1647 = vsel %vm1627, %v1614, %v864
      %v1648 = vsel %vm1627, %v1615, %v866
      %v1649 = vsel %vm1627, %v1616, %v868
      %v1650 = vsel %vm1627, %v1617, %v870
      %v1651 = vsel %vm1627, %v1618, %v872
      %v1652 = vsel %vm1627, %v1619, %v874
      %v1653 = vsel %vm1627, %v1620, %v876
      %v1654 = vsel %vm1627, %v1621, %v878
      %v1655 = vsel %vm1627, %v1622, %v880
      %v1656 = vsel %vm1627, %v1623, %v882
      %v1657 = vsel %vm1627, %v1624, %v884
      %v1658 = vsel %vm1627, %v1625, %v886
      %v1659 = vsel %vm1627, %v1626, %v888
      %vm1660 = vcmask 130048
      %v1661 = vsel %vm1660, %v1628, %v954
      %v1662 = vsel %vm1660, %v1629, %v956
      %v1663 = vsel %vm1660, %v1630, %v958
      %v1664 = vsel %vm1660, %v1631, %v960
      %v1665 = vsel %vm1660, %v1632, %v962
      %v1666 = vsel %vm1660, %v1633, %v964
      %v1667 = vsel %vm1660, %v1634, %v966
      %v1668 = vsel %vm1660, %v1635, %v968
      %v1669 = vsel %vm1660, %v1636, %v970
      %v1670 = vsel %vm1660, %v1637, %v972
      %v1671 = vsel %vm1660, %v1638, %v974
      %v1672 = vsel %vm1660, %v1639, %v976
      %v1673 = vsel %vm1660, %v1640, %v978
      %v1674 = vsel %vm1660, %v1641, %v980
      %v1675 = vsel %vm1660, %v1642, %v982
      %v1676 = vsel %vm1660, %v1643, %v984
      %v1677 = vsel %vm1660, %v1644, %v986
      %v1678 = vsel %vm1660, %v1645, %v988
      %v1679 = vsel %vm1660, %v1646, %v990
      %v1680 = vsel %vm1660, %v1647, %v992
      %v1681 = vsel %vm1660, %v1648, %v994
      %v1682 = vsel %vm1660, %v1649, %v996
      %v1683 = vsel %vm1660, %v1650, %v998
      %v1684 = vsel %vm1660, %v1651, %v1000
      %v1685 = vsel %vm1660, %v1652, %v1002
      %v1686 = vsel %vm1660, %v1653, %v1004
      %v1687 = vsel %vm1660, %v1654, %v1006
      %v1688 = vsel %vm1660, %v1655, %v1008
      %v1689 = vsel %vm1660, %v1656, %v1010
      %v1690 = vsel %vm1660, %v1657, %v1012
      %v1691 = vsel %vm1660, %v1658, %v1014
      %v1692 = vsel %vm1660, %v1659, %v1016
      %vm1693 = vcmask 162816
      %v1694 = vsel %vm1693, %v1661, %v1082
      %v1695 = vsel %vm1693, %v1662, %v1084
      %v1696 = vsel %vm1693, %v1663, %v1086
      %v1697 = vsel %vm1693, %v1664, %v1088
      %v1698 = vsel %vm1693, %v1665, %v1090
      %v1699 = vsel %vm1693, %v1666, %v1092
      %v1700 = vsel %vm1693, %v1667, %v1094
      %v1701 = vsel %vm1693, %v1668, %v1096
      %v1702 = vsel %vm1693, %v1669, %v1098
      %v1703 = vsel %vm1693, %v1670, %v1100
      %v1704 = vsel %vm1693, %v1671, %v1102
      %v1705 = vsel %vm1693, %v1672, %v1104
      %v1706 = vsel %vm1693, %v1673, %v1106
      %v1707 = vsel %vm1693, %v1674, %v1108
      %v1708 = vsel %vm1693, %v1675, %v1110
      %v1709 = vsel %vm1693, %v1676, %v1112
      %v1710 = vsel %vm1693, %v1677, %v1114
      %v1711 = vsel %vm1693, %v1678, %v1116
      %v1712 = vsel %vm1693, %v1679, %v1118
      %v1713 = vsel %vm1693, %v1680, %v1120
      %v1714 = vsel %vm1693, %v1681, %v1122
      %v1715 = vsel %vm1693, %v1682, %v1124
      %v1716 = vsel %vm1693, %v1683, %v1126
      %v1717 = vsel %vm1693, %v1684, %v1128
      %v1718 = vsel %vm1693, %v1685, %v1130
      %v1719 = vsel %vm1693, %v1686, %v1132
      %v1720 = vsel %vm1693, %v1687, %v1134
      %v1721 = vsel %vm1693, %v1688, %v1136
      %v1722 = vsel %vm1693, %v1689, %v1138
      %v1723 = vsel %vm1693, %v1690, %v1140
      %v1724 = vsel %vm1693, %v1691, %v1142
      %v1725 = vsel %vm1693, %v1692, %v1144
      %vm1726 = vcmask 195584
      %v1727 = vsel %vm1726, %v1694, %v1210
      %v1728 = vsel %vm1726, %v1695, %v1212
      %v1729 = vsel %vm1726, %v1696, %v1214
      %v1730 = vsel %vm1726, %v1697, %v1216
      %v1731 = vsel %vm1726, %v1698, %v1218
      %v1732 = vsel %vm1726, %v1699, %v1220
      %v1733 = vsel %vm1726, %v1700, %v1222
      %v1734 = vsel %vm1726, %v1701, %v1224
      %v1735 = vsel %vm1726, %v1702, %v1226
      %v1736 = vsel %vm1726, %v1703, %v1228
      %v1737 = vsel %vm1726, %v1704, %v1230
      %v1738 = vsel %vm1726, %v1705, %v1232
      %v1739 = vsel %vm1726, %v1706, %v1234
      %v1740 = vsel %vm1726, %v1707, %v1236
      %v1741 = vsel %vm1726, %v1708, %v1238
      %v1742 = vsel %vm1726, %v1709, %v1240
      %v1743 = vsel %vm1726, %v1710, %v1242
      %v1744 = vsel %vm1726, %v1711, %v1244
      %v1745 = vsel %vm1726, %v1712, %v1246
      %v1746 = vsel %vm1726, %v1713, %v1248
      %v1747 = vsel %vm1726, %v1714, %v1250
      %v1748 = vsel %vm1726, %v1715, %v1252
      %v1749 = vsel %vm1726, %v1716, %v1254
      %v1750 = vsel %vm1726, %v1717, %v1256
      %v1751 = vsel %vm1726, %v1718, %v1258
      %v1752 = vsel %vm1726, %v1719, %v1260
      %v1753 = vsel %vm1726, %v1720, %v1262
      %v1754 = vsel %vm1726, %v1721, %v1264
      %v1755 = vsel %vm1726, %v1722, %v1266
      %v1756 = vsel %vm1726, %v1723, %v1268
      %v1757 = vsel %vm1726, %v1724, %v1270
      %v1758 = vsel %vm1726, %v1725, %v1272
      %vm1759 = vcmask 228352
      %v1760 = vsel %vm1759, %v1727, %v1338
      %v1761 = vsel %vm1759, %v1728, %v1340
      %v1762 = vsel %vm1759, %v1729, %v1342
      %v1763 = vsel %vm1759, %v1730, %v1344
      %v1764 = vsel %vm1759, %v1731, %v1346
      %v1765 = vsel %vm1759, %v1732, %v1348
      %v1766 = vsel %vm1759, %v1733, %v1350
      %v1767 = vsel %vm1759, %v1734, %v1352
      %v1768 = vsel %vm1759, %v1735, %v1354
      %v1769 = vsel %vm1759, %v1736, %v1356
      %v1770 = vsel %vm1759, %v1737, %v1358
      %v1771 = vsel %vm1759, %v1738, %v1360
      %v1772 = vsel %vm1759, %v1739, %v1362
      %v1773 = vsel %vm1759, %v1740, %v1364
      %v1774 = vsel %vm1759, %v1741, %v1366
      %v1775 = vsel %vm1759, %v1742, %v1368
      %v1776 = vsel %vm1759, %v1743, %v1370
      %v1777 = vsel %vm1759, %v1744, %v1372
      %v1778 = vsel %vm1759, %v1745, %v1374
      %v1779 = vsel %vm1759, %v1746, %v1376
      %v1780 = vsel %vm1759, %v1747, %v1378
      %v1781 = vsel %vm1759, %v1748, %v1380
      %v1782 = vsel %vm1759, %v1749, %v1382
      %v1783 = vsel %vm1759, %v1750, %v1384
      %v1784 = vsel %vm1759, %v1751, %v1386
      %v1785 = vsel %vm1759, %v1752, %v1388
      %v1786 = vsel %vm1759, %v1753, %v1390
      %v1787 = vsel %vm1759, %v1754, %v1392
      %v1788 = vsel %vm1759, %v1755, %v1394
      %v1789 = vsel %vm1759, %v1756, %v1396
      %v1790 = vsel %vm1759, %v1757, %v1398
      %v1791 = vsel %vm1759, %v1758, %v1400
      %vm1792 = vcmask 261120
      %v1793 = vsel %vm1792, %v1760, %v1466
      %v1794 = vsel %vm1792, %v1761, %v1468
      %v1795 = vsel %vm1792, %v1762, %v1470
      %v1796 = vsel %vm1792, %v1763, %v1472
      %v1797 = vsel %vm1792, %v1764, %v1474
      %v1798 = vsel %vm1792, %v1765, %v1476
      %v1799 = vsel %vm1792, %v1766, %v1478
      %v1800 = vsel %vm1792, %v1767, %v1480
      %v1801 = vsel %vm1792, %v1768, %v1482
      %v1802 = vsel %vm1792, %v1769, %v1484
      %v1803 = vsel %vm1792, %v1770, %v1486
      %v1804 = vsel %vm1792, %v1771, %v1488
      %v1805 = vsel %vm1792, %v1772, %v1490
      %v1806 = vsel %vm1792, %v1773, %v1492
      %v1807 = vsel %vm1792, %v1774, %v1494
      %v1808 = vsel %vm1792, %v1775, %v1496
      %v1809 = vsel %vm1792, %v1776, %v1498
      %v1810 = vsel %vm1792, %v1777, %v1500
      %v1811 = vsel %vm1792, %v1778, %v1502
      %v1812 = vsel %vm1792, %v1779, %v1504
      %v1813 = vsel %vm1792, %v1780, %v1506
      %v1814 = vsel %vm1792, %v1781, %v1508
      %v1815 = vsel %vm1792, %v1782, %v1510
      %v1816 = vsel %vm1792, %v1783, %v1512
      %v1817 = vsel %vm1792, %v1784, %v1514
      %v1818 = vsel %vm1792, %v1785, %v1516
      %v1819 = vsel %vm1792, %v1786, %v1518
      %v1820 = vsel %vm1792, %v1787, %v1520
      %v1821 = vsel %vm1792, %v1788, %v1522
      %v1822 = vsel %vm1792, %v1789, %v1524
      %v1823 = vsel %vm1792, %v1790, %v1526
      %v1824 = vsel %vm1792, %v1791, %v1528
      %v1825 = vld [vmem:[%s1] sm:$0xff]
      %v1826 = vld [vmem:[%s1 + $0x8] sm:$0xff]
      %v1827 = vld [vmem:[%s1 + $0x10] sm:$0xff]
      %v1828 = vld [vmem:[%s1 + $0x18] sm:$0xff]
      %v1829 = vld [vmem:[%s1 + $0x20] sm:$0xf]
      %v1830 = vld [vmem:[%s2] sm:$0x1]
      %v1832 = vlaneseq
      %v1833 = vshrl.u32 %v1832, 7
      %v1834 = vsub.s32 0, %v1833
      %v1835 = vrot.slane %v1830, %v1834
      %vm1837 = vcmask 293888
      %v1839 = vsel %vm1837, %v1793, 0
      %v1842 = vsel %vm1837, %v1794, 0
      %v1845 = vsel %vm1837, %v1795, 0
      %v1848 = vsel %vm1837, %v1796, 0
      %v1851 = vsel %vm1837, %v1797, 0
      %v1854 = vsel %vm1837, %v1798, 0
      %v1857 = vsel %vm1837, %v1799, 0
      %v1860 = vsel %vm1837, %v1800, 0
      %v1863 = vsel %vm1837, %v1801, 0
      %v1866 = vsel %vm1837, %v1802, 0
      %v1869 = vsel %vm1837, %v1803, 0
      %v1872 = vsel %vm1837, %v1804, 0
      %v1875 = vsel %vm1837, %v1805, 0
      %v1878 = vsel %vm1837, %v1806, 0
      %v1881 = vsel %vm1837, %v1807, 0
      %v1884 = vsel %vm1837, %v1808, 0
      %v1887 = vsel %vm1837, %v1809, 0
      %v1890 = vsel %vm1837, %v1810, 0
      %v1893 = vsel %vm1837, %v1811, 0
      %v1896 = vsel %vm1837, %v1812, 0
      %v1899 = vsel %vm1837, %v1813, 0
      %v1902 = vsel %vm1837, %v1814, 0
      %v1905 = vsel %vm1837, %v1815, 0
      %v1908 = vsel %vm1837, %v1816, 0
      %v1911 = vsel %vm1837, %v1817, 0
      %v1914 = vsel %vm1837, %v1818, 0
      %v1917 = vsel %vm1837, %v1819, 0
      %v1920 = vsel %vm1837, %v1820, 0
      %v1923 = vsel %vm1837, %v1821, 0
      %v1926 = vsel %vm1837, %v1822, 0
      %v1929 = vsel %vm1837, %v1823, 0
      %v1932 = vsel %vm1837, %v1824, 0
      %vm1934 = vcmask 1043456
      %v1936 = vsel %vm1934, %v1829, 0
      %1938 = vmatprep.subr.mxu0 0.0
      %1939 = vmatpush1.msra.mxu0 %v1825
      %1940 = vmatprep.subr.mxu0 0.0
      %1941 = vmatpush1.msra.mxu0 %v1826
      %1942 = vmatprep.subr.mxu0 0.0
      %1943 = vmatpush1.msra.mxu0 %v1827
      %1944 = vmatprep.subr.mxu0 0.0
      %1945 = vmatpush1.msra.mxu0 %v1828
      %1946 = vmatprep.subr.mxu0 0.0
      %1947 = vmatpush1.msra.mxu0 %v1936
      %1948 = vmatprep.subr.mxu0 0.0
      %1949 = vmatpush1.msra.mxu0 0.0
      %1950 = vmatprep.subr.mxu0 0.0
      %1951 = vmatpush1.msra.mxu0 0.0
      %1952 = vmatprep.subr.mxu0 0.0
      %1953 = vmatpush1.msra.mxu0 0.0
      %1954 = vmatprep.subr.mxu0 0.0
      %1955 = vmatpush1.msra.mxu0 0.0
      %1956 = vmatprep.subr.mxu0 0.0
      %1957 = vmatpush1.msra.mxu0 0.0
      %1958 = vmatprep.subr.mxu0 0.0
      %1959 = vmatpush1.msra.mxu0 0.0
      %1960 = vmatprep.subr.mxu0 0.0
      %1961 = vmatpush1.msra.mxu0 0.0
      %1962 = vmatprep.subr.mxu0 0.0
      %1963 = vmatpush1.msra.mxu0 0.0
      %1964 = vmatprep.subr.mxu0 0.0
      %1965 = vmatpush1.msra.mxu0 0.0
      %1966 = vmatprep.subr.mxu0 0.0
      %1967 = vmatpush1.msra.mxu0 0.0
      %1968 = vmatprep.subr.mxu0 0.0
      %1969 = vmatpush1.msra.mxu0 0.0
      %1970 = vmatprep.subr.mxu0 0.0
      %1971 = vmatpush1.msra.mxu0 0.0
      %1972 = vmatprep.subr.mxu0 0.0
      %1973 = vmatpush1.msra.mxu0 0.0
      %1974 = vmatprep.subr.mxu0 0.0
      %1975 = vmatpush1.msra.mxu0 0.0
      %1976 = vmatprep.subr.mxu0 0.0
      %1977 = vmatpush1.msra.mxu0 0.0
      %1978 = vmatprep.subr.mxu0 0.0
      %1979 = vmatpush1.msra.mxu0 0.0
      %1980 = vmatprep.subr.mxu0 0.0
      %1981 = vmatpush1.msra.mxu0 0.0
      %1982 = vmatprep.subr.mxu0 0.0
      %1983 = vmatpush1.msra.mxu0 0.0
      %1984 = vmatprep.subr.mxu0 0.0
      %1985 = vmatpush1.msra.mxu0 0.0
      %1986 = vmatprep.subr.mxu0 0.0
      %1987 = vmatpush1.msra.mxu0 0.0
      %1988 = vmatprep.subr.mxu0 0.0
      %1989 = vmatpush1.msra.mxu0 0.0
      %1990 = vmatprep.subr.mxu0 0.0
      %1991 = vmatpush1.msra.mxu0 0.0
      %1992 = vmatprep.subr.mxu0 0.0
      %1993 = vmatpush1.msra.mxu0 0.0
      %1994 = vmatprep.subr.mxu0 0.0
      %1995 = vmatpush1.msra.mxu0 0.0
      %1996 = vmatprep.subr.mxu0 0.0
      %1997 = vmatpush1.msra.mxu0 0.0
      %1998 = vmatprep.subr.mxu0 0.0
      %1999 = vmatpush1.msra.mxu0 0.0
      %2000 = vmatprep.subr.mxu0 0.0
      %2001 = vmatpush1.msra.mxu0 0.0
      %2002 = vmatprep.mubr.f32.mxu0 0.0
      %2003 = vmatmul.mubr.f32.gmra.mrb[0].mxu0 %v1839
      %v2004 = vpop.f32.mrb[0].mxu0
      %v2005 = vadd.f32 %v1835, %v2004
      %v2006 = vpop.f32.mrb[0].mxu0
      %2007 = vmatprep.mubr.f32.mxu0 0.0
      %2008 = vmatmul.mubr.f32.gmra.mrb[0].mxu0 %v1842
      %v2009 = vpop.f32.mrb[0].mxu0
      %v2010 = vadd.f32 %v1835, %v2009
      %v2011 = vpop.f32.mrb[0].mxu0
      %2012 = vmatprep.mubr.f32.mxu0 0.0
      %2013 = vmatmul.mubr.f32.gmra.mrb[0].mxu0 %v1845
      %v2014 = vpop.f32.mrb[0].mxu0
      %v2015 = vadd.f32 %v1835, %v2014
      %v2016 = vpop.f32.mrb[0].mxu0
      %2017 = vmatprep.mubr.f32.mxu0 0.0
      %2018 = vmatmul.mubr.f32.gmra.mrb[0].mxu0 %v1848
      %v2019 = vpop.f32.mrb[0].mxu0
      %v2020 = vadd.f32 %v1835, %v2019
      %v2021 = vpop.f32.mrb[0].mxu0
      %2022 = vmatprep.mubr.f32.mxu0 0.0
      %2023 = vmatmul.mubr.f32.gmra.mrb[0].mxu0 %v1851
      %v2024 = vpop.f32.mrb[0].mxu0
      %v2025 = vadd.f32 %v1835, %v2024
      %v2026 = vpop.f32.mrb[0].mxu0
      %2027 = vmatprep.mubr.f32.mxu0 0.0
      %2028 = vmatmul.mubr.f32.gmra.mrb[0].mxu0 %v1854
      %v2029 = vpop.f32.mrb[0].mxu0
      %v2030 = vadd.f32 %v1835, %v2029
      %v2031 = vpop.f32.mrb[0].mxu0
      %2032 = vmatprep.mubr.f32.mxu0 0.0
      %2033 = vmatmul.mubr.f32.gmra.mrb[0].mxu0 %v1857
      %v2034 = vpop.f32.mrb[0].mxu0
      %v2035 = vadd.f32 %v1835, %v2034
      %v2036 = vpop.f32.mrb[0].mxu0
      %2037 = vmatprep.mubr.f32.mxu0 0.0
      %2038 = vmatmul.mubr.f32.gmra.mrb[0].mxu0 %v1860
      %v2039 = vpop.f32.mrb[0].mxu0
      %v2040 = vadd.f32 %v1835, %v2039
      %v2041 = vpop.f32.mrb[0].mxu0
      %2042 = vmatprep.mubr.f32.mxu0 0.0
      %2043 = vmatmul.mubr.f32.gmra.mrb[0].mxu0 %v1863
      %v2044 = vpop.f32.mrb[0].mxu0
      %v2045 = vadd.f32 %v1835, %v2044
      %v2046 = vpop.f32.mrb[0].mxu0
      %2047 = vmatprep.mubr.f32.mxu0 0.0
      %2048 = vmatmul.mubr.f32.gmra.mrb[0].mxu0 %v1866
      %v2049 = vpop.f32.mrb[0].mxu0
      %v2050 = vadd.f32 %v1835, %v2049
      %v2051 = vpop.f32.mrb[0].mxu0
      %2052 = vmatprep.mubr.f32.mxu0 0.0
      %2053 = vmatmul.mubr.f32.gmra.mrb[0].mxu0 %v1869
      %v2054 = vpop.f32.mrb[0].mxu0
      %v2055 = vadd.f32 %v1835, %v2054
      %v2056 = vpop.f32.mrb[0].mxu0
      %2057 = vmatprep.mubr.f32.mxu0 0.0
      %2058 = vmatmul.mubr.f32.gmra.mrb[0].mxu0 %v1872
      %v2059 = vpop.f32.mrb[0].mxu0
      %v2060 = vadd.f32 %v1835, %v2059
      %v2061 = vpop.f32.mrb[0].mxu0
      %2062 = vmatprep.mubr.f32.mxu0 0.0
      %2063 = vmatmul.mubr.f32.gmra.mrb[0].mxu0 %v1875
      %v2064 = vpop.f32.mrb[0].mxu0
      %v2065 = vadd.f32 %v1835, %v2064
      %v2066 = vpop.f32.mrb[0].mxu0
      %2067 = vmatprep.mubr.f32.mxu0 0.0
      %2068 = vmatmul.mubr.f32.gmra.mrb[0].mxu0 %v1878
      %v2069 = vpop.f32.mrb[0].mxu0
      %v2070 = vadd.f32 %v1835, %v2069
      %v2071 = vpop.f32.mrb[0].mxu0
      %2072 = vmatprep.mubr.f32.mxu0 0.0
      %2073 = vmatmul.mubr.f32.gmra.mrb[0].mxu0 %v1881
      %v2074 = vpop.f32.mrb[0].mxu0
      %v2075 = vadd.f32 %v1835, %v2074
      %v2076 = vpop.f32.mrb[0].mxu0
      %2077 = vmatprep.mubr.f32.mxu0 0.0
      %2078 = vmatmul.mubr.f32.gmra.mrb[0].mxu0 %v1884
      %v2079 = vpop.f32.mrb[0].mxu0
      %v2080 = vadd.f32 %v1835, %v2079
      %v2081 = vpop.f32.mrb[0].mxu0
      %2082 = vmatprep.mubr.f32.mxu0 0.0
      %2083 = vmatmul.mubr.f32.gmra.mrb[0].mxu0 %v1887
      %v2084 = vpop.f32.mrb[0].mxu0
      %v2085 = vadd.f32 %v1835, %v2084
      %v2086 = vpop.f32.mrb[0].mxu0
      %2087 = vmatprep.mubr.f32.mxu0 0.0
      %2088 = vmatmul.mubr.f32.gmra.mrb[0].mxu0 %v1890
      %v2089 = vpop.f32.mrb[0].mxu0
      %v2090 = vadd.f32 %v1835, %v2089
      %v2091 = vpop.f32.mrb[0].mxu0
      %2092 = vmatprep.mubr.f32.mxu0 0.0
      %2093 = vmatmul.mubr.f32.gmra.mrb[0].mxu0 %v1893
      %v2094 = vpop.f32.mrb[0].mxu0
      %v2095 = vadd.f32 %v1835, %v2094
      %v2096 = vpop.f32.mrb[0].mxu0
      %2097 = vmatprep.mubr.f32.mxu0 0.0
      %2098 = vmatmul.mubr.f32.gmra.mrb[0].mxu0 %v1896
      %v2099 = vpop.f32.mrb[0].mxu0
      %v2100 = vadd.f32 %v1835, %v2099
      %v2101 = vpop.f32.mrb[0].mxu0
      %2102 = vmatprep.mubr.f32.mxu0 0.0
      %2103 = vmatmul.mubr.f32.gmra.mrb[0].mxu0 %v1899
      %v2104 = vpop.f32.mrb[0].mxu0
      %v2105 = vadd.f32 %v1835, %v2104
      %v2106 = vpop.f32.mrb[0].mxu0
      %2107 = vmatprep.mubr.f32.mxu0 0.0
      %2108 = vmatmul.mubr.f32.gmra.mrb[0].mxu0 %v1902
      %v2109 = vpop.f32.mrb[0].mxu0
      %v2110 = vadd.f32 %v1835, %v2109
      %v2111 = vpop.f32.mrb[0].mxu0
      %2112 = vmatprep.mubr.f32.mxu0 0.0
      %2113 = vmatmul.mubr.f32.gmra.mrb[0].mxu0 %v1905
      %v2114 = vpop.f32.mrb[0].mxu0
      %v2115 = vadd.f32 %v1835, %v2114
      %v2116 = vpop.f32.mrb[0].mxu0
      %2117 = vmatprep.mubr.f32.mxu0 0.0
      %2118 = vmatmul.mubr.f32.gmra.mrb[0].mxu0 %v1908
      %v2119 = vpop.f32.mrb[0].mxu0
      %v2120 = vadd.f32 %v1835, %v2119
      %v2121 = vpop.f32.mrb[0].mxu0
      %2122 = vmatprep.mubr.f32.mxu0 0.0
      %2123 = vmatmul.mubr.f32.gmra.mrb[0].mxu0 %v1911
      %v2124 = vpop.f32.mrb[0].mxu0
      %v2125 = vadd.f32 %v1835, %v2124
      %v2126 = vpop.f32.mrb[0].mxu0
      %2127 = vmatprep.mubr.f32.mxu0 0.0
      %2128 = vmatmul.mubr.f32.gmra.mrb[0].mxu0 %v1914
      %v2129 = vpop.f32.mrb[0].mxu0
      %v2130 = vadd.f32 %v1835, %v2129
      %v2131 = vpop.f32.mrb[0].mxu0
      %2132 = vmatprep.mubr.f32.mxu0 0.0
      %2133 = vmatmul.mubr.f32.gmra.mrb[0].mxu0 %v1917
      %v2134 = vpop.f32.mrb[0].mxu0
      %v2135 = vadd.f32 %v1835, %v2134
      %v2136 = vpop.f32.mrb[0].mxu0
      %2137 = vmatprep.mubr.f32.mxu0 0.0
      %2138 = vmatmul.mubr.f32.gmra.mrb[0].mxu0 %v1920
      %v2139 = vpop.f32.mrb[0].mxu0
      %v2140 = vadd.f32 %v1835, %v2139
      %v2141 = vpop.f32.mrb[0].mxu0
      %2142 = vmatprep.mubr.f32.mxu0 0.0
      %2143 = vmatmul.mubr.f32.gmra.mrb[0].mxu0 %v1923
      %v2144 = vpop.f32.mrb[0].mxu0
      %v2145 = vadd.f32 %v1835, %v2144
      %v2146 = vpop.f32.mrb[0].mxu0
      %2147 = vmatprep.mubr.f32.mxu0 0.0
      %2148 = vmatmul.mubr.f32.gmra.mrb[0].mxu0 %v1926
      %v2149 = vpop.f32.mrb[0].mxu0
      %v2150 = vadd.f32 %v1835, %v2149
      %v2151 = vpop.f32.mrb[0].mxu0
      %2152 = vmatprep.mubr.f32.mxu0 0.0
      %2153 = vmatmul.mubr.f32.gmra.mrb[0].mxu0 %v1929
      %v2154 = vpop.f32.mrb[0].mxu0
      %v2155 = vadd.f32 %v1835, %v2154
      %v2156 = vpop.f32.mrb[0].mxu0
      %2157 = vmatprep.mubr.f32.mxu0 0.0
      %2158 = vmatmul.mubr.f32.gmra.mrb[0].mxu0 %v1932
      %v2159 = vpop.f32.mrb[0].mxu0
      %v2160 = vadd.f32 %v1835, %v2159
      %v2161 = vpop.f32.mrb[0].mxu0
      %2162 = vdwg.mxu0
      %v2163 = vmax.f32 %v2005, 0.0
      %v2164 = vmax.f32 %v2010, 0.0
      %v2165 = vmax.f32 %v2015, 0.0
      %v2166 = vmax.f32 %v2020, 0.0
      %v2167 = vmax.f32 %v2025, 0.0
      %v2168 = vmax.f32 %v2030, 0.0
      %v2169 = vmax.f32 %v2035, 0.0
      %v2170 = vmax.f32 %v2040, 0.0
      %v2171 = vmax.f32 %v2045, 0.0
      %v2172 = vmax.f32 %v2050, 0.0
      %v2173 = vmax.f32 %v2055, 0.0
      %v2174 = vmax.f32 %v2060, 0.0
      %v2175 = vmax.f32 %v2065, 0.0
      %v2176 = vmax.f32 %v2070, 0.0
      %v2177 = vmax.f32 %v2075, 0.0
      %v2178 = vmax.f32 %v2080, 0.0
      %v2179 = vmax.f32 %v2085, 0.0
      %v2180 = vmax.f32 %v2090, 0.0
      %v2181 = vmax.f32 %v2095, 0.0
      %v2182 = vmax.f32 %v2100, 0.0
      %v2183 = vmax.f32 %v2105, 0.0
      %v2184 = vmax.f32 %v2110, 0.0
      %v2185 = vmax.f32 %v2115, 0.0
      %v2186 = vmax.f32 %v2120, 0.0
      %v2187 = vmax.f32 %v2125, 0.0
      %v2188 = vmax.f32 %v2130, 0.0
      %v2189 = vmax.f32 %v2135, 0.0
      %v2190 = vmax.f32 %v2140, 0.0
      %v2191 = vmax.f32 %v2145, 0.0
      %v2192 = vmax.f32 %v2150, 0.0
      %v2193 = vmax.f32 %v2155, 0.0
      %v2194 = vmax.f32 %v2160, 0.0
      %2195 = vst [vmem:[%s231] sm:$0xff] %v2163
      %2196 = vst [vmem:[%s231 + $0x8] sm:$0xff] %v2164
      %2197 = vst [vmem:[%s231 + $0x10] sm:$0xff] %v2165
      %2198 = vst [vmem:[%s231 + $0x18] sm:$0xff] %v2166
      %2199 = vst [vmem:[%s231 + $0x20] sm:$0xff] %v2167
      %2200 = vst [vmem:[%s231 + $0x28] sm:$0xff] %v2168
      %2201 = vst [vmem:[%s231 + $0x30] sm:$0xff] %v2169
      %2202 = vst [vmem:[%s231 + $0x38] sm:$0xff] %v2170
      %2203 = vst [vmem:[%s231 + $0x40] sm:$0xff] %v2171
      %2204 = vst [vmem:[%s231 + $0x48] sm:$0xff] %v2172
      %2205 = vst [vmem:[%s231 + $0x50] sm:$0xff] %v2173
      %2206 = vst [vmem:[%s231 + $0x58] sm:$0xff] %v2174
      %2207 = vst [vmem:[%s231 + $0x60] sm:$0xff] %v2175
      %2208 = vst [vmem:[%s231 + $0x68] sm:$0xff] %v2176
      %2209 = vst [vmem:[%s231 + $0x70] sm:$0xff] %v2177
      %2210 = vst [vmem:[%s231 + $0x78] sm:$0xff] %v2178
      %2211 = vst [vmem:[%s231 + $0x80] sm:$0xff] %v2179
      %2212 = vst [vmem:[%s231 + $0x88] sm:$0xff] %v2180
      %2213 = vst [vmem:[%s231 + $0x90] sm:$0xff] %v2181
      %2214 = vst [vmem:[%s231 + $0x98] sm:$0xff] %v2182
      %2215 = vst [vmem:[%s231 + $0xa0] sm:$0xff] %v2183
      %2216 = vst [vmem:[%s231 + $0xa8] sm:$0xff] %v2184
      %2217 = vst [vmem:[%s231 + $0xb0] sm:$0xff] %v2185
      %2218 = vst [vmem:[%s231 + $0xb8] sm:$0xff] %v2186
      %2219 = vst [vmem:[%s231 + $0xc0] sm:$0xff] %v2187
      %2220 = vst [vmem:[%s231 + $0xc8] sm:$0xff] %v2188
      %2221 = vst [vmem:[%s231 + $0xd0] sm:$0xff] %v2189
      %2222 = vst [vmem:[%s231 + $0xd8] sm:$0xff] %v2190
      %2223 = vst [vmem:[%s231 + $0xe0] sm:$0xff] %v2191
      %2224 = vst [vmem:[%s231 + $0xe8] sm:$0xff] %v2192
      %2225 = vst [vmem:[%s231 + $0xf0] sm:$0xff] %v2193
      %2226 = vst [vmem:[%s231 + $0xf8] sm:$0xff] %v2194
      %v2227 = vadd.f32 %v2163, %v2164
      %v2228 = vadd.f32 %v2227, %v2165
      %v2229 = vadd.f32 %v2228, %v2166
      %v2230 = vadd.f32 %v2229, %v2167
      %v2231 = vadd.f32 %v2230, %v2168
      %v2232 = vadd.f32 %v2231, %v2169
      %v2233 = vadd.f32 %v2232, %v2170
      %v2234 = vadd.f32 %v2233, %v2171
      %v2235 = vadd.f32 %v2234, %v2172
      %v2236 = vadd.f32 %v2235, %v2173
      %v2237 = vadd.f32 %v2236, %v2174
      %v2238 = vadd.f32 %v2237, %v2175
      %v2239 = vadd.f32 %v2238, %v2176
      %v2240 = vadd.f32 %v2239, %v2177
      %v2241 = vadd.f32 %v2240, %v2178
      %v2242 = vadd.f32 %v2241, %v2179
      %v2243 = vadd.f32 %v2242, %v2180
      %v2244 = vadd.f32 %v2243, %v2181
      %v2245 = vadd.f32 %v2244, %v2182
      %v2246 = vadd.f32 %v2245, %v2183
      %v2247 = vadd.f32 %v2246, %v2184
      %v2248 = vadd.f32 %v2247, %v2185
      %v2249 = vadd.f32 %v2248, %v2186
      %v2250 = vadd.f32 %v2249, %v2187
      %v2251 = vadd.f32 %v2250, %v2188
      %v2252 = vadd.f32 %v2251, %v2189
      %v2253 = vadd.f32 %v2252, %v2190
      %v2254 = vadd.f32 %v2253, %v2191
      %v2255 = vadd.f32 %v2254, %v2192
      %v2256 = vadd.f32 %v2255, %v2193
      %v2257 = vadd.f32 %v2256, %v2194
      %v2258 = vrot.slane %v2257, 4
      %v2259 = vadd.f32 %v2257, %v2258
      %v2260 = vrot.slane %v2259, 2
      %v2261 = vadd.f32 %v2259, %v2260
      %v2262 = vrot.slane %v2261, 1
      %v2263 = vadd.f32 %v2261, %v2262
      %2264 = vst [vmem:[%s239] sm:$0x1] %v2263
      %v2265 = vmul.f32 %v2163, %v2163
      %v2266 = vmul.f32 %v2164, %v2164
      %v2267 = vmul.f32 %v2165, %v2165
      %v2268 = vmul.f32 %v2166, %v2166
      %v2269 = vmul.f32 %v2167, %v2167
      %v2270 = vmul.f32 %v2168, %v2168
      %v2271 = vmul.f32 %v2169, %v2169
      %v2272 = vmul.f32 %v2170, %v2170
      %v2273 = vmul.f32 %v2171, %v2171
      %v2274 = vmul.f32 %v2172, %v2172
      %v2275 = vmul.f32 %v2173, %v2173
      %v2276 = vmul.f32 %v2174, %v2174
      %v2277 = vmul.f32 %v2175, %v2175
      %v2278 = vmul.f32 %v2176, %v2176
      %v2279 = vmul.f32 %v2177, %v2177
      %v2280 = vmul.f32 %v2178, %v2178
      %v2281 = vmul.f32 %v2179, %v2179
      %v2282 = vmul.f32 %v2180, %v2180
      %v2283 = vmul.f32 %v2181, %v2181
      %v2284 = vmul.f32 %v2182, %v2182
      %v2285 = vmul.f32 %v2183, %v2183
      %v2286 = vmul.f32 %v2184, %v2184
      %v2287 = vmul.f32 %v2185, %v2185
      %v2288 = vmul.f32 %v2186, %v2186
      %v2289 = vmul.f32 %v2187, %v2187
      %v2290 = vmul.f32 %v2188, %v2188
      %v2291 = vmul.f32 %v2189, %v2189
      %v2292 = vmul.f32 %v2190, %v2190
      %v2293 = vmul.f32 %v2191, %v2191
      %v2294 = vmul.f32 %v2192, %v2192
      %v2295 = vmul.f32 %v2193, %v2193
      %v2296 = vmul.f32 %v2194, %v2194
      %v2297 = vadd.f32 %v2265, %v2266
      %v2298 = vadd.f32 %v2297, %v2267
      %v2299 = vadd.f32 %v2298, %v2268
      %v2300 = vadd.f32 %v2299, %v2269
      %v2301 = vadd.f32 %v2300, %v2270
      %v2302 = vadd.f32 %v2301, %v2271
      %v2303 = vadd.f32 %v2302, %v2272
      %v2304 = vadd.f32 %v2303, %v2273
      %v2305 = vadd.f32 %v2304, %v2274
      %v2306 = vadd.f32 %v2305, %v2275
      %v2307 = vadd.f32 %v2306, %v2276
      %v2308 = vadd.f32 %v2307, %v2277
      %v2309 = vadd.f32 %v2308, %v2278
      %v2310 = vadd.f32 %v2309, %v2279
      %v2311 = vadd.f32 %v2310, %v2280
      %v2312 = vadd.f32 %v2311, %v2281
      %v2313 = vadd.f32 %v2312, %v2282
      %v2314 = vadd.f32 %v2313, %v2283
      %v2315 = vadd.f32 %v2314, %v2284
      %v2316 = vadd.f32 %v2315, %v2285
      %v2317 = vadd.f32 %v2316, %v2286
      %v2318 = vadd.f32 %v2317, %v2287
      %v2319 = vadd.f32 %v2318, %v2288
      %v2320 = vadd.f32 %v2319, %v2289
      %v2321 = vadd.f32 %v2320, %v2290
      %v2322 = vadd.f32 %v2321, %v2291
      %v2323 = vadd.f32 %v2322, %v2292
      %v2324 = vadd.f32 %v2323, %v2293
      %v2325 = vadd.f32 %v2324, %v2294
      %v2326 = vadd.f32 %v2325, %v2295
      %v2327 = vadd.f32 %v2326, %v2296
      %v2328 = vrot.slane %v2327, 4
      %v2329 = vadd.f32 %v2327, %v2328
      %v2330 = vrot.slane %v2329, 2
      %v2331 = vadd.f32 %v2329, %v2330
      %v2332 = vrot.slane %v2331, 1
      %v2333 = vadd.f32 %v2331, %v2332
      %2334 = vst [vmem:[%s239 + $0x1] sm:$0x1] %v2333
      %s2335 = smul.u32 32, %s21
      %p2336 = scmp.lt.s32.totalorder %s20, 1
      %s2337 = scalar_select %p2336, %s20, 1
      %p2338 = scmp.lt.s32.totalorder %s2335, 31
      %s2339 = scalar_select %p2338, %s2335, 31
      %s2340 = smul.addr %s2337, 32
      %s2341 = sadd.s32 %s2339, %s2340
      %s2342 = smul.addr %s2341, 8
      %s2343 = scalar_lea.vmem %s3, %s2342
      %p2344 = scmp.lt.s32.totalorder %s20, 1
      %s2345 = scalar_select %p2344, %s20, 1
      %p2346 = scmp.lt.s32.totalorder %s21, 0
      %s2347 = scalar_select %p2346, %s21, 0
      %s2348 = sadd.s32 %s2347, %s2345
      %s2349 = smul.addr %s2348, 2
      %s2350 = scalar_lea.vmem %s4, %s2349
      // Predicated region
      $region33: #{feature_extractor.4} parent=31 // pred_check
        %p2351 = pneg %p116
      $region34: #{feature_extractor.4} parent=31 // pred_check_branch
        %2353 = sbr.rel (%p2351) target = $region36
      $region35: #{feature_extractor.4} parent=31 // pred_region
        %s2354 = smul.u32 32, %s21
      $region36: #{feature_extractor.4} parent=31 // pred_fallthru
        _
      // Predicated region
      $region37: #{feature_extractor.4} parent=31 // pred_check
        %p2355 = pneg %p144
      $region38: #{feature_extractor.4} parent=31 // pred_check_branch
        %2357 = sbr.rel (%p2355) target = $region40
      $region39: #{feature_extractor.4} parent=31 // pred_region
        _
      $region40: #{feature_extractor.4} parent=31 // pred_fallthru
        _
    $region32: #{feature_extractor.4} parent=5 // pred_fallthru
      _
    %p2358 = scmp.le.s32.totalorder 2, %s11
    // Predicated region
    $region41: #{feature_extractor.4} parent=5 // pred_check
      %p2359 = pneg %p2358
    $region42: #{feature_extractor.4} parent=5 // pred_check_branch
      %2361 = sbr.rel (%p2359) target = $region44
    $region43: #{feature_extractor.4} parent=5 // pred_region
      %s2362 = ssub.s32 %s11, 2
      // Predicated region
      $region45: #{feature_extractor.4} parent=43 // pred_check
        %p2363 = pneg %p122
      $region46: #{feature_extractor.4} parent=43 // pred_check_branch
        %2365 = sbr.rel (%p2363) target = $region48
      $region47: #{feature_extractor.4} parent=43 // pred_region
        %s2366 = smul.u32 32, %s23
        %p2367 = scmp.lt.s32.totalorder %s22, 1
        %s2368 = scalar_select %p2367, %s22, 1
        %p2369 = scmp.lt.s32.totalorder %s2366, 31
        %s2370 = scalar_select %p2369, %s2366, 31
        %s2371 = smul.addr %s2368, 32
        %s2372 = sadd.s32 %s2370, %s2371
        %s2373 = smul.addr %s2372, 8
        %s2374 = scalar_lea.vmem %s3, %s2373
      $region48: #{feature_extractor.4} parent=43 // pred_fallthru
        _
      // Predicated region
      $region49: #{feature_extractor.4} parent=43 // pred_check
        %p2375 = pneg %p150
      $region50: #{feature_extractor.4} parent=43 // pred_check_branch
        %2377 = sbr.rel (%p2375) target = $region52
      $region51: #{feature_extractor.4} parent=43 // pred_region
        %p2378 = scmp.lt.s32.totalorder %s22, 1
        %s2379 = scalar_select %p2378, %s22, 1
        %p2380 = scmp.lt.s32.totalorder %s23, 0
        %s2381 = scalar_select %p2380, %s23, 0
        %s2382 = sadd.s32 %s2381, %s2379
        %s2383 = smul.addr %s2382, 2
        %s2384 = scalar_lea.vmem %s4, %s2383
      $region52: #{feature_extractor.4} parent=43 // pred_fallthru
        _
    $region44: #{feature_extractor.4} parent=5 // pred_fallthru
      _
  $region6: #{feature_extractor.4} parent=0 // loop_footer
    %s15 = sadd.s32 1, %s11
  $region7: #{feature_extractor.4} parent=0 // loop_footer_branch
    %10 = sbr.rel target = $region3
  $region8: #{feature_extractor.4} parent=0 // loop_exit
    _

// kernel: feature_extractor.6
$region0: #{feature_extractor.6}
  #allocation0 [shape = 'u32[]', space=smem, size = 0x4, offset = 0x4, fixed_abs, tag = 'smem constant byte address 0x4 - core index']
  #allocation1 [shape = 'u32[144,128]{1,0:T(1,128)}', space=vmem, size = 0x12000, scoped, tag = 'internal scratch']
  %s0 = inlined_call_operand.vmem [shape: f32[2,9,16,32], index: 0, kind: input, shape index: {}]
  %s1 = inlined_call_operand.vmem [shape: f32[128,128], index: 1, kind: input, shape index: {}]
  %s2 = inlined_call_operand.vmem [shape: f32[1,128], index: 2, kind: input, shape index: {}]
  %s3 = inlined_call_operand.vmem [shape: f32[2,64,128], index: 3, kind: output, shape index: {0}]
  %s4 = inlined_call_operand.vmem [shape: f32[2,1,2,128], index: 4, kind: output, shape index: {1}]
  %5 = xla_tuple %s3, %s4
  %s6 = sld [smem:[#allocation0]]
  $region53: #{feature_extractor.6} parent=0
    _
  %s8 = ssub.s32 1, %s6
  %s9 = scalar_select 0, %s8, %s6
  loop: start=0, step=1, limit=4
  $region2: #{feature_extractor.6} parent=0 // loop_pre_header
    _
  $region3: #{feature_extractor.6} parent=0 // loop_header
    %s11 = sphi 0, %s15
    %p12 = scmp.ge.s32.totalorder %s11, 4
    %s18 = sphi 0, %s30
    %s19 = sphi 0, %s26
    %s20 = sphi 0, %s18
    %s21 = sphi 0, %s19
    %s22 = sphi 0, %s20
    %s23 = sphi 0, %s21
    %s33 = sphi 0, %s35
    %s36 = sphi 0, %s33
    %s37 = sphi 0, %s36
    %s53 = sphi 0, %s37
    %s57 = sphi 0, %s57
    %s59 = sphi 0, %s57
    %s60 = sphi 0, %s59
    %s74 = sphi 0, %s60
    %s78 = sphi 0, %s78
    %s80 = sphi 0, %s78
    %s81 = sphi 0, %s80
    %s95 = sphi 0, %s81
    %s103 = sphi 0, %s105
    %s106 = sphi 0, %s103
    %s107 = sphi 0, %s106
    %s123 = sphi 0, %s107
    %s131 = sphi 0, %s133
    %s134 = sphi 0, %s131
    %s135 = sphi 0, %s134
    %s151 = sphi 0, %s135
  $region4: #{feature_extractor.6} parent=0 // loop_header_branch
    %14 = sbr.rel (%p12) target = $region8
  $region5: #{feature_extractor.6} parent=0 // loop_body
    %s16 = ssub.s32 %s11, 1
    %s17 = ssub.s32 %s11, 2
    %s24 = sadd.s32 1, %s19
    %p25 = scmp.ge.s32.totalorder %s24, 1
    %s26 = scalar_select %p25, 0, %s24
    %s27 = sadd.s32 1, %s18
    %s28 = scalar_select %p25, %s27, %s18
    %p29 = scmp.ge.s32.totalorder %s28, 2
    %s30 = scalar_select %p29, 0, %s28
    %s31 = ssub.s32 %s18, %s30
    %p32 = scmp.eq.s32.totalorder %s31, 0
    %s34 = sadd.s32 %s33, 1
    %s35 = scalar_select %p32, %s33, %s34
    %p38 = pneg %p32
    %p39 = scmp.eq.s32.totalorder %s11, 1
    %p40 = por %p38, %p39
    %p41 = scmp.ne.s32.totalorder %s33, %s36
    %p42 = scmp.eq.s32.totalorder %s11, 0
    %p43 = por %p41, %p42
    %p44 = scmp.ne.s32.totalorder %s33, %s36
    %p45 = scmp.eq.s32.totalorder %s16, 1
    %p46 = por %p44, %p45
    %p47 = scmp.ne.s32.totalorder %s36, %s37
    %p48 = scmp.eq.s32.totalorder %s16, 0
    %p49 = por %p47, %p48
    %p50 = scmp.ne.s32.totalorder %s36, %s37
    %p51 = scmp.eq.s32.totalorder %s17, 1
    %p52 = por %p50, %p51
    %p54 = scmp.ne.s32.totalorder %s37, %s53
    %p55 = scmp.eq.s32.totalorder %s17, 0
    %p56 = por %p54, %p55
    %s58 = sadd.s32 %s57, 1
    %p61 = scmp.eq.s32.totalorder %s11, 1
    %p62 = scmp.ne.s32.totalorder %s57, %s59
    %p63 = scmp.eq.s32.totalorder %s11, 0
    %p64 = por %p62, %p63
    %p65 = scmp.ne.s32.totalorder %s57, %s59
    %p66 = scmp.eq.s32.totalorder %s16, 1
    %p67 = por %p65, %p66
    %p68 = scmp.ne.s32.totalorder %s59, %s60
    %p69 = scmp.eq.s32.totalorder %s16, 0
    %p70 = por %p68, %p69
    %p71 = scmp.ne.s32.totalorder %s59, %s60
    %p72 = scmp.eq.s32.totalorder %s17, 1
    %p73 = por %p71, %p72
    %p75 = scmp.ne.s32.totalorder %s60, %s74
    %p76 = scmp.eq.s32.totalorder %s17, 0
    %p77 = por %p75, %p76
    %s79 = sadd.s32 %s78, 1
    %p82 = scmp.eq.s32.totalorder %s11, 1
    %p83 = scmp.ne.s32.totalorder %s78, %s80
    %p84 = scmp.eq.s32.totalorder %s11, 0
    %p85 = por %p83, %p84
    %p86 = scmp.ne.s32.totalorder %s78, %s80
    %p87 = scmp.eq.s32.totalorder %s16, 1
    %p88 = por %p86, %p87
    %p89 = scmp.ne.s32.totalorder %s80, %s81
    %p90 = scmp.eq.s32.totalorder %s16, 0
    %p91 = por %p89, %p90
    %p92 = scmp.ne.s32.totalorder %s80, %s81
    %p93 = scmp.eq.s32.totalorder %s17, 1
    %p94 = por %p92, %p93
    %p96 = scmp.ne.s32.totalorder %s81, %s95
    %p97 = scmp.eq.s32.totalorder %s17, 0
    %p98 = por %p96, %p97
    %s99 = ssub.s32 %s18, %s30
    %s100 = ssub.s32 %s19, %s26
    %s101 = sor.u32 %s99, %s100
    %p102 = scmp.eq.s32.totalorder %s101, 0
    %s104 = sadd.s32 %s103, 1
    %s105 = scalar_select %p102, %s103, %s104
    %p108 = pneg %p102
    %p109 = scmp.eq.s32.totalorder %s11, 1
    %p110 = por %p108, %p109
    %p111 = scmp.ne.s32.totalorder %s103, %s106
    %p112 = scmp.eq.s32.totalorder %s11, 0
    %p113 = por %p111, %p112
    %p114 = scmp.ne.s32.totalorder %s103, %s106
    %p115 = scmp.eq.s32.totalorder %s16, 1
    %p116 = por %p114, %p115
    %p117 = scmp.ne.s32.totalorder %s106, %s107
    %p118 = scmp.eq.s32.totalorder %s16, 0
    %p119 = por %p117, %p118
    %p120 = scmp.ne.s32.totalorder %s106, %s107
    %p121 = scmp.eq.s32.totalorder %s17, 1
    %p122 = por %p120, %p121
    %p124 = scmp.ne.s32.totalorder %s107, %s123
    %p125 = scmp.eq.s32.totalorder %s17, 0
    %p126 = por %p124, %p125
    %s127 = ssub.s32 %s18, %s30
    %s128 = ssub.s32 %s19, %s26
    %s129 = sor.u32 %s127, %s128
    %p130 = scmp.eq.s32.totalorder %s129, 0
    %s132 = sadd.s32 %s131, 1
    %s133 = scalar_select %p130, %s131, %s132
    %p136 = pneg %p130
    %p137 = scmp.eq.s32.totalorder %s11, 1
    %p138 = por %p136, %p137
    %p139 = scmp.ne.s32.totalorder %s131, %s134
    %p140 = scmp.eq.s32.totalorder %s11, 0
    %p141 = por %p139, %p140
    %p142 = scmp.ne.s32.totalorder %s131, %s134
    %p143 = scmp.eq.s32.totalorder %s16, 1
    %p144 = por %p142, %p143
    %p145 = scmp.ne.s32.totalorder %s134, %s135
    %p146 = scmp.eq.s32.totalorder %s16, 0
    %p147 = por %p145, %p146
    %p148 = scmp.ne.s32.totalorder %s134, %s135
    %p149 = scmp.eq.s32.totalorder %s17, 1
    %p150 = por %p148, %p149
    %p152 = scmp.ne.s32.totalorder %s135, %s151
    %p153 = scmp.eq.s32.totalorder %s17, 0
    %p154 = por %p152, %p153
    %p155 = scmp.le.s32.totalorder 1, %s11
    %p156 = scmp.lt.s32.totalorder %s11, 3
    %p157 = pnand %p155, %p156
    %p158 = pneg %p157
    // Predicated region
    $region9: #{feature_extractor.6} parent=5 // pred_check
      _
    $region10: #{feature_extractor.6} parent=5 // pred_check_branch
      %160 = sbr.rel (%p157) target = $region12
    $region11: #{feature_extractor.6} parent=5 // pred_region
      %s161 = ssub.s32 %s11, 1
      // Predicated region
      $region13: #{feature_extractor.6} parent=11 // pred_check
        %p162 = pneg %p70
      $region14: #{feature_extractor.6} parent=11 // pred_check_branch
        %164 = sbr.rel (%p162) target = $region16
      $region15: #{feature_extractor.6} parent=11 // pred_region
        _
      $region16: #{feature_extractor.6} parent=11 // pred_fallthru
        _
      // Predicated region
      $region17: #{feature_extractor.6} parent=11 // pred_check
        %p165 = pneg %p91
      $region18: #{feature_extractor.6} parent=11 // pred_check_branch
        %167 = sbr.rel (%p165) target = $region20
      $region19: #{feature_extractor.6} parent=11 // pred_region
        _
      $region20: #{feature_extractor.6} parent=11 // pred_fallthru
        _
    $region12: #{feature_extractor.6} parent=5 // pred_fallthru
      _
    %p168 = scmp.lt.s32.totalorder %s11, 2
    // Predicated region
    $region21: #{feature_extractor.6} parent=5 // pred_check
      %p169 = pneg %p168
    $region22: #{feature_extractor.6} parent=5 // pred_check_branch
      %171 = sbr.rel (%p169) target = $region24
    $region23: #{feature_extractor.6} parent=5 // pred_region
      // Predicated region
      $region25: #{feature_extractor.6} parent=23 // pred_check
        %p172 = pneg %p43
      $region26: #{feature_extractor.6} parent=23 // pred_check_branch
        %174 = sbr.rel (%p172) target = $region28
      $region27: #{feature_extractor.6} parent=23 // pred_region
        %p175 = scmp.lt.s32.totalorder %s18, 1
        %s176 = scalar_select %p175, %s18, 1
        %s177 = smul.addr %s176, 18
        %s178 = smul.addr %s177, 8
        %s179 = scalar_lea.vmem %s0, %s178
      $region28: #{feature_extractor.6} parent=23 // pred_fallthru
        _
    $region24: #{feature_extractor.6} parent=5 // pred_fallthru
      _
    %p180 = scmp.le.s32.totalorder 1, %s11
    %p181 = scmp.lt.s32.totalorder %s11, 3
    %p182 = pnand %p180, %p181
    %p183 = pneg %p182
    // Predicated region
    $region29: #{feature_extractor.6} parent=5 // pred_check
      _
    $region30: #{feature_extractor.6} parent=5 // pred_check_branch
      %185 = sbr.rel (%p182) target = $region32
    $region31: #{feature_extractor.6} parent=5 // pred_region
      %s186 = ssub.s32 %s11, 1
      %p187 = scmp.lt.s32.totalorder %s20, 1
      %s188 = scalar_select %p187, %s20, 1
      %s189 = smul.addr %s188, 18
      %s190 = smul.addr %s189, 8
      %s191 = scalar_lea.vmem %s0, %s190
      %p192 = pneg %p49
      %p193 = pneg %p46
      %p194 = pneg %p70
      %p195 = pneg %p67
      %p196 = pneg %p91
      %p197 = pneg %p88
      %p198 = pneg %p119
      %p199 = pneg %p116
      %s200 = smul.u32 8, %s21
      %p201 = scmp.lt.s32.totalorder %s20, 1
      %s202 = scalar_select %p201, %s20, 1
      %p203 = scmp.lt.s32.totalorder %s200, 7
      %s204 = scalar_select %p203, %s200, 7
      %s205 = smul.addr %s202, 8
      %s206 = sadd.s32 %s204, %s205
      %s207 = smul.addr %s206, 8
      %s208 = scalar_lea.vmem %s3, %s207
      %p209 = pneg %p147
      %p210 = pneg %p144
      %p211 = scmp.lt.s32.totalorder %s20, 1
      %s212 = scalar_select %p211, %s20, 1
      %p213 = scmp.lt.s32.totalorder %s21, 0
      %s214 = scalar_select %p213, %s21, 0
      %s215 = sadd.s32 %s214, %s212
      %s216 = smul.addr %s215, 2
      %s217 = scalar_lea.vmem %s4, %s216
      %p218 = scmp.lt.s32.totalorder %s20, 1
      %s219 = scalar_select %p218, %s20, 1
      %s220 = smul.addr %s219, 18
      %s221 = smul.addr %s220, 8
      %s222 = scalar_lea.vmem %s0, %s221
      %s223 = smul.u32 8, %s21
      %p224 = scmp.lt.s32.totalorder %s20, 1
      %s225 = scalar_select %p224, %s20, 1
      %p226 = scmp.lt.s32.totalorder %s223, 7
      %s227 = scalar_select %p226, %s223, 7
      %s228 = smul.addr %s225, 8
      %s229 = sadd.s32 %s227, %s228
      %s230 = smul.addr %s229, 8
      %s231 = scalar_lea.vmem %s3, %s230
      %s232 = smul.u32 8, %s21
      %p233 = scmp.lt.s32.totalorder %s20, 1
      %s234 = scalar_select %p233, %s20, 1
      %p235 = scmp.lt.s32.totalorder %s21, 0
      %s236 = scalar_select %p235, %s21, 0
      %s237 = sadd.s32 %s236, %s234
      %s238 = smul.addr %s237, 2
      %s239 = scalar_lea.vmem %s4, %s238
      %s240 = smul.u32 %s21, 8
      %s241 = smul.u32 %s240, 16
      %s242 = scalar_lea.vmem %s222, %s241
      %v243 = vld [vmem:[%s242] sm:$0xff]
      %v244 = vld [vmem:[%s242 + $0x10] sm:$0xff]
      %v245 = vld [vmem:[%s242 + $0x20] sm:$0xff]
      %v246 = vld [vmem:[%s242 + $0x30] sm:$0xff]
      %v247 = vld [vmem:[%s242 + $0x40] sm:$0xff]
      %v248 = vld [vmem:[%s242 + $0x50] sm:$0xff]
      %v249 = vld [vmem:[%s242 + $0x60] sm:$0xff]
      %v250 = vld [vmem:[%s242 + $0x70] sm:$0xff]
      %v251 = vld [vmem:[%s242 + $0x1] sm:$0xff]
      %v252 = vld [vmem:[%s242 + $0x11] sm:$0xff]
      %v253 = vld [vmem:[%s242 + $0x21] sm:$0xff]
      %v254 = vld [vmem:[%s242 + $0x31] sm:$0xff]
      %v255 = vld [vmem:[%s242 + $0x41] sm:$0xff]
      %v256 = vld [vmem:[%s242 + $0x51] sm:$0xff]
      %v257 = vld [vmem:[%s242 + $0x61] sm:$0xff]
      %v258 = vld [vmem:[%s242 + $0x71] sm:$0xff]
      %s259 = sadd.s32 %s240, 1
      %s260 = smul.u32 %s259, 16
      %s261 = scalar_lea.vmem %s222, %s260
      %v262 = vld [vmem:[%s261] sm:$0xff]
      %v263 = vld [vmem:[%s261 + $0x10] sm:$0xff]
      %v264 = vld [vmem:[%s261 + $0x20] sm:$0xff]
      %v265 = vld [vmem:[%s261 + $0x30] sm:$0xff]
      %v266 = vld [vmem:[%s261 + $0x40] sm:$0xff]
      %v267 = vld [vmem:[%s261 + $0x50] sm:$0xff]
      %v268 = vld [vmem:[%s261 + $0x60] sm:$0xff]
      %v269 = vld [vmem:[%s261 + $0x70] sm:$0xff]
      %v270 = vld [vmem:[%s261 + $0x1] sm:$0xff]
      %v271 = vld [vmem:[%s261 + $0x11] sm:$0xff]
      %v272 = vld [vmem:[%s261 + $0x21] sm:$0xff]
      %v273 = vld [vmem:[%s261 + $0x31] sm:$0xff]
      %v274 = vld [vmem:[%s261 + $0x41] sm:$0xff]
      %v275 = vld [vmem:[%s261 + $0x51] sm:$0xff]
      %v276 = vld [vmem:[%s261 + $0x61] sm:$0xff]
      %v277 = vld [vmem:[%s261 + $0x71] sm:$0xff]
      %286 = vrot.lane.b32.xlu0 %v251, 32
      %v287 = vpop.permute.xlu0 %286
      %288 = vrot.lane.b32.xlu0 %v252, 32
      %v289 = vpop.permute.xlu0 %288
      %290 = vrot.lane.b32.xlu0 %v253, 32
      %v291 = vpop.permute.xlu0 %290
      %292 = vrot.lane.b32.xlu0 %v254, 32
      %v293 = vpop.permute.xlu0 %292
      %294 = vrot.lane.b32.xlu0 %v255, 32
      %v295 = vpop.permute.xlu0 %294
      %296 = vrot.lane.b32.xlu0 %v256, 32
      %v297 = vpop.permute.xlu0 %296
      %298 = vrot.lane.b32.xlu0 %v257, 32
      %v299 = vpop.permute.xlu0 %298
      %300 = vrot.lane.b32.xlu0 %v258, 32
      %v301 = vpop.permute.xlu0 %300
      %318 = vrot.lane.b32.xlu0 %v262, 64
      %v319 = vpop.permute.xlu0 %318
      %320 = vrot.lane.b32.xlu0 %v263, 64
      %v321 = vpop.permute.xlu0 %320
      %322 = vrot.lane.b32.xlu0 %v264, 64
      %v323 = vpop.permute.xlu0 %322
      %324 = vrot.lane.b32.xlu0 %v265, 64
      %v325 = vpop.permute.xlu0 %324
      %326 = vrot.lane.b32.xlu0 %v266, 64
      %v327 = vpop.permute.xlu0 %326
      %328 = vrot.lane.b32.xlu0 %v267, 64
      %v329 = vpop.permute.xlu0 %328
      %330 = vrot.lane.b32.xlu0 %v268, 64
      %v331 = vpop.permute.xlu0 %330
      %332 = vrot.lane.b32.xlu0 %v269, 64
      %v333 = vpop.permute.xlu0 %332
      %350 = vrot.lane.b32.xlu0 %v270, 96
      %v351 = vpop.permute.xlu0 %350
      %352 = vrot.lane.b32.xlu0 %v271, 96
      %v353 = vpop.permute.xlu0 %352
      %354 = vrot.lane.b32.xlu0 %v272, 96
      %v355 = vpop.permute.xlu0 %354
      %356 = vrot.lane.b32.xlu0 %v273, 96
      %v357 = vpop.permute.xlu0 %356
      %358 = vrot.lane.b32.xlu0 %v274, 96
      %v359 = vpop.permute.xlu0 %358
      %360 = vrot.lane.b32.xlu0 %v275, 96
      %v361 = vpop.permute.xlu0 %360
      %362 = vrot.lane.b32.xlu0 %v276, 96
      %v363 = vpop.permute.xlu0 %362
      %364 = vrot.lane.b32.xlu0 %v277, 96
      %v365 = vpop.permute.xlu0 %364
      %vm374 = vcmask 261120
      %v375 = vsel %vm374, %v243, %v287
      %v376 = vsel %vm374, %v244, %v289
      %v377 = vsel %vm374, %v245, %v291
      %v378 = vsel %vm374, %v246, %v293
      %v379 = vsel %vm374, %v247, %v295
      %v380 = vsel %vm374, %v248, %v297
      %v381 = vsel %vm374, %v249, %v299
      %v382 = vsel %vm374, %v250, %v301
      %vm383 = vcmask 523264
      %v384 = vsel %vm383, %v375, %v319
      %v385 = vsel %vm383, %v376, %v321
      %v386 = vsel %vm383, %v377, %v323
      %v387 = vsel %vm383, %v378, %v325
      %v388 = vsel %vm383, %v379, %v327
      %v389 = vsel %vm383, %v380, %v329
      %v390 = vsel %vm383, %v381, %v331
      %v391 = vsel %vm383, %v382, %v333
      %vm392 = vcmask 785408
      %v393 = vsel %vm392, %v384, %v351
      %v394 = vsel %vm392, %v385, %v353
      %v395 = vsel %vm392, %v386, %v355
      %v396 = vsel %vm392, %v387, %v357
      %v397 = vsel %vm392, %v388, %v359
      %v398 = vsel %vm392, %v389, %v361
      %v399 = vsel %vm392, %v390, %v363
      %v400 = vsel %vm392, %v391, %v365
      %v401 = vld [vmem:[%s1] sm:$0xff]
      %v402 = vld [vmem:[%s1 + $0x8] sm:$0xff]
      %v403 = vld [vmem:[%s1 + $0x10] sm:$0xff]
      %v404 = vld [vmem:[%s1 + $0x18] sm:$0xff]
      %v405 = vld [vmem:[%s1 + $0x20] sm:$0xff]
      %v406 = vld [vmem:[%s1 + $0x28] sm:$0xff]
      %v407 = vld [vmem:[%s1 + $0x30] sm:$0xff]
      %v408 = vld [vmem:[%s1 + $0x38] sm:$0xff]
      %v409 = vld [vmem:[%s1 + $0x40] sm:$0xff]
      %v410 = vld [vmem:[%s1 + $0x48] sm:$0xff]
      %v411 = vld [vmem:[%s1 + $0x50] sm:$0xff]
      %v412 = vld [vmem:[%s1 + $0x58] sm:$0xff]
      %v413 = vld [vmem:[%s1 + $0x60] sm:$0xff]
      %v414 = vld [vmem:[%s1 + $0x68] sm:$0xff]
      %v415 = vld [vmem:[%s1 + $0x70] sm:$0xff]
      %v416 = vld [vmem:[%s1 + $0x78] sm:$0xff]
      %v417 = vld [vmem:[%s2] sm:$0x1]
      %v419 = vlaneseq
      %v420 = vshrl.u32 %v419, 7
      %v421 = vsub.s32 0, %v420
      %v422 = vrot.slane %v417, %v421
      %424 = vmatprep.subr.mxu0 0.0
      %425 = vmatpush1.msra.mxu0 %v401
      %426 = vmatprep.subr.mxu0 0.0
      %427 = vmatpush1.msra.mxu0 %v402
      %428 = vmatprep.subr.mxu0 0.0
      %429 = vmatpush1.msra.mxu0 %v403
      %430 = vmatprep.subr.mxu0 0.0
      %431 = vmatpush1.msra.mxu0 %v404
      %432 = vmatprep.subr.mxu0 0.0
      %433 = vmatpush1.msra.mxu0 %v405
      %434 = vmatprep.subr.mxu0 0.0
      %435 = vmatpush1.msra.mxu0 %v406
      %436 = vmatprep.subr.mxu0 0.0
      %437 = vmatpush1.msra.mxu0 %v407
      %438 = vmatprep.subr.mxu0 0.0
      %439 = vmatpush1.msra.mxu0 %v408
      %440 = vmatprep.subr.mxu0 0.0
      %441 = vmatpush1.msra.mxu0 %v409
      %442 = vmatprep.subr.mxu0 0.0
      %443 = vmatpush1.msra.mxu0 %v410
      %444 = vmatprep.subr.mxu0 0.0
      %445 = vmatpush1.msra.mxu0 %v411
      %446 = vmatprep.subr.mxu0 0.0
      %447 = vmatpush1.msra.mxu0 %v412
      %448 = vmatprep.subr.mxu0 0.0
      %449 = vmatpush1.msra.mxu0 %v413
      %450 = vmatprep.subr.mxu0 0.0
      %451 = vmatpush1.msra.mxu0 %v414
      %452 = vmatprep.subr.mxu0 0.0
      %453 = vmatpush1.msra.mxu0 %v415
      %454 = vmatprep.subr.mxu0 0.0
      %455 = vmatpush1.msra.mxu0 %v416
      %456 = vmatprep.subr.mxu0 0.0
      %457 = vmatpush1.msra.mxu0 0.0
      %458 = vmatprep.subr.mxu0 0.0
      %459 = vmatpush1.msra.mxu0 0.0
      %460 = vmatprep.subr.mxu0 0.0
      %461 = vmatpush1.msra.mxu0 0.0
      %462 = vmatprep.subr.mxu0 0.0
      %463 = vmatpush1.msra.mxu0 0.0
      %464 = vmatprep.subr.mxu0 0.0
      %465 = vmatpush1.msra.mxu0 0.0
      %466 = vmatprep.subr.mxu0 0.0
      %467 = vmatpush1.msra.mxu0 0.0
      %468 = vmatprep.subr.mxu0 0.0
      %469 = vmatpush1.msra.mxu0 0.0
      %470 = vmatprep.subr.mxu0 0.0
      %471 = vmatpush1.msra.mxu0 0.0
      %472 = vmatprep.subr.mxu0 0.0
      %473 = vmatpush1.msra.mxu0 0.0
      %474 = vmatprep.subr.mxu0 0.0
      %475 = vmatpush1.msra.mxu0 0.0
      %476 = vmatprep.subr.mxu0 0.0
      %477 = vmatpush1.msra.mxu0 0.0
      %478 = vmatprep.subr.mxu0 0.0
      %479 = vmatpush1.msra.mxu0 0.0
      %480 = vmatprep.subr.mxu0 0.0
      %481 = vmatpush1.msra.mxu0 0.0
      %482 = vmatprep.subr.mxu0 0.0
      %483 = vmatpush1.msra.mxu0 0.0
      %484 = vmatprep.subr.mxu0 0.0
      %485 = vmatpush1.msra.mxu0 0.0
      %486 = vmatprep.subr.mxu0 0.0
      %487 = vmatpush1.msra.mxu0 0.0
      %488 = vmatprep.mubr.f32.mxu0 0.0
      %489 = vmatmul.mubr.f32.gmra.mrb[0].mxu0 %v393
      %v490 = vpop.f32.mrb[0].mxu0
      %v491 = vadd.f32 %v422, %v490
      %v492 = vpop.f32.mrb[0].mxu0
      %493 = vmatprep.mubr.f32.mxu0 0.0
      %494 = vmatmul.mubr.f32.gmra.mrb[0].mxu0 %v394
      %v495 = vpop.f32.mrb[0].mxu0
      %v496 = vadd.f32 %v422, %v495
      %v497 = vpop.f32.mrb[0].mxu0
      %498 = vmatprep.mubr.f32.mxu0 0.0
      %499 = vmatmul.mubr.f32.gmra.mrb[0].mxu0 %v395
      %v500 = vpop.f32.mrb[0].mxu0
      %v501 = vadd.f32 %v422, %v500
      %v502 = vpop.f32.mrb[0].mxu0
      %503 = vmatprep.mubr.f32.mxu0 0.0
      %504 = vmatmul.mubr.f32.gmra.mrb[0].mxu0 %v396
      %v505 = vpop.f32.mrb[0].mxu0
      %v506 = vadd.f32 %v422, %v505
      %v507 = vpop.f32.mrb[0].mxu0
      %508 = vmatprep.mubr.f32.mxu0 0.0
      %509 = vmatmul.mubr.f32.gmra.mrb[0].mxu0 %v397
      %v510 = vpop.f32.mrb[0].mxu0
      %v511 = vadd.f32 %v422, %v510
      %v512 = vpop.f32.mrb[0].mxu0
      %513 = vmatprep.mubr.f32.mxu0 0.0
      %514 = vmatmul.mubr.f32.gmra.mrb[0].mxu0 %v398
      %v515 = vpop.f32.mrb[0].mxu0
      %v516 = vadd.f32 %v422, %v515
      %v517 = vpop.f32.mrb[0].mxu0
      %518 = vmatprep.mubr.f32.mxu0 0.0
      %519 = vmatmul.mubr.f32.gmra.mrb[0].mxu0 %v399
      %v520 = vpop.f32.mrb[0].mxu0
      %v521 = vadd.f32 %v422, %v520
      %v522 = vpop.f32.mrb[0].mxu0
      %523 = vmatprep.mubr.f32.mxu0 0.0
      %524 = vmatmul.mubr.f32.gmra.mrb[0].mxu0 %v400
      %v525 = vpop.f32.mrb[0].mxu0
      %v526 = vadd.f32 %v422, %v525
      %v527 = vpop.f32.mrb[0].mxu0
      %528 = vdwg.mxu0
      %v529 = vmax.f32 %v491, 0.0
      %v530 = vmax.f32 %v496, 0.0
      %v531 = vmax.f32 %v501, 0.0
      %v532 = vmax.f32 %v506, 0.0
      %v533 = vmax.f32 %v511, 0.0
      %v534 = vmax.f32 %v516, 0.0
      %v535 = vmax.f32 %v521, 0.0
      %v536 = vmax.f32 %v526, 0.0
      %537 = vst [vmem:[%s231] sm:$0xff] %v529
      %538 = vst [vmem:[%s231 + $0x8] sm:$0xff] %v530
      %539 = vst [vmem:[%s231 + $0x10] sm:$0xff] %v531
      %540 = vst [vmem:[%s231 + $0x18] sm:$0xff] %v532
      %541 = vst [vmem:[%s231 + $0x20] sm:$0xff] %v533
      %542 = vst [vmem:[%s231 + $0x28] sm:$0xff] %v534
      %543 = vst [vmem:[%s231 + $0x30] sm:$0xff] %v535
      %544 = vst [vmem:[%s231 + $0x38] sm:$0xff] %v536
      %v545 = vadd.f32 %v529, %v530
      %v546 = vadd.f32 %v545, %v531
      %v547 = vadd.f32 %v546, %v532
      %v548 = vadd.f32 %v547, %v533
      %v549 = vadd.f32 %v548, %v534
      %v550 = vadd.f32 %v549, %v535
      %v551 = vadd.f32 %v550, %v536
      %v552 = vrot.slane %v551, 4
      %v553 = vadd.f32 %v551, %v552
      %v554 = vrot.slane %v553, 2
      %v555 = vadd.f32 %v553, %v554
      %v556 = vrot.slane %v555, 1
      %v557 = vadd.f32 %v555, %v556
      %558 = vst [vmem:[%s239] sm:$0x1] %v557
      %v559 = vmul.f32 %v529, %v529
      %v560 = vmul.f32 %v530, %v530
      %v561 = vmul.f32 %v531, %v531
      %v562 = vmul.f32 %v532, %v532
      %v563 = vmul.f32 %v533, %v533
      %v564 = vmul.f32 %v534, %v534
      %v565 = vmul.f32 %v535, %v535
      %v566 = vmul.f32 %v536, %v536
      %v567 = vadd.f32 %v559, %v560
      %v568 = vadd.f32 %v567, %v561
      %v569 = vadd.f32 %v568, %v562
      %v570 = vadd.f32 %v569, %v563
      %v571 = vadd.f32 %v570, %v564
      %v572 = vadd.f32 %v571, %v565
      %v573 = vadd.f32 %v572, %v566
      %v574 = vrot.slane %v573, 4
      %v575 = vadd.f32 %v573, %v574
      %v576 = vrot.slane %v575, 2
      %v577 = vadd.f32 %v575, %v576
      %v578 = vrot.slane %v577, 1
      %v579 = vadd.f32 %v577, %v578
      %580 = vst [vmem:[%s239 + $0x1] sm:$0x1] %v579
      %s581 = smul.u32 8, %s21
      %p582 = scmp.lt.s32.totalorder %s20, 1
      %s583 = scalar_select %p582, %s20, 1
      %p584 = scmp.lt.s32.totalorder %s581, 7
      %s585 = scalar_select %p584, %s581, 7
      %s586 = smul.addr %s583, 8
      %s587 = sadd.s32 %s585, %s586
      %s588 = smul.addr %s587, 8
      %s589 = scalar_lea.vmem %s3, %s588
      %p590 = scmp.lt.s32.totalorder %s20, 1
      %s591 = scalar_select %p590, %s20, 1
      %p592 = scmp.lt.s32.totalorder %s21, 0
      %s593 = scalar_select %p592, %s21, 0
      %s594 = sadd.s32 %s593, %s591
      %s595 = smul.addr %s594, 2
      %s596 = scalar_lea.vmem %s4, %s595
      // Predicated region
      $region33: #{feature_extractor.6} parent=31 // pred_check
        %p597 = pneg %p116
      $region34: #{feature_extractor.6} parent=31 // pred_check_branch
        %599 = sbr.rel (%p597) target = $region36
      $region35: #{feature_extractor.6} parent=31 // pred_region
        %s600 = smul.u32 8, %s21
      $region36: #{feature_extractor.6} parent=31 // pred_fallthru
        _
      // Predicated region
      $region37: #{feature_extractor.6} parent=31 // pred_check
        %p601 = pneg %p144
      $region38: #{feature_extractor.6} parent=31 // pred_check_branch
        %603 = sbr.rel (%p601) target = $region40
      $region39: #{feature_extractor.6} parent=31 // pred_region
        _
      $region40: #{feature_extractor.6} parent=31 // pred_fallthru
        _
    $region32: #{feature_extractor.6} parent=5 // pred_fallthru
      _
    %p604 = scmp.le.s32.totalorder 2, %s11
    // Predicated region
    $region41: #{feature_extractor.6} parent=5 // pred_check
      %p605 = pneg %p604
    $region42: #{feature_extractor.6} parent=5 // pred_check_branch
      %607 = sbr.rel (%p605) target = $region44
    $region43: #{feature_extractor.6} parent=5 // pred_region
      %s608 = ssub.s32 %s11, 2
      // Predicated region
      $region45: #{feature_extractor.6} parent=43 // pred_check
        %p609 = pneg %p122
      $region46: #{feature_extractor.6} parent=43 // pred_check_branch
        %611 = sbr.rel (%p609) target = $region48
      $region47: #{feature_extractor.6} parent=43 // pred_region
        %s612 = smul.u32 8, %s23
        %p613 = scmp.lt.s32.totalorder %s22, 1
        %s614 = scalar_select %p613, %s22, 1
        %p615 = scmp.lt.s32.totalorder %s612, 7
        %s616 = scalar_select %p615, %s612, 7
        %s617 = smul.addr %s614, 8
        %s618 = sadd.s32 %s616, %s617
        %s619 = smul.addr %s618, 8
        %s620 = scalar_lea.vmem %s3, %s619
      $region48: #{feature_extractor.6} parent=43 // pred_fallthru
        _
      // Predicated region
      $region49: #{feature_extractor.6} parent=43 // pred_check
        %p621 = pneg %p150
      $region50: #{feature_extractor.6} parent=43 // pred_check_branch
        %623 = sbr.rel (%p621) target = $region52
      $region51: #{feature_extractor.6} parent=43 // pred_region
        %p624 = scmp.lt.s32.totalorder %s22, 1
        %s625 = scalar_select %p624, %s22, 1
        %p626 = scmp.lt.s32.totalorder %s23, 0
        %s627 = scalar_select %p626, %s23, 0
        %s628 = sadd.s32 %s627, %s625
        %s629 = smul.addr %s628, 2
        %s630 = scalar_lea.vmem %s4, %s629
      $region52: #{feature_extractor.6} parent=43 // pred_fallthru
        _
    $region44: #{feature_extractor.6} parent=5 // pred_fallthru
      _
  $region6: #{feature_extractor.6} parent=0 // loop_footer
    %s15 = sadd.s32 1, %s11
  $region7: #{feature_extractor.6} parent=0 // loop_footer_branch
    %10 = sbr.rel target = $region3
  $region8: #{feature_extractor.6} parent=0 // loop_exit
    _

</llo_original>
